<compile_context>
chip_gen: v6e
topology: v6e:2x2x1
jax: 0.10.0
libtpu: 0.0.40
codegen_flags: <defaults>
</compile_context>

<pallas_src>
import jax
import jax.numpy as jnp
from jax.experimental import pallas as pl
from jax.experimental.pallas import tpu as pltpu

LANE = 128
# Set to jnp.bfloat16 on v5e/v6e for full MXU throughput (accumulation and the
# bias/relu epilogue stay in float32 either way).
COMPUTE_DTYPE = jnp.float32


def _round_up(x, m):
    return (x + m - 1) // m * m


def _pad_axis(a, axis, target):
    pad = target - a.shape[axis]
    if pad == 0:
        return a
    widths = [(0, 0)] * a.ndim
    widths[axis] = (0, pad)
    return jnp.pad(a, widths)


# ----------------------------- Pallas kernels ------------------------------

def _conv_pool_relu_kernel(x_ref, w_ref, b_ref, o_ref):
    # x_ref: (4, TM, Kp) -- im2col rows for the 4 positions of each 2x2
    #         pooling window (same pooled output row across the leading axis).
    # w_ref: (Kp, OCp)   -- zero-padded (kh,kw,cin)-ordered conv weight.
    # b_ref: (1, OCp)    -- zero-padded bias (float32).
    # o_ref: (TM, OCp)   -- relu(maxpool(conv)) rows, channels on lanes.
    w = w_ref[...]
    acc = jnp.dot(x_ref[0], w, preferred_element_type=jnp.float32)
    for p in range(1, 4):
        acc = jnp.maximum(
            acc, jnp.dot(x_ref[p], w, preferred_element_type=jnp.float32))
    # max_p(x_p @ W) + b == max_p(x_p @ W + b); relu commutes with max.
    o_ref[...] = jnp.maximum(acc + b_ref[...], 0.0).astype(o_ref.dtype)


def _fc_head_kernel(x_ref, w1_ref, b1_ref, w2_ref, b2_ref, o_ref):
    # Fused fc1 + fc2 (no activation between them in the reference module).
    h = jnp.dot(x_ref[...], w1_ref[...],
                preferred_element_type=jnp.float32) + b1_ref[...]
    o_ref[...] = (
        jnp.dot(h.astype(w2_ref.dtype), w2_ref[...],
                preferred_element_type=jnp.float32) + b2_ref[...]
    ).astype(o_ref.dtype)


# ----------------------------- wrappers -------------------------------------

def conv2d_pool_relu(x_nhwc, w, b, *, tile_m=512):
    """Fused valid conv (stride 1) + 2x2/stride-2 max-pool + ReLU.

    x_nhwc: (N, H, W, C); w: (OC, C, k, k) (PyTorch layout); b: (OC,).
    Returns (N, H', W', OCp) with OCp = 128-padded OC; padded channels are 0.
    """
    n, h, wd, c = x_nhwc.shape
    oc, _, k, _ = w.shape
    oh, ow = h - k + 1, wd - k + 1
    ph, pw = oh // 2, ow // 2
    kdim = k * k * c
    kp = _round_up(kdim, LANE)
    ocp = _round_up(oc, LANE)

    # im2col with rows grouped by 2x2 pool position: (4, N*PH*PW, k*k*C).
    cols = jnp.stack(
        [x_nhwc[:, i:i + oh, j:j + ow, :] for i in range(k) for j in range(k)],
        axis=3)                                          # (N, OH, OW, k*k, C)
    cols = cols.reshape(n, oh, ow, kdim)                 # feature order (kh,kw,c)
    cols = cols.reshape(n, ph, 2, pw, 2, kdim).transpose(2, 4, 0, 1, 3, 5)
    cols = cols.reshape(4, n * ph * pw, kdim)
    cols = _pad_axis(cols, 2, kp).astype(COMPUTE_DTYPE)

    # (OC, C, k, k) -> (kh, kw, C, OC) -> (k*k*C, OC), zero-padded.
    w2d = w.transpose(2, 3, 1, 0).reshape(kdim, oc)
    w2d = _pad_axis(_pad_axis(w2d, 0, kp), 1, ocp).astype(COMPUTE_DTYPE)
    b2d = _pad_axis(b.reshape(1, oc), 1, ocp).astype(jnp.float32)

    m = n * ph * pw
    tm = m if m <= tile_m else tile_m
    grid = (pl.cdiv(m, tm),)
    out = pl.pallas_call(
        _conv_pool_relu_kernel,
        out_shape=jax.ShapeDtypeStruct((m, ocp), jnp.float32),
        grid_spec=pltpu.PrefetchScalarGridSpec(
            num_scalar_prefetch=0,
            grid=grid,
            in_specs=[
                pl.BlockSpec((4, tm, kp), lambda i: (0, i, 0)),
                pl.BlockSpec((kp, ocp), lambda i: (0, 0)),
                pl.BlockSpec((1, ocp), lambda i: (0, 0)),
            ],
            out_specs=pl.BlockSpec((tm, ocp), lambda i: (i, 0)),
        ),
        compiler_params=pltpu.CompilerParams(
            dimension_semantics=("parallel",),
            vmem_limit_bytes=32 * 1024 * 1024),
    )(cols, w2d, b2d)
    return out.reshape(n, ph, pw, ocp)


def fc_head(x2d, w1, b1, w2, b2, *, tile_m=512):
    """Fused fc1 + fc2: (x @ w1 + b1) @ w2 + b2 with padded lane dims."""
    m, k1 = x2d.shape
    n1 = w1.shape[1]
    n2 = w2.shape[1]
    k1p = _round_up(k1, LANE)
    n1p = _round_up(n1, LANE)
    n2p = _round_up(n2, LANE)

    xp = _pad_axis(x2d, 1, k1p).astype(COMPUTE_DTYPE)
    w1p = _pad_axis(_pad_axis(w1, 0, k1p), 1, n1p).astype(COMPUTE_DTYPE)
    b1p = _pad_axis(b1.reshape(1, n1), 1, n1p).astype(jnp.float32)
    w2p = _pad_axis(_pad_axis(w2, 0, n1p), 1, n2p).astype(COMPUTE_DTYPE)
    b2p = _pad_axis(b2.reshape(1, n2), 1, n2p).astype(jnp.float32)

    tm = m if m <= tile_m else tile_m
    grid = (pl.cdiv(m, tm),)
    out = pl.pallas_call(
        _fc_head_kernel,
        out_shape=jax.ShapeDtypeStruct((m, n2p), jnp.float32),
        grid_spec=pltpu.PrefetchScalarGridSpec(
            num_scalar_prefetch=0,
            grid=grid,
            in_specs=[
                pl.BlockSpec((tm, k1p), lambda i: (i, 0)),
                pl.BlockSpec((k1p, n1p), lambda i: (0, 0)),
                pl.BlockSpec((1, n1p), lambda i: (0, 0)),
                pl.BlockSpec((n1p, n2p), lambda i: (0, 0)),
                pl.BlockSpec((1, n2p), lambda i: (0, 0)),
            ],
            out_specs=pl.BlockSpec((tm, n2p), lambda i: (i, 0)),
        ),
        compiler_params=pltpu.CompilerParams(
            dimension_semantics=("parallel",),
            vmem_limit_bytes=32 * 1024 * 1024),
    )(xp, w1p, b1p, w2p, b2p)
    return out[:, :n2]


# ----------------------------- LeNet forward --------------------------------

def init_lenet_params(key):
    ks = jax.random.split(key, 8)
    scale = 0.05
    # conv weights in PyTorch layout (OC, C, KH, KW); fc weights stored as
    # (in, out); fc1_w rows are in PyTorch's flatten order (C, H, W).
    return {
        "conv1_w": scale * jax.random.normal(ks[0], (20, 1, 5, 5), jnp.float32),
        "conv1_b": scale * jax.random.normal(ks[1], (20,), jnp.float32),
        "conv2_w": scale * jax.random.normal(ks[2], (50, 20, 5, 5), jnp.float32),
        "conv2_b": scale * jax.random.normal(ks[3], (50,), jnp.float32),
        "fc1_w": scale * jax.random.normal(ks[4], (800, 500), jnp.float32),
        "fc1_b": scale * jax.random.normal(ks[5], (500,), jnp.float32),
        "fc2_w": scale * jax.random.normal(ks[6], (500, 10), jnp.float32),
        "fc2_b": scale * jax.random.normal(ks[7], (10,), jnp.float32),
    }


def lenet_forward(params, x):
    # x: (N, 1, 28, 28), NCHW (PyTorch layout).
    n = x.shape[0]
    x_nhwc = x.transpose(0, 2, 3, 1)                       # (N, 28, 28, 1)

    # conv1 + maxpool2x2 + relu (fused kernel): (N, 12, 12, 128)
    h1 = conv2d_pool_relu(x_nhwc, params["conv1_w"], params["conv1_b"])
    c2_in = params["conv2_w"].shape[1]
    h1 = h1[..., :c2_in]                                   # (N, 12, 12, 20)

    # conv2 + maxpool2x2 + relu (fused kernel): (N, 4, 4, 128)
    h2 = conv2d_pool_relu(h1, params["conv2_w"], params["conv2_b"])
    oc2 = params["conv2_b"].shape[0]
    h2 = h2[..., :oc2]                                     # (N, 4, 4, 50) NHWC

    flat = h2.reshape(n, 4 * 4 * oc2)                      # rows ordered (H,W,C)
    # fc1_w rows are stored in PyTorch's (C,H,W) flatten order; permute once to
    # match the (H,W,C) flatten produced above.
    w1 = (params["fc1_w"].reshape(oc2, 4, 4, -1)
          .transpose(1, 2, 0, 3).reshape(4 * 4 * oc2, -1))

    # fc1 + fc2 fused (no activation between them in the reference module).
    out = fc_head(flat, w1, params["fc1_b"], params["fc2_w"], params["fc2_b"])
    return out
    # TODO(synk): nn.CrossEntropyLoss (self.ceriation) is defined but never
    # used in forward(), so it is intentionally not implemented here.


if __name__ == "__main__":
    key = jax.random.PRNGKey(0)
    pkey, xkey = jax.random.split(key)
    params = init_lenet_params(pkey)
    # LeNet's fc1 (4*4*50) hard-codes 28x28 single-channel inputs; batch=2.
    x = jax.random.normal(xkey, (2, 1, 28, 28), jnp.float32)

    out = jax.jit(lenet_forward)(params, x)
    out = jax.block_until_ready(out)
    assert out.shape == (2, 10), out.shape
    assert out.dtype == jnp.float32
    print("KERNEL_OK")
</pallas_src>

<mosaic_0001>
module attributes {stable_mosaic.version = 11 : i64} {
  func.func @_conv_pool_relu_kernel(%arg0: i32, %arg1: memref<4x288x128xf32, #tpu.memory_space<vmem>>, %arg2: memref<128x128xf32, #tpu.memory_space<vmem>>, %arg3: memref<1x128xf32, #tpu.memory_space<vmem>>, %arg4: memref<288x128xf32, #tpu.memory_space<vmem>>) attributes {dimension_semantics = [#tpu.dimension_semantics<parallel>], iteration_bounds = array<i64: 1>, scalar_prefetch = 0 : i64, scratch_operands = 0 : i64, tpu.core_type = #tpu.core_type<tc>, window_params = [{transform_indices = @transform_0, window_bounds = array<i64: 4, 288, 128>}, {pipeline_mode = #tpu.pipeline_mode<synchronous>, transform_indices = @transform_1, window_bounds = array<i64: 128, 128>}, {pipeline_mode = #tpu.pipeline_mode<synchronous>, transform_indices = @transform_2, window_bounds = array<i64: 1, 128>}, {transform_indices = @transform_3, window_bounds = array<i64: 288, 128>}]} {
    %c0 = arith.constant 0 : index
    %c0_0 = arith.constant 0 : index
    %0 = vector.load %arg2[%c0, %c0_0] : memref<128x128xf32, #tpu.memory_space<vmem>>, vector<128x128xf32>
    %c0_1 = arith.constant 0 : index
    %c0_2 = arith.constant 0 : index
    %c0_3 = arith.constant 0 : index
    %1 = vector.load %arg1[%c0_1, %c0_2, %c0_3] : memref<4x288x128xf32, #tpu.memory_space<vmem>>, vector<1x288x128xf32>
    %2 = vector.shape_cast %1 : vector<1x288x128xf32> to vector<288x128xf32>
    %cst = arith.constant dense<0.000000e+00> : vector<288x128xf32>
    %3 = tpu.matmul %2, %0, %cst {dimension_numbers = #tpu.dot_dimension_numbers<[1], [0], [0], [1], [0, 0, 1, 1], [], []>} : vector<288x128xf32>, vector<128x128xf32>, vector<288x128xf32> -> vector<288x128xf32>
    %c1 = arith.constant 1 : index
    %c0_4 = arith.constant 0 : index
    %c0_5 = arith.constant 0 : index
    %4 = vector.load %arg1[%c1, %c0_4, %c0_5] : memref<4x288x128xf32, #tpu.memory_space<vmem>>, vector<1x288x128xf32>
    %5 = vector.shape_cast %4 : vector<1x288x128xf32> to vector<288x128xf32>
    %cst_6 = arith.constant dense<0.000000e+00> : vector<288x128xf32>
    %6 = tpu.matmul %5, %0, %cst_6 {dimension_numbers = #tpu.dot_dimension_numbers<[1], [0], [0], [1], [0, 0, 1, 1], [], []>} : vector<288x128xf32>, vector<128x128xf32>, vector<288x128xf32> -> vector<288x128xf32>
    %7 = arith.maximumf %3, %6 : vector<288x128xf32>
    %c2 = arith.constant 2 : index
    %c0_7 = arith.constant 0 : index
    %c0_8 = arith.constant 0 : index
    %8 = vector.load %arg1[%c2, %c0_7, %c0_8] : memref<4x288x128xf32, #tpu.memory_space<vmem>>, vector<1x288x128xf32>
    %9 = vector.shape_cast %8 : vector<1x288x128xf32> to vector<288x128xf32>
    %cst_9 = arith.constant dense<0.000000e+00> : vector<288x128xf32>
    %10 = tpu.matmul %9, %0, %cst_9 {dimension_numbers = #tpu.dot_dimension_numbers<[1], [0], [0], [1], [0, 0, 1, 1], [], []>} : vector<288x128xf32>, vector<128x128xf32>, vector<288x128xf32> -> vector<288x128xf32>
    %11 = arith.maximumf %7, %10 : vector<288x128xf32>
    %c3 = arith.constant 3 : index
    %c0_10 = arith.constant 0 : index
    %c0_11 = arith.constant 0 : index
    %12 = vector.load %arg1[%c3, %c0_10, %c0_11] : memref<4x288x128xf32, #tpu.memory_space<vmem>>, vector<1x288x128xf32>
    %13 = vector.shape_cast %12 : vector<1x288x128xf32> to vector<288x128xf32>
    %cst_12 = arith.constant dense<0.000000e+00> : vector<288x128xf32>
    %14 = tpu.matmul %13, %0, %cst_12 {dimension_numbers = #tpu.dot_dimension_numbers<[1], [0], [0], [1], [0, 0, 1, 1], [], []>} : vector<288x128xf32>, vector<128x128xf32>, vector<288x128xf32> -> vector<288x128xf32>
    %15 = arith.maximumf %11, %14 : vector<288x128xf32>
    %c0_13 = arith.constant 0 : index
    %c0_14 = arith.constant 0 : index
    %16 = vector.load %arg3[%c0_13, %c0_14] : memref<1x128xf32, #tpu.memory_space<vmem>>, vector<1x128xf32>
    %17 = vector.broadcast %16 : vector<1x128xf32> to vector<288x128xf32>
    %18 = arith.addf %15, %17 : vector<288x128xf32>
    %cst_15 = arith.constant 0.000000e+00 : f32
    %19 = vector.broadcast %cst_15 : f32 to vector<288x128xf32>
    %20 = arith.maximumf %18, %19 : vector<288x128xf32>
    %c0_16 = arith.constant 0 : index
    %c0_17 = arith.constant 0 : index
    %21 = vector.load %arg4[%c0_16, %c0_17] : memref<288x128xf32, #tpu.memory_space<vmem>>, vector<288x128xf32>
    tpu.vector_store %arg4[%c0_16, %c0_17], %20 {strides = array<i32>} : memref<288x128xf32, #tpu.memory_space<vmem>>, vector<288x128xf32>,
    return
  }
  func.func @transform_0(%arg0: i32) -> (i32, i32, i32) {
    %c0_i32 = arith.constant 0 : i32
    %c0_i32_0 = arith.constant 0 : i32
    %c0_i32_1 = arith.constant 0 : i32
    return %c0_i32, %arg0, %c0_i32_0 : i32, i32, i32
  }
  func.func @transform_1(%arg0: i32) -> (i32, i32) {
    %c0_i32 = arith.constant 0 : i32
    %c0_i32_0 = arith.constant 0 : i32
    %c0_i32_1 = arith.constant 0 : i32
    return %c0_i32, %c0_i32_0 : i32, i32
  }
  func.func @transform_2(%arg0: i32) -> (i32, i32) {
    %c0_i32 = arith.constant 0 : i32
    %c0_i32_0 = arith.constant 0 : i32
    %c0_i32_1 = arith.constant 0 : i32
    return %c0_i32, %c0_i32_0 : i32, i32
  }
  func.func @transform_3(%arg0: i32) -> (i32, i32) {
    %c0_i32 = arith.constant 0 : i32
    %c0_i32_0 = arith.constant 0 : i32
    return %arg0, %c0_i32 : i32, i32
  }
}

module attributes {stable_mosaic.version = 11 : i64} {
  func.func @_conv_pool_relu_kernel(%arg0: i32, %arg1: memref<4x32x512xf32, #tpu.memory_space<vmem>>, %arg2: memref<512x128xf32, #tpu.memory_space<vmem>>, %arg3: memref<1x128xf32, #tpu.memory_space<vmem>>, %arg4: memref<32x128xf32, #tpu.memory_space<vmem>>) attributes {dimension_semantics = [#tpu.dimension_semantics<parallel>], iteration_bounds = array<i64: 1>, scalar_prefetch = 0 : i64, scratch_operands = 0 : i64, tpu.core_type = #tpu.core_type<tc>, window_params = [{transform_indices = @transform_0, window_bounds = array<i64: 4, 32, 512>}, {pipeline_mode = #tpu.pipeline_mode<synchronous>, transform_indices = @transform_1, window_bounds = array<i64: 512, 128>}, {pipeline_mode = #tpu.pipeline_mode<synchronous>, transform_indices = @transform_2, window_bounds = array<i64: 1, 128>}, {transform_indices = @transform_3, window_bounds = array<i64: 32, 128>}]} {
    %c0 = arith.constant 0 : index
    %c0_0 = arith.constant 0 : index
    %0 = vector.load %arg2[%c0, %c0_0] : memref<512x128xf32, #tpu.memory_space<vmem>>, vector<512x128xf32>
    %c0_1 = arith.constant 0 : index
    %c0_2 = arith.constant 0 : index
    %c0_3 = arith.constant 0 : index
    %1 = vector.load %arg1[%c0_1, %c0_2, %c0_3] : memref<4x32x512xf32, #tpu.memory_space<vmem>>, vector<1x32x512xf32>
    %2 = vector.shape_cast %1 : vector<1x32x512xf32> to vector<32x512xf32>
    %cst = arith.constant dense<0.000000e+00> : vector<32x128xf32>
    %3 = tpu.matmul %2, %0, %cst {dimension_numbers = #tpu.dot_dimension_numbers<[1], [0], [0], [1], [0, 0, 1, 1], [], []>} : vector<32x512xf32>, vector<512x128xf32>, vector<32x128xf32> -> vector<32x128xf32>
    %c1 = arith.constant 1 : index
    %c0_4 = arith.constant 0 : index
    %c0_5 = arith.constant 0 : index
    %4 = vector.load %arg1[%c1, %c0_4, %c0_5] : memref<4x32x512xf32, #tpu.memory_space<vmem>>, vector<1x32x512xf32>
    %5 = vector.shape_cast %4 : vector<1x32x512xf32> to vector<32x512xf32>
    %cst_6 = arith.constant dense<0.000000e+00> : vector<32x128xf32>
    %6 = tpu.matmul %5, %0, %cst_6 {dimension_numbers = #tpu.dot_dimension_numbers<[1], [0], [0], [1], [0, 0, 1, 1], [], []>} : vector<32x512xf32>, vector<512x128xf32>, vector<32x128xf32> -> vector<32x128xf32>
    %7 = arith.maximumf %3, %6 : vector<32x128xf32>
    %c2 = arith.constant 2 : index
    %c0_7 = arith.constant 0 : index
    %c0_8 = arith.constant 0 : index
    %8 = vector.load %arg1[%c2, %c0_7, %c0_8] : memref<4x32x512xf32, #tpu.memory_space<vmem>>, vector<1x32x512xf32>
    %9 = vector.shape_cast %8 : vector<1x32x512xf32> to vector<32x512xf32>
    %cst_9 = arith.constant dense<0.000000e+00> : vector<32x128xf32>
    %10 = tpu.matmul %9, %0, %cst_9 {dimension_numbers = #tpu.dot_dimension_numbers<[1], [0], [0], [1], [0, 0, 1, 1], [], []>} : vector<32x512xf32>, vector<512x128xf32>, vector<32x128xf32> -> vector<32x128xf32>
    %11 = arith.maximumf %7, %10 : vector<32x128xf32>
    %c3 = arith.constant 3 : index
    %c0_10 = arith.constant 0 : index
    %c0_11 = arith.constant 0 : index
    %12 = vector.load %arg1[%c3, %c0_10, %c0_11] : memref<4x32x512xf32, #tpu.memory_space<vmem>>, vector<1x32x512xf32>
    %13 = vector.shape_cast %12 : vector<1x32x512xf32> to vector<32x512xf32>
    %cst_12 = arith.constant dense<0.000000e+00> : vector<32x128xf32>
    %14 = tpu.matmul %13, %0, %cst_12 {dimension_numbers = #tpu.dot_dimension_numbers<[1], [0], [0], [1], [0, 0, 1, 1], [], []>} : vector<32x512xf32>, vector<512x128xf32>, vector<32x128xf32> -> vector<32x128xf32>
    %15 = arith.maximumf %11, %14 : vector<32x128xf32>
    %c0_13 = arith.constant 0 : index
    %c0_14 = arith.constant 0 : index
    %16 = vector.load %arg3[%c0_13, %c0_14] : memref<1x128xf32, #tpu.memory_space<vmem>>, vector<1x128xf32>
    %17 = vector.broadcast %16 : vector<1x128xf32> to vector<32x128xf32>
    %18 = arith.addf %15, %17 : vector<32x128xf32>
    %cst_15 = arith.constant 0.000000e+00 : f32
    %19 = vector.broadcast %cst_15 : f32 to vector<32x128xf32>
    %20 = arith.maximumf %18, %19 : vector<32x128xf32>
    %c0_16 = arith.constant 0 : index
    %c0_17 = arith.constant 0 : index
    %21 = vector.load %arg4[%c0_16, %c0_17] : memref<32x128xf32, #tpu.memory_space<vmem>>, vector<32x128xf32>
    tpu.vector_store %arg4[%c0_16, %c0_17], %20 {strides = array<i32>} : memref<32x128xf32, #tpu.memory_space<vmem>>, vector<32x128xf32>,
    return
  }
  func.func @transform_0(%arg0: i32) -> (i32, i32, i32) {
    %c0_i32 = arith.constant 0 : i32
    %c0_i32_0 = arith.constant 0 : i32
    %c0_i32_1 = arith.constant 0 : i32
    return %c0_i32, %arg0, %c0_i32_0 : i32, i32, i32
  }
  func.func @transform_1(%arg0: i32) -> (i32, i32) {
    %c0_i32 = arith.constant 0 : i32
    %c0_i32_0 = arith.constant 0 : i32
    %c0_i32_1 = arith.constant 0 : i32
    return %c0_i32, %c0_i32_0 : i32, i32
  }
  func.func @transform_2(%arg0: i32) -> (i32, i32) {
    %c0_i32 = arith.constant 0 : i32
    %c0_i32_0 = arith.constant 0 : i32
    %c0_i32_1 = arith.constant 0 : i32
    return %c0_i32, %c0_i32_0 : i32, i32
  }
  func.func @transform_3(%arg0: i32) -> (i32, i32) {
    %c0_i32 = arith.constant 0 : i32
    %c0_i32_0 = arith.constant 0 : i32
    return %arg0, %c0_i32 : i32, i32
  }
}

module attributes {stable_mosaic.version = 11 : i64} {
  func.func @_fc_head_kernel(%arg0: i32, %arg1: memref<2x896xf32, #tpu.memory_space<vmem>>, %arg2: memref<896x512xf32, #tpu.memory_space<vmem>>, %arg3: memref<1x512xf32, #tpu.memory_space<vmem>>, %arg4: memref<512x128xf32, #tpu.memory_space<vmem>>, %arg5: memref<1x128xf32, #tpu.memory_space<vmem>>, %arg6: memref<2x128xf32, #tpu.memory_space<vmem>>) attributes {dimension_semantics = [#tpu.dimension_semantics<parallel>], iteration_bounds = array<i64: 1>, scalar_prefetch = 0 : i64, scratch_operands = 0 : i64, tpu.core_type = #tpu.core_type<tc>, window_params = [{transform_indices = @transform_0, window_bounds = array<i64: 2, 896>}, {pipeline_mode = #tpu.pipeline_mode<synchronous>, transform_indices = @transform_1, window_bounds = array<i64: 896, 512>}, {pipeline_mode = #tpu.pipeline_mode<synchronous>, transform_indices = @transform_2, window_bounds = array<i64: 1, 512>}, {pipeline_mode = #tpu.pipeline_mode<synchronous>, transform_indices = @transform_3, window_bounds = array<i64: 512, 128>}, {pipeline_mode = #tpu.pipeline_mode<synchronous>, transform_indices = @transform_4, window_bounds = array<i64: 1, 128>}, {transform_indices = @transform_5, window_bounds = array<i64: 2, 128>}]} {
    %c0 = arith.constant 0 : index
    %c0_0 = arith.constant 0 : index
    %0 = vector.load %arg1[%c0, %c0_0] : memref<2x896xf32, #tpu.memory_space<vmem>>, vector<2x896xf32>
    %c0_1 = arith.constant 0 : index
    %c0_2 = arith.constant 0 : index
    %1 = vector.load %arg2[%c0_1, %c0_2] : memref<896x512xf32, #tpu.memory_space<vmem>>, vector<896x512xf32>
    %cst = arith.constant dense<0.000000e+00> : vector<2x512xf32>
    %2 = tpu.matmul %0, %1, %cst {dimension_numbers = #tpu.dot_dimension_numbers<[1], [0], [0], [1], [0, 0, 1, 1], [], []>} : vector<2x896xf32>, vector<896x512xf32>, vector<2x512xf32> -> vector<2x512xf32>
    %c0_3 = arith.constant 0 : index
    %c0_4 = arith.constant 0 : index
    %3 = vector.load %arg3[%c0_3, %c0_4] : memref<1x512xf32, #tpu.memory_space<vmem>>, vector<1x512xf32>
    %4 = vector.broadcast %3 : vector<1x512xf32> to vector<2x512xf32>
    %5 = arith.addf %2, %4 : vector<2x512xf32>
    %c0_5 = arith.constant 0 : index
    %c0_6 = arith.constant 0 : index
    %6 = vector.load %arg4[%c0_5, %c0_6] : memref<512x128xf32, #tpu.memory_space<vmem>>, vector<512x128xf32>
    %cst_7 = arith.constant dense<0.000000e+00> : vector<2x128xf32>
    %7 = tpu.matmul %5, %6, %cst_7 {dimension_numbers = #tpu.dot_dimension_numbers<[1], [0], [0], [1], [0, 0, 1, 1], [], []>} : vector<2x512xf32>, vector<512x128xf32>, vector<2x128xf32> -> vector<2x128xf32>
    %c0_8 = arith.constant 0 : index
    %c0_9 = arith.constant 0 : index
    %8 = vector.load %arg5[%c0_8, %c0_9] : memref<1x128xf32, #tpu.memory_space<vmem>>, vector<1x128xf32>
    %9 = vector.broadcast %8 : vector<1x128xf32> to vector<2x128xf32>
    %10 = arith.addf %7, %9 : vector<2x128xf32>
    %c0_10 = arith.constant 0 : index
    %c0_11 = arith.constant 0 : index
    %11 = vector.load %arg6[%c0_10, %c0_11] : memref<2x128xf32, #tpu.memory_space<vmem>>, vector<2x128xf32>
    tpu.vector_store %arg6[%c0_10, %c0_11], %10 {strides = array<i32>} : memref<2x128xf32, #tpu.memory_space<vmem>>, vector<2x128xf32>,
    return
  }
  func.func @transform_0(%arg0: i32) -> (i32, i32) {
    %c0_i32 = arith.constant 0 : i32
    %c0_i32_0 = arith.constant 0 : i32
    return %arg0, %c0_i32 : i32, i32
  }
  func.func @transform_1(%arg0: i32) -> (i32, i32) {
    %c0_i32 = arith.constant 0 : i32
    %c0_i32_0 = arith.constant 0 : i32
    %c0_i32_1 = arith.constant 0 : i32
    return %c0_i32, %c0_i32_0 : i32, i32
  }
  func.func @transform_2(%arg0: i32) -> (i32, i32) {
    %c0_i32 = arith.constant 0 : i32
    %c0_i32_0 = arith.constant 0 : i32
    %c0_i32_1 = arith.constant 0 : i32
    return %c0_i32, %c0_i32_0 : i32, i32
  }
  func.func @transform_3(%arg0: i32) -> (i32, i32) {
    %c0_i32 = arith.constant 0 : i32
    %c0_i32_0 = arith.constant 0 : i32
    %c0_i32_1 = arith.constant 0 : i32
    return %c0_i32, %c0_i32_0 : i32, i32
  }
  func.func @transform_4(%arg0: i32) -> (i32, i32) {
    %c0_i32 = arith.constant 0 : i32
    %c0_i32_0 = arith.constant 0 : i32
    %c0_i32_1 = arith.constant 0 : i32
    return %c0_i32, %c0_i32_0 : i32, i32
  }
  func.func @transform_5(%arg0: i32) -> (i32, i32) {
    %c0_i32 = arith.constant 0 : i32
    %c0_i32_0 = arith.constant 0 : i32
    return %arg0, %c0_i32 : i32, i32
  }
}

</mosaic_0001>

<llo_original>
// kernel: lenet_forward.3
$region0: #{lenet_forward.3}
  #allocation0 [shape = 'u32[]', space=smem, size = 0x4, offset = 0x4, fixed_abs, tag = 'smem constant byte address 0x4 - core index']
  #allocation1 [shape = 'u32[144,128]{1,0:T(1,128)}', space=vmem, size = 0x12000, scoped, tag = 'internal scratch']
  %s0 = inlined_call_operand.vmem [shape: f32[4,288,128], index: 0, kind: input, shape index: {}]
  %s1 = inlined_call_operand.vmem [shape: f32[128,128], index: 1, kind: input, shape index: {}]
  %s2 = inlined_call_operand.vmem [shape: f32[1,128], index: 2, kind: input, shape index: {}]
  %s3 = inlined_call_operand.vmem [shape: f32[288,128], index: 3, kind: output, shape index: {}]
  %s4 = sld [smem:[#allocation0]]
  $region22: #{lenet_forward.3} parent=0
    _
  %s6 = ssub.s32 1, %s4
  %s7 = scalar_select 0, %s6, %s4
  // Predicated region
  $region2: #{lenet_forward.3} parent=0 // pred_check
    _
  $region3: #{lenet_forward.3} parent=0 // pred_check_branch
    %9 = sbr.rel (0) target = $region5
  $region4: #{lenet_forward.3} parent=0 // pred_region
    _
  $region5: #{lenet_forward.3} parent=0 // pred_fallthru
    _
  // Predicated region
  $region6: #{lenet_forward.3} parent=0 // pred_check
    _
  $region7: #{lenet_forward.3} parent=0 // pred_check_branch
    %11 = sbr.rel (0) target = $region9
  $region8: #{lenet_forward.3} parent=0 // pred_region
    _
  $region9: #{lenet_forward.3} parent=0 // pred_fallthru
    _
  // Predicated region
  $region10: #{lenet_forward.3} parent=0 // pred_check
    _
  $region11: #{lenet_forward.3} parent=0 // pred_check_branch
    %13 = sbr.rel (0) target = $region13
  $region12: #{lenet_forward.3} parent=0 // pred_region
    _
  $region13: #{lenet_forward.3} parent=0 // pred_fallthru
    _
  %v14 = vld [vmem:[%s1] sm:$0xff]
  %v15 = vld [vmem:[%s1 + $0x8] sm:$0xff]
  %v16 = vld [vmem:[%s1 + $0x10] sm:$0xff]
  %v17 = vld [vmem:[%s1 + $0x18] sm:$0xff]
  %v18 = vld [vmem:[%s1 + $0x20] sm:$0xff]
  %v19 = vld [vmem:[%s1 + $0x28] sm:$0xff]
  %v20 = vld [vmem:[%s1 + $0x30] sm:$0xff]
  %v21 = vld [vmem:[%s1 + $0x38] sm:$0xff]
  %v22 = vld [vmem:[%s1 + $0x40] sm:$0xff]
  %v23 = vld [vmem:[%s1 + $0x48] sm:$0xff]
  %v24 = vld [vmem:[%s1 + $0x50] sm:$0xff]
  %v25 = vld [vmem:[%s1 + $0x58] sm:$0xff]
  %v26 = vld [vmem:[%s1 + $0x60] sm:$0xff]
  %v27 = vld [vmem:[%s1 + $0x68] sm:$0xff]
  %v28 = vld [vmem:[%s1 + $0x70] sm:$0xff]
  %v29 = vld [vmem:[%s1 + $0x78] sm:$0xff]
  %v30 = vld [vmem:[%s0] sm:$0xff]
  %v31 = vld [vmem:[%s0 + $0x8] sm:$0xff]
  %v32 = vld [vmem:[%s0 + $0x10] sm:$0xff]
  %v33 = vld [vmem:[%s0 + $0x18] sm:$0xff]
  %v34 = vld [vmem:[%s0 + $0x20] sm:$0xff]
  %v35 = vld [vmem:[%s0 + $0x28] sm:$0xff]
  %v36 = vld [vmem:[%s0 + $0x30] sm:$0xff]
  %v37 = vld [vmem:[%s0 + $0x38] sm:$0xff]
  %v38 = vld [vmem:[%s0 + $0x40] sm:$0xff]
  %v39 = vld [vmem:[%s0 + $0x48] sm:$0xff]
  %v40 = vld [vmem:[%s0 + $0x50] sm:$0xff]
  %v41 = vld [vmem:[%s0 + $0x58] sm:$0xff]
  %v42 = vld [vmem:[%s0 + $0x60] sm:$0xff]
  %v43 = vld [vmem:[%s0 + $0x68] sm:$0xff]
  %v44 = vld [vmem:[%s0 + $0x70] sm:$0xff]
  %v45 = vld [vmem:[%s0 + $0x78] sm:$0xff]
  %v46 = vld [vmem:[%s0 + $0x80] sm:$0xff]
  %v47 = vld [vmem:[%s0 + $0x88] sm:$0xff]
  %v48 = vld [vmem:[%s0 + $0x90] sm:$0xff]
  %v49 = vld [vmem:[%s0 + $0x98] sm:$0xff]
  %v50 = vld [vmem:[%s0 + $0xa0] sm:$0xff]
  %v51 = vld [vmem:[%s0 + $0xa8] sm:$0xff]
  %v52 = vld [vmem:[%s0 + $0xb0] sm:$0xff]
  %v53 = vld [vmem:[%s0 + $0xb8] sm:$0xff]
  %v54 = vld [vmem:[%s0 + $0xc0] sm:$0xff]
  %v55 = vld [vmem:[%s0 + $0xc8] sm:$0xff]
  %v56 = vld [vmem:[%s0 + $0xd0] sm:$0xff]
  %v57 = vld [vmem:[%s0 + $0xd8] sm:$0xff]
  %v58 = vld [vmem:[%s0 + $0xe0] sm:$0xff]
  %v59 = vld [vmem:[%s0 + $0xe8] sm:$0xff]
  %v60 = vld [vmem:[%s0 + $0xf0] sm:$0xff]
  %v61 = vld [vmem:[%s0 + $0xf8] sm:$0xff]
  %v62 = vld [vmem:[%s0 + $0x100] sm:$0xff]
  %v63 = vld [vmem:[%s0 + $0x108] sm:$0xff]
  %v64 = vld [vmem:[%s0 + $0x110] sm:$0xff]
  %v65 = vld [vmem:[%s0 + $0x118] sm:$0xff]
  %66 = vmatprep.subr.mxu0 0.0
  %67 = vmatpush1.msra.mxu0 %v29
  %68 = vmatprep.subr.mxu0 0.0
  %69 = vmatpush1.msra.mxu0 %v28
  %70 = vmatprep.subr.mxu0 0.0
  %71 = vmatpush1.msra.mxu0 %v27
  %72 = vmatprep.subr.mxu0 0.0
  %73 = vmatpush1.msra.mxu0 %v26
  %74 = vmatprep.subr.mxu0 0.0
  %75 = vmatpush1.msra.mxu0 %v25
  %76 = vmatprep.subr.mxu0 0.0
  %77 = vmatpush1.msra.mxu0 %v24
  %78 = vmatprep.subr.mxu0 0.0
  %79 = vmatpush1.msra.mxu0 %v23
  %80 = vmatprep.subr.mxu0 0.0
  %81 = vmatpush1.msra.mxu0 %v22
  %82 = vmatprep.subr.mxu0 0.0
  %83 = vmatpush1.msra.mxu0 %v21
  %84 = vmatprep.subr.mxu0 0.0
  %85 = vmatpush1.msra.mxu0 %v20
  %86 = vmatprep.subr.mxu0 0.0
  %87 = vmatpush1.msra.mxu0 %v19
  %88 = vmatprep.subr.mxu0 0.0
  %89 = vmatpush1.msra.mxu0 %v18
  %90 = vmatprep.subr.mxu0 0.0
  %91 = vmatpush1.msra.mxu0 %v17
  %92 = vmatprep.subr.mxu0 0.0
  %93 = vmatpush1.msra.mxu0 %v16
  %94 = vmatprep.subr.mxu0 0.0
  %95 = vmatpush1.msra.mxu0 %v15
  %96 = vmatprep.subr.mxu0 0.0
  %97 = vmatpush1.msra.mxu0 %v14
  %98 = vmatprep.subr.mxu0 0.0
  %99 = vmatpush2.msra.mxu0 0.0
  %100 = vmatprep.subr.mxu0 0.0
  %101 = vmatpush2.msra.mxu0 0.0
  %102 = vmatprep.subr.mxu0 0.0
  %103 = vmatpush2.msra.mxu0 0.0
  %104 = vmatprep.subr.mxu0 0.0
  %105 = vmatpush2.msra.mxu0 0.0
  %106 = vmatprep.subr.mxu0 0.0
  %107 = vmatpush2.msra.mxu0 0.0
  %108 = vmatprep.subr.mxu0 0.0
  %109 = vmatpush2.msra.mxu0 0.0
  %110 = vmatprep.subr.mxu0 0.0
  %111 = vmatpush2.msra.mxu0 0.0
  %112 = vmatprep.subr.mxu0 0.0
  %113 = vmatpush2.msra.mxu0 0.0
  %114 = vmatprep.subr.mxu0 0.0
  %115 = vmatpush2.msra.mxu0 0.0
  %116 = vmatprep.subr.mxu0 0.0
  %117 = vmatpush2.msra.mxu0 0.0
  %118 = vmatprep.subr.mxu0 0.0
  %119 = vmatpush2.msra.mxu0 0.0
  %120 = vmatprep.subr.mxu0 0.0
  %121 = vmatpush2.msra.mxu0 0.0
  %122 = vmatprep.subr.mxu0 0.0
  %123 = vmatpush2.msra.mxu0 0.0
  %124 = vmatprep.subr.mxu0 0.0
  %125 = vmatpush2.msra.mxu0 0.0
  %126 = vmatprep.subr.mxu0 0.0
  %127 = vmatpush2.msra.mxu0 0.0
  %128 = vmatprep.subr.mxu0 0.0
  %129 = vmatpush2.msra.mxu0 0.0
  %130 = vmatprep.mubr.f32.mxu0 0.0
  %131 = vmatmul.mubr.f32.gmra.mxu0 %v30
  %v132 = vpop.f32.mrf.mxu0
  %v133 = vadd.f32 0.0, %v132
  %v134 = vpop.f32.mrf.mxu0
  %135 = vmatprep.mubr.f32.mxu0 0.0
  %136 = vmatmul.mubr.f32.gmra.mxu0 %v31
  %v137 = vpop.f32.mrf.mxu0
  %v138 = vadd.f32 0.0, %v137
  %v139 = vpop.f32.mrf.mxu0
  %140 = vmatprep.mubr.f32.mxu0 0.0
  %141 = vmatmul.mubr.f32.gmra.mxu0 %v32
  %v142 = vpop.f32.mrf.mxu0
  %v143 = vadd.f32 0.0, %v142
  %v144 = vpop.f32.mrf.mxu0
  %145 = vmatprep.mubr.f32.mxu0 0.0
  %146 = vmatmul.mubr.f32.gmra.mxu0 %v33
  %v147 = vpop.f32.mrf.mxu0
  %v148 = vadd.f32 0.0, %v147
  %v149 = vpop.f32.mrf.mxu0
  %150 = vmatprep.mubr.f32.mxu0 0.0
  %151 = vmatmul.mubr.f32.gmra.mxu0 %v34
  %v152 = vpop.f32.mrf.mxu0
  %v153 = vadd.f32 0.0, %v152
  %v154 = vpop.f32.mrf.mxu0
  %155 = vmatprep.mubr.f32.mxu0 0.0
  %156 = vmatmul.mubr.f32.gmra.mxu0 %v35
  %v157 = vpop.f32.mrf.mxu0
  %v158 = vadd.f32 0.0, %v157
  %v159 = vpop.f32.mrf.mxu0
  %160 = vmatprep.mubr.f32.mxu0 0.0
  %161 = vmatmul.mubr.f32.gmra.mxu0 %v36
  %v162 = vpop.f32.mrf.mxu0
  %v163 = vadd.f32 0.0, %v162
  %v164 = vpop.f32.mrf.mxu0
  %165 = vmatprep.mubr.f32.mxu0 0.0
  %166 = vmatmul.mubr.f32.gmra.mxu0 %v37
  %v167 = vpop.f32.mrf.mxu0
  %v168 = vadd.f32 0.0, %v167
  %v169 = vpop.f32.mrf.mxu0
  %170 = vmatprep.mubr.f32.mxu0 0.0
  %171 = vmatmul.mubr.f32.gmra.mxu0 %v38
  %v172 = vpop.f32.mrf.mxu0
  %v173 = vadd.f32 0.0, %v172
  %v174 = vpop.f32.mrf.mxu0
  %175 = vmatprep.mubr.f32.mxu0 0.0
  %176 = vmatmul.mubr.f32.gmra.mxu0 %v39
  %v177 = vpop.f32.mrf.mxu0
  %v178 = vadd.f32 0.0, %v177
  %v179 = vpop.f32.mrf.mxu0
  %180 = vmatprep.mubr.f32.mxu0 0.0
  %181 = vmatmul.mubr.f32.gmra.mxu0 %v40
  %v182 = vpop.f32.mrf.mxu0
  %v183 = vadd.f32 0.0, %v182
  %v184 = vpop.f32.mrf.mxu0
  %185 = vmatprep.mubr.f32.mxu0 0.0
  %186 = vmatmul.mubr.f32.gmra.mxu0 %v41
  %v187 = vpop.f32.mrf.mxu0
  %v188 = vadd.f32 0.0, %v187
  %v189 = vpop.f32.mrf.mxu0
  %190 = vmatprep.mubr.f32.mxu0 0.0
  %191 = vmatmul.mubr.f32.gmra.mxu0 %v42
  %v192 = vpop.f32.mrf.mxu0
  %v193 = vadd.f32 0.0, %v192
  %v194 = vpop.f32.mrf.mxu0
  %195 = vmatprep.mubr.f32.mxu0 0.0
  %196 = vmatmul.mubr.f32.gmra.mxu0 %v43
  %v197 = vpop.f32.mrf.mxu0
  %v198 = vadd.f32 0.0, %v197
  %v199 = vpop.f32.mrf.mxu0
  %200 = vmatprep.mubr.f32.mxu0 0.0
  %201 = vmatmul.mubr.f32.gmra.mxu0 %v44
  %v202 = vpop.f32.mrf.mxu0
  %v203 = vadd.f32 0.0, %v202
  %v204 = vpop.f32.mrf.mxu0
  %205 = vmatprep.mubr.f32.mxu0 0.0
  %206 = vmatmul.mubr.f32.gmra.mxu0 %v45
  %v207 = vpop.f32.mrf.mxu0
  %v208 = vadd.f32 0.0, %v207
  %v209 = vpop.f32.mrf.mxu0
  %210 = vmatprep.mubr.f32.mxu0 0.0
  %211 = vmatmul.mubr.f32.gmra.mxu0 %v46
  %v212 = vpop.f32.mrf.mxu0
  %v213 = vadd.f32 0.0, %v212
  %v214 = vpop.f32.mrf.mxu0
  %215 = vmatprep.mubr.f32.mxu0 0.0
  %216 = vmatmul.mubr.f32.gmra.mxu0 %v47
  %v217 = vpop.f32.mrf.mxu0
  %v218 = vadd.f32 0.0, %v217
  %v219 = vpop.f32.mrf.mxu0
  %220 = vmatprep.mubr.f32.mxu0 0.0
  %221 = vmatmul.mubr.f32.gmra.mxu0 %v48
  %v222 = vpop.f32.mrf.mxu0
  %v223 = vadd.f32 0.0, %v222
  %v224 = vpop.f32.mrf.mxu0
  %225 = vmatprep.mubr.f32.mxu0 0.0
  %226 = vmatmul.mubr.f32.gmra.mxu0 %v49
  %v227 = vpop.f32.mrf.mxu0
  %v228 = vadd.f32 0.0, %v227
  %v229 = vpop.f32.mrf.mxu0
  %230 = vmatprep.mubr.f32.mxu0 0.0
  %231 = vmatmul.mubr.f32.gmra.mxu0 %v50
  %v232 = vpop.f32.mrf.mxu0
  %v233 = vadd.f32 0.0, %v232
  %v234 = vpop.f32.mrf.mxu0
  %235 = vmatprep.mubr.f32.mxu0 0.0
  %236 = vmatmul.mubr.f32.gmra.mxu0 %v51
  %v237 = vpop.f32.mrf.mxu0
  %v238 = vadd.f32 0.0, %v237
  %v239 = vpop.f32.mrf.mxu0
  %240 = vmatprep.mubr.f32.mxu0 0.0
  %241 = vmatmul.mubr.f32.gmra.mxu0 %v52
  %v242 = vpop.f32.mrf.mxu0
  %v243 = vadd.f32 0.0, %v242
  %v244 = vpop.f32.mrf.mxu0
  %245 = vmatprep.mubr.f32.mxu0 0.0
  %246 = vmatmul.mubr.f32.gmra.mxu0 %v53
  %v247 = vpop.f32.mrf.mxu0
  %v248 = vadd.f32 0.0, %v247
  %v249 = vpop.f32.mrf.mxu0
  %250 = vmatprep.mubr.f32.mxu0 0.0
  %251 = vmatmul.mubr.f32.gmra.mxu0 %v54
  %v252 = vpop.f32.mrf.mxu0
  %v253 = vadd.f32 0.0, %v252
  %v254 = vpop.f32.mrf.mxu0
  %255 = vmatprep.mubr.f32.mxu0 0.0
  %256 = vmatmul.mubr.f32.gmra.mxu0 %v55
  %v257 = vpop.f32.mrf.mxu0
  %v258 = vadd.f32 0.0, %v257
  %v259 = vpop.f32.mrf.mxu0
  %260 = vmatprep.mubr.f32.mxu0 0.0
  %261 = vmatmul.mubr.f32.gmra.mxu0 %v56
  %v262 = vpop.f32.mrf.mxu0
  %v263 = vadd.f32 0.0, %v262
  %v264 = vpop.f32.mrf.mxu0
  %265 = vmatprep.mubr.f32.mxu0 0.0
  %266 = vmatmul.mubr.f32.gmra.mxu0 %v57
  %v267 = vpop.f32.mrf.mxu0
  %v268 = vadd.f32 0.0, %v267
  %v269 = vpop.f32.mrf.mxu0
  %270 = vmatprep.mubr.f32.mxu0 0.0
  %271 = vmatmul.mubr.f32.gmra.mxu0 %v58
  %v272 = vpop.f32.mrf.mxu0
  %v273 = vadd.f32 0.0, %v272
  %v274 = vpop.f32.mrf.mxu0
  %275 = vmatprep.mubr.f32.mxu0 0.0
  %276 = vmatmul.mubr.f32.gmra.mxu0 %v59
  %v277 = vpop.f32.mrf.mxu0
  %v278 = vadd.f32 0.0, %v277
  %v279 = vpop.f32.mrf.mxu0
  %280 = vmatprep.mubr.f32.mxu0 0.0
  %281 = vmatmul.mubr.f32.gmra.mxu0 %v60
  %v282 = vpop.f32.mrf.mxu0
  %v283 = vadd.f32 0.0, %v282
  %v284 = vpop.f32.mrf.mxu0
  %285 = vmatprep.mubr.f32.mxu0 0.0
  %286 = vmatmul.mubr.f32.gmra.mxu0 %v61
  %v287 = vpop.f32.mrf.mxu0
  %v288 = vadd.f32 0.0, %v287
  %v289 = vpop.f32.mrf.mxu0
  %290 = vmatprep.mubr.f32.mxu0 0.0
  %291 = vmatmul.mubr.f32.gmra.mxu0 %v62
  %v292 = vpop.f32.mrf.mxu0
  %v293 = vadd.f32 0.0, %v292
  %v294 = vpop.f32.mrf.mxu0
  %295 = vmatprep.mubr.f32.mxu0 0.0
  %296 = vmatmul.mubr.f32.gmra.mxu0 %v63
  %v297 = vpop.f32.mrf.mxu0
  %v298 = vadd.f32 0.0, %v297
  %v299 = vpop.f32.mrf.mxu0
  %300 = vmatprep.mubr.f32.mxu0 0.0
  %301 = vmatmul.mubr.f32.gmra.mxu0 %v64
  %v302 = vpop.f32.mrf.mxu0
  %v303 = vadd.f32 0.0, %v302
  %v304 = vpop.f32.mrf.mxu0
  %305 = vmatprep.mubr.f32.mxu0 0.0
  %306 = vmatmul.mubr.f32.gmra.mxu0 %v65
  %v307 = vpop.f32.mrf.mxu0
  %v308 = vadd.f32 0.0, %v307
  %v309 = vpop.f32.mrf.mxu0
  %310 = vdwg.mxu0
  %s311 = scalar_lea.vmem %s0, 288
  %v312 = vld [vmem:[%s311] sm:$0xff]
  %v313 = vld [vmem:[%s311 + $0x8] sm:$0xff]
  %v314 = vld [vmem:[%s311 + $0x10] sm:$0xff]
  %v315 = vld [vmem:[%s311 + $0x18] sm:$0xff]
  %v316 = vld [vmem:[%s311 + $0x20] sm:$0xff]
  %v317 = vld [vmem:[%s311 + $0x28] sm:$0xff]
  %v318 = vld [vmem:[%s311 + $0x30] sm:$0xff]
  %v319 = vld [vmem:[%s311 + $0x38] sm:$0xff]
  %v320 = vld [vmem:[%s311 + $0x40] sm:$0xff]
  %v321 = vld [vmem:[%s311 + $0x48] sm:$0xff]
  %v322 = vld [vmem:[%s311 + $0x50] sm:$0xff]
  %v323 = vld [vmem:[%s311 + $0x58] sm:$0xff]
  %v324 = vld [vmem:[%s311 + $0x60] sm:$0xff]
  %v325 = vld [vmem:[%s311 + $0x68] sm:$0xff]
  %v326 = vld [vmem:[%s311 + $0x70] sm:$0xff]
  %v327 = vld [vmem:[%s311 + $0x78] sm:$0xff]
  %v328 = vld [vmem:[%s311 + $0x80] sm:$0xff]
  %v329 = vld [vmem:[%s311 + $0x88] sm:$0xff]
  %v330 = vld [vmem:[%s311 + $0x90] sm:$0xff]
  %v331 = vld [vmem:[%s311 + $0x98] sm:$0xff]
  %v332 = vld [vmem:[%s311 + $0xa0] sm:$0xff]
  %v333 = vld [vmem:[%s311 + $0xa8] sm:$0xff]
  %v334 = vld [vmem:[%s311 + $0xb0] sm:$0xff]
  %v335 = vld [vmem:[%s311 + $0xb8] sm:$0xff]
  %v336 = vld [vmem:[%s311 + $0xc0] sm:$0xff]
  %v337 = vld [vmem:[%s311 + $0xc8] sm:$0xff]
  %v338 = vld [vmem:[%s311 + $0xd0] sm:$0xff]
  %v339 = vld [vmem:[%s311 + $0xd8] sm:$0xff]
  %v340 = vld [vmem:[%s311 + $0xe0] sm:$0xff]
  %v341 = vld [vmem:[%s311 + $0xe8] sm:$0xff]
  %v342 = vld [vmem:[%s311 + $0xf0] sm:$0xff]
  %v343 = vld [vmem:[%s311 + $0xf8] sm:$0xff]
  %v344 = vld [vmem:[%s311 + $0x100] sm:$0xff]
  %v345 = vld [vmem:[%s311 + $0x108] sm:$0xff]
  %v346 = vld [vmem:[%s311 + $0x110] sm:$0xff]
  %v347 = vld [vmem:[%s311 + $0x118] sm:$0xff]
  %348 = vmatprep.subr.mxu0 0.0
  %349 = vmatpush1.msra.mxu0 %v29
  %350 = vmatprep.subr.mxu0 0.0
  %351 = vmatpush1.msra.mxu0 %v28
  %352 = vmatprep.subr.mxu0 0.0
  %353 = vmatpush1.msra.mxu0 %v27
  %354 = vmatprep.subr.mxu0 0.0
  %355 = vmatpush1.msra.mxu0 %v26
  %356 = vmatprep.subr.mxu0 0.0
  %357 = vmatpush1.msra.mxu0 %v25
  %358 = vmatprep.subr.mxu0 0.0
  %359 = vmatpush1.msra.mxu0 %v24
  %360 = vmatprep.subr.mxu0 0.0
  %361 = vmatpush1.msra.mxu0 %v23
  %362 = vmatprep.subr.mxu0 0.0
  %363 = vmatpush1.msra.mxu0 %v22
  %364 = vmatprep.subr.mxu0 0.0
  %365 = vmatpush1.msra.mxu0 %v21
  %366 = vmatprep.subr.mxu0 0.0
  %367 = vmatpush1.msra.mxu0 %v20
  %368 = vmatprep.subr.mxu0 0.0
  %369 = vmatpush1.msra.mxu0 %v19
  %370 = vmatprep.subr.mxu0 0.0
  %371 = vmatpush1.msra.mxu0 %v18
  %372 = vmatprep.subr.mxu0 0.0
  %373 = vmatpush1.msra.mxu0 %v17
  %374 = vmatprep.subr.mxu0 0.0
  %375 = vmatpush1.msra.mxu0 %v16
  %376 = vmatprep.subr.mxu0 0.0
  %377 = vmatpush1.msra.mxu0 %v15
  %378 = vmatprep.subr.mxu0 0.0
  %379 = vmatpush1.msra.mxu0 %v14
  %380 = vmatprep.subr.mxu0 0.0
  %381 = vmatpush2.msra.mxu0 0.0
  %382 = vmatprep.subr.mxu0 0.0
  %383 = vmatpush2.msra.mxu0 0.0
  %384 = vmatprep.subr.mxu0 0.0
  %385 = vmatpush2.msra.mxu0 0.0
  %386 = vmatprep.subr.mxu0 0.0
  %387 = vmatpush2.msra.mxu0 0.0
  %388 = vmatprep.subr.mxu0 0.0
  %389 = vmatpush2.msra.mxu0 0.0
  %390 = vmatprep.subr.mxu0 0.0
  %391 = vmatpush2.msra.mxu0 0.0
  %392 = vmatprep.subr.mxu0 0.0
  %393 = vmatpush2.msra.mxu0 0.0
  %394 = vmatprep.subr.mxu0 0.0
  %395 = vmatpush2.msra.mxu0 0.0
  %396 = vmatprep.subr.mxu0 0.0
  %397 = vmatpush2.msra.mxu0 0.0
  %398 = vmatprep.subr.mxu0 0.0
  %399 = vmatpush2.msra.mxu0 0.0
  %400 = vmatprep.subr.mxu0 0.0
  %401 = vmatpush2.msra.mxu0 0.0
  %402 = vmatprep.subr.mxu0 0.0
  %403 = vmatpush2.msra.mxu0 0.0
  %404 = vmatprep.subr.mxu0 0.0
  %405 = vmatpush2.msra.mxu0 0.0
  %406 = vmatprep.subr.mxu0 0.0
  %407 = vmatpush2.msra.mxu0 0.0
  %408 = vmatprep.subr.mxu0 0.0
  %409 = vmatpush2.msra.mxu0 0.0
  %410 = vmatprep.subr.mxu0 0.0
  %411 = vmatpush2.msra.mxu0 0.0
  %412 = vmatprep.mubr.f32.mxu0 0.0
  %413 = vmatmul.mubr.f32.gmra.mxu0 %v312
  %v414 = vpop.f32.mrf.mxu0
  %v415 = vadd.f32 0.0, %v414
  %v416 = vpop.f32.mrf.mxu0
  %417 = vmatprep.mubr.f32.mxu0 0.0
  %418 = vmatmul.mubr.f32.gmra.mxu0 %v313
  %v419 = vpop.f32.mrf.mxu0
  %v420 = vadd.f32 0.0, %v419
  %v421 = vpop.f32.mrf.mxu0
  %422 = vmatprep.mubr.f32.mxu0 0.0
  %423 = vmatmul.mubr.f32.gmra.mxu0 %v314
  %v424 = vpop.f32.mrf.mxu0
  %v425 = vadd.f32 0.0, %v424
  %v426 = vpop.f32.mrf.mxu0
  %427 = vmatprep.mubr.f32.mxu0 0.0
  %428 = vmatmul.mubr.f32.gmra.mxu0 %v315
  %v429 = vpop.f32.mrf.mxu0
  %v430 = vadd.f32 0.0, %v429
  %v431 = vpop.f32.mrf.mxu0
  %432 = vmatprep.mubr.f32.mxu0 0.0
  %433 = vmatmul.mubr.f32.gmra.mxu0 %v316
  %v434 = vpop.f32.mrf.mxu0
  %v435 = vadd.f32 0.0, %v434
  %v436 = vpop.f32.mrf.mxu0
  %437 = vmatprep.mubr.f32.mxu0 0.0
  %438 = vmatmul.mubr.f32.gmra.mxu0 %v317
  %v439 = vpop.f32.mrf.mxu0
  %v440 = vadd.f32 0.0, %v439
  %v441 = vpop.f32.mrf.mxu0
  %442 = vmatprep.mubr.f32.mxu0 0.0
  %443 = vmatmul.mubr.f32.gmra.mxu0 %v318
  %v444 = vpop.f32.mrf.mxu0
  %v445 = vadd.f32 0.0, %v444
  %v446 = vpop.f32.mrf.mxu0
  %447 = vmatprep.mubr.f32.mxu0 0.0
  %448 = vmatmul.mubr.f32.gmra.mxu0 %v319
  %v449 = vpop.f32.mrf.mxu0
  %v450 = vadd.f32 0.0, %v449
  %v451 = vpop.f32.mrf.mxu0
  %452 = vmatprep.mubr.f32.mxu0 0.0
  %453 = vmatmul.mubr.f32.gmra.mxu0 %v320
  %v454 = vpop.f32.mrf.mxu0
  %v455 = vadd.f32 0.0, %v454
  %v456 = vpop.f32.mrf.mxu0
  %457 = vmatprep.mubr.f32.mxu0 0.0
  %458 = vmatmul.mubr.f32.gmra.mxu0 %v321
  %v459 = vpop.f32.mrf.mxu0
  %v460 = vadd.f32 0.0, %v459
  %v461 = vpop.f32.mrf.mxu0
  %462 = vmatprep.mubr.f32.mxu0 0.0
  %463 = vmatmul.mubr.f32.gmra.mxu0 %v322
  %v464 = vpop.f32.mrf.mxu0
  %v465 = vadd.f32 0.0, %v464
  %v466 = vpop.f32.mrf.mxu0
  %467 = vmatprep.mubr.f32.mxu0 0.0
  %468 = vmatmul.mubr.f32.gmra.mxu0 %v323
  %v469 = vpop.f32.mrf.mxu0
  %v470 = vadd.f32 0.0, %v469
  %v471 = vpop.f32.mrf.mxu0
  %472 = vmatprep.mubr.f32.mxu0 0.0
  %473 = vmatmul.mubr.f32.gmra.mxu0 %v324
  %v474 = vpop.f32.mrf.mxu0
  %v475 = vadd.f32 0.0, %v474
  %v476 = vpop.f32.mrf.mxu0
  %477 = vmatprep.mubr.f32.mxu0 0.0
  %478 = vmatmul.mubr.f32.gmra.mxu0 %v325
  %v479 = vpop.f32.mrf.mxu0
  %v480 = vadd.f32 0.0, %v479
  %v481 = vpop.f32.mrf.mxu0
  %482 = vmatprep.mubr.f32.mxu0 0.0
  %483 = vmatmul.mubr.f32.gmra.mxu0 %v326
  %v484 = vpop.f32.mrf.mxu0
  %v485 = vadd.f32 0.0, %v484
  %v486 = vpop.f32.mrf.mxu0
  %487 = vmatprep.mubr.f32.mxu0 0.0
  %488 = vmatmul.mubr.f32.gmra.mxu0 %v327
  %v489 = vpop.f32.mrf.mxu0
  %v490 = vadd.f32 0.0, %v489
  %v491 = vpop.f32.mrf.mxu0
  %492 = vmatprep.mubr.f32.mxu0 0.0
  %493 = vmatmul.mubr.f32.gmra.mxu0 %v328
  %v494 = vpop.f32.mrf.mxu0
  %v495 = vadd.f32 0.0, %v494
  %v496 = vpop.f32.mrf.mxu0
  %497 = vmatprep.mubr.f32.mxu0 0.0
  %498 = vmatmul.mubr.f32.gmra.mxu0 %v329
  %v499 = vpop.f32.mrf.mxu0
  %v500 = vadd.f32 0.0, %v499
  %v501 = vpop.f32.mrf.mxu0
  %502 = vmatprep.mubr.f32.mxu0 0.0
  %503 = vmatmul.mubr.f32.gmra.mxu0 %v330
  %v504 = vpop.f32.mrf.mxu0
  %v505 = vadd.f32 0.0, %v504
  %v506 = vpop.f32.mrf.mxu0
  %507 = vmatprep.mubr.f32.mxu0 0.0
  %508 = vmatmul.mubr.f32.gmra.mxu0 %v331
  %v509 = vpop.f32.mrf.mxu0
  %v510 = vadd.f32 0.0, %v509
  %v511 = vpop.f32.mrf.mxu0
  %512 = vmatprep.mubr.f32.mxu0 0.0
  %513 = vmatmul.mubr.f32.gmra.mxu0 %v332
  %v514 = vpop.f32.mrf.mxu0
  %v515 = vadd.f32 0.0, %v514
  %v516 = vpop.f32.mrf.mxu0
  %517 = vmatprep.mubr.f32.mxu0 0.0
  %518 = vmatmul.mubr.f32.gmra.mxu0 %v333
  %v519 = vpop.f32.mrf.mxu0
  %v520 = vadd.f32 0.0, %v519
  %v521 = vpop.f32.mrf.mxu0
  %522 = vmatprep.mubr.f32.mxu0 0.0
  %523 = vmatmul.mubr.f32.gmra.mxu0 %v334
  %v524 = vpop.f32.mrf.mxu0
  %v525 = vadd.f32 0.0, %v524
  %v526 = vpop.f32.mrf.mxu0
  %527 = vmatprep.mubr.f32.mxu0 0.0
  %528 = vmatmul.mubr.f32.gmra.mxu0 %v335
  %v529 = vpop.f32.mrf.mxu0
  %v530 = vadd.f32 0.0, %v529
  %v531 = vpop.f32.mrf.mxu0
  %532 = vmatprep.mubr.f32.mxu0 0.0
  %533 = vmatmul.mubr.f32.gmra.mxu0 %v336
  %v534 = vpop.f32.mrf.mxu0
  %v535 = vadd.f32 0.0, %v534
  %v536 = vpop.f32.mrf.mxu0
  %537 = vmatprep.mubr.f32.mxu0 0.0
  %538 = vmatmul.mubr.f32.gmra.mxu0 %v337
  %v539 = vpop.f32.mrf.mxu0
  %v540 = vadd.f32 0.0, %v539
  %v541 = vpop.f32.mrf.mxu0
  %542 = vmatprep.mubr.f32.mxu0 0.0
  %543 = vmatmul.mubr.f32.gmra.mxu0 %v338
  %v544 = vpop.f32.mrf.mxu0
  %v545 = vadd.f32 0.0, %v544
  %v546 = vpop.f32.mrf.mxu0
  %547 = vmatprep.mubr.f32.mxu0 0.0
  %548 = vmatmul.mubr.f32.gmra.mxu0 %v339
  %v549 = vpop.f32.mrf.mxu0
  %v550 = vadd.f32 0.0, %v549
  %v551 = vpop.f32.mrf.mxu0
  %552 = vmatprep.mubr.f32.mxu0 0.0
  %553 = vmatmul.mubr.f32.gmra.mxu0 %v340
  %v554 = vpop.f32.mrf.mxu0
  %v555 = vadd.f32 0.0, %v554
  %v556 = vpop.f32.mrf.mxu0
  %557 = vmatprep.mubr.f32.mxu0 0.0
  %558 = vmatmul.mubr.f32.gmra.mxu0 %v341
  %v559 = vpop.f32.mrf.mxu0
  %v560 = vadd.f32 0.0, %v559
  %v561 = vpop.f32.mrf.mxu0
  %562 = vmatprep.mubr.f32.mxu0 0.0
  %563 = vmatmul.mubr.f32.gmra.mxu0 %v342
  %v564 = vpop.f32.mrf.mxu0
  %v565 = vadd.f32 0.0, %v564
  %v566 = vpop.f32.mrf.mxu0
  %567 = vmatprep.mubr.f32.mxu0 0.0
  %568 = vmatmul.mubr.f32.gmra.mxu0 %v343
  %v569 = vpop.f32.mrf.mxu0
  %v570 = vadd.f32 0.0, %v569
  %v571 = vpop.f32.mrf.mxu0
  %572 = vmatprep.mubr.f32.mxu0 0.0
  %573 = vmatmul.mubr.f32.gmra.mxu0 %v344
  %v574 = vpop.f32.mrf.mxu0
  %v575 = vadd.f32 0.0, %v574
  %v576 = vpop.f32.mrf.mxu0
  %577 = vmatprep.mubr.f32.mxu0 0.0
  %578 = vmatmul.mubr.f32.gmra.mxu0 %v345
  %v579 = vpop.f32.mrf.mxu0
  %v580 = vadd.f32 0.0, %v579
  %v581 = vpop.f32.mrf.mxu0
  %582 = vmatprep.mubr.f32.mxu0 0.0
  %583 = vmatmul.mubr.f32.gmra.mxu0 %v346
  %v584 = vpop.f32.mrf.mxu0
  %v585 = vadd.f32 0.0, %v584
  %v586 = vpop.f32.mrf.mxu0
  %587 = vmatprep.mubr.f32.mxu0 0.0
  %588 = vmatmul.mubr.f32.gmra.mxu0 %v347
  %v589 = vpop.f32.mrf.mxu0
  %v590 = vadd.f32 0.0, %v589
  %v591 = vpop.f32.mrf.mxu0
  %592 = vdwg.mxu0
  %v593 = vmax.f32 %v133, %v415
  %v594 = vmax.f32 %v138, %v420
  %v595 = vmax.f32 %v143, %v425
  %v596 = vmax.f32 %v148, %v430
  %v597 = vmax.f32 %v153, %v435
  %v598 = vmax.f32 %v158, %v440
  %v599 = vmax.f32 %v163, %v445
  %v600 = vmax.f32 %v168, %v450
  %v601 = vmax.f32 %v173, %v455
  %v602 = vmax.f32 %v178, %v460
  %v603 = vmax.f32 %v183, %v465
  %v604 = vmax.f32 %v188, %v470
  %v605 = vmax.f32 %v193, %v475
  %v606 = vmax.f32 %v198, %v480
  %v607 = vmax.f32 %v203, %v485
  %v608 = vmax.f32 %v208, %v490
  %v609 = vmax.f32 %v213, %v495
  %v610 = vmax.f32 %v218, %v500
  %v611 = vmax.f32 %v223, %v505
  %v612 = vmax.f32 %v228, %v510
  %v613 = vmax.f32 %v233, %v515
  %v614 = vmax.f32 %v238, %v520
  %v615 = vmax.f32 %v243, %v525
  %v616 = vmax.f32 %v248, %v530
  %v617 = vmax.f32 %v253, %v535
  %v618 = vmax.f32 %v258, %v540
  %v619 = vmax.f32 %v263, %v545
  %v620 = vmax.f32 %v268, %v550
  %v621 = vmax.f32 %v273, %v555
  %v622 = vmax.f32 %v278, %v560
  %v623 = vmax.f32 %v283, %v565
  %v624 = vmax.f32 %v288, %v570
  %v625 = vmax.f32 %v293, %v575
  %v626 = vmax.f32 %v298, %v580
  %v627 = vmax.f32 %v303, %v585
  %v628 = vmax.f32 %v308, %v590
  %s629 = scalar_lea.vmem %s0, 576
  %v630 = vld [vmem:[%s629] sm:$0xff]
  %v631 = vld [vmem:[%s629 + $0x8] sm:$0xff]
  %v632 = vld [vmem:[%s629 + $0x10] sm:$0xff]
  %v633 = vld [vmem:[%s629 + $0x18] sm:$0xff]
  %v634 = vld [vmem:[%s629 + $0x20] sm:$0xff]
  %v635 = vld [vmem:[%s629 + $0x28] sm:$0xff]
  %v636 = vld [vmem:[%s629 + $0x30] sm:$0xff]
  %v637 = vld [vmem:[%s629 + $0x38] sm:$0xff]
  %v638 = vld [vmem:[%s629 + $0x40] sm:$0xff]
  %v639 = vld [vmem:[%s629 + $0x48] sm:$0xff]
  %v640 = vld [vmem:[%s629 + $0x50] sm:$0xff]
  %v641 = vld [vmem:[%s629 + $0x58] sm:$0xff]
  %v642 = vld [vmem:[%s629 + $0x60] sm:$0xff]
  %v643 = vld [vmem:[%s629 + $0x68] sm:$0xff]
  %v644 = vld [vmem:[%s629 + $0x70] sm:$0xff]
  %v645 = vld [vmem:[%s629 + $0x78] sm:$0xff]
  %v646 = vld [vmem:[%s629 + $0x80] sm:$0xff]
  %v647 = vld [vmem:[%s629 + $0x88] sm:$0xff]
  %v648 = vld [vmem:[%s629 + $0x90] sm:$0xff]
  %v649 = vld [vmem:[%s629 + $0x98] sm:$0xff]
  %v650 = vld [vmem:[%s629 + $0xa0] sm:$0xff]
  %v651 = vld [vmem:[%s629 + $0xa8] sm:$0xff]
  %v652 = vld [vmem:[%s629 + $0xb0] sm:$0xff]
  %v653 = vld [vmem:[%s629 + $0xb8] sm:$0xff]
  %v654 = vld [vmem:[%s629 + $0xc0] sm:$0xff]
  %v655 = vld [vmem:[%s629 + $0xc8] sm:$0xff]
  %v656 = vld [vmem:[%s629 + $0xd0] sm:$0xff]
  %v657 = vld [vmem:[%s629 + $0xd8] sm:$0xff]
  %v658 = vld [vmem:[%s629 + $0xe0] sm:$0xff]
  %v659 = vld [vmem:[%s629 + $0xe8] sm:$0xff]
  %v660 = vld [vmem:[%s629 + $0xf0] sm:$0xff]
  %v661 = vld [vmem:[%s629 + $0xf8] sm:$0xff]
  %v662 = vld [vmem:[%s629 + $0x100] sm:$0xff]
  %v663 = vld [vmem:[%s629 + $0x108] sm:$0xff]
  %v664 = vld [vmem:[%s629 + $0x110] sm:$0xff]
  %v665 = vld [vmem:[%s629 + $0x118] sm:$0xff]
  %666 = vmatprep.subr.mxu0 0.0
  %667 = vmatpush1.msra.mxu0 %v29
  %668 = vmatprep.subr.mxu0 0.0
  %669 = vmatpush1.msra.mxu0 %v28
  %670 = vmatprep.subr.mxu0 0.0
  %671 = vmatpush1.msra.mxu0 %v27
  %672 = vmatprep.subr.mxu0 0.0
  %673 = vmatpush1.msra.mxu0 %v26
  %674 = vmatprep.subr.mxu0 0.0
  %675 = vmatpush1.msra.mxu0 %v25
  %676 = vmatprep.subr.mxu0 0.0
  %677 = vmatpush1.msra.mxu0 %v24
  %678 = vmatprep.subr.mxu0 0.0
  %679 = vmatpush1.msra.mxu0 %v23
  %680 = vmatprep.subr.mxu0 0.0
  %681 = vmatpush1.msra.mxu0 %v22
  %682 = vmatprep.subr.mxu0 0.0
  %683 = vmatpush1.msra.mxu0 %v21
  %684 = vmatprep.subr.mxu0 0.0
  %685 = vmatpush1.msra.mxu0 %v20
  %686 = vmatprep.subr.mxu0 0.0
  %687 = vmatpush1.msra.mxu0 %v19
  %688 = vmatprep.subr.mxu0 0.0
  %689 = vmatpush1.msra.mxu0 %v18
  %690 = vmatprep.subr.mxu0 0.0
  %691 = vmatpush1.msra.mxu0 %v17
  %692 = vmatprep.subr.mxu0 0.0
  %693 = vmatpush1.msra.mxu0 %v16
  %694 = vmatprep.subr.mxu0 0.0
  %695 = vmatpush1.msra.mxu0 %v15
  %696 = vmatprep.subr.mxu0 0.0
  %697 = vmatpush1.msra.mxu0 %v14
  %698 = vmatprep.subr.mxu0 0.0
  %699 = vmatpush2.msra.mxu0 0.0
  %700 = vmatprep.subr.mxu0 0.0
  %701 = vmatpush2.msra.mxu0 0.0
  %702 = vmatprep.subr.mxu0 0.0
  %703 = vmatpush2.msra.mxu0 0.0
  %704 = vmatprep.subr.mxu0 0.0
  %705 = vmatpush2.msra.mxu0 0.0
  %706 = vmatprep.subr.mxu0 0.0
  %707 = vmatpush2.msra.mxu0 0.0
  %708 = vmatprep.subr.mxu0 0.0
  %709 = vmatpush2.msra.mxu0 0.0
  %710 = vmatprep.subr.mxu0 0.0
  %711 = vmatpush2.msra.mxu0 0.0
  %712 = vmatprep.subr.mxu0 0.0
  %713 = vmatpush2.msra.mxu0 0.0
  %714 = vmatprep.subr.mxu0 0.0
  %715 = vmatpush2.msra.mxu0 0.0
  %716 = vmatprep.subr.mxu0 0.0
  %717 = vmatpush2.msra.mxu0 0.0
  %718 = vmatprep.subr.mxu0 0.0
  %719 = vmatpush2.msra.mxu0 0.0
  %720 = vmatprep.subr.mxu0 0.0
  %721 = vmatpush2.msra.mxu0 0.0
  %722 = vmatprep.subr.mxu0 0.0
  %723 = vmatpush2.msra.mxu0 0.0
  %724 = vmatprep.subr.mxu0 0.0
  %725 = vmatpush2.msra.mxu0 0.0
  %726 = vmatprep.subr.mxu0 0.0
  %727 = vmatpush2.msra.mxu0 0.0
  %728 = vmatprep.subr.mxu0 0.0
  %729 = vmatpush2.msra.mxu0 0.0
  %730 = vmatprep.mubr.f32.mxu0 0.0
  %731 = vmatmul.mubr.f32.gmra.mxu0 %v630
  %v732 = vpop.f32.mrf.mxu0
  %v733 = vadd.f32 0.0, %v732
  %v734 = vpop.f32.mrf.mxu0
  %735 = vmatprep.mubr.f32.mxu0 0.0
  %736 = vmatmul.mubr.f32.gmra.mxu0 %v631
  %v737 = vpop.f32.mrf.mxu0
  %v738 = vadd.f32 0.0, %v737
  %v739 = vpop.f32.mrf.mxu0
  %740 = vmatprep.mubr.f32.mxu0 0.0
  %741 = vmatmul.mubr.f32.gmra.mxu0 %v632
  %v742 = vpop.f32.mrf.mxu0
  %v743 = vadd.f32 0.0, %v742
  %v744 = vpop.f32.mrf.mxu0
  %745 = vmatprep.mubr.f32.mxu0 0.0
  %746 = vmatmul.mubr.f32.gmra.mxu0 %v633
  %v747 = vpop.f32.mrf.mxu0
  %v748 = vadd.f32 0.0, %v747
  %v749 = vpop.f32.mrf.mxu0
  %750 = vmatprep.mubr.f32.mxu0 0.0
  %751 = vmatmul.mubr.f32.gmra.mxu0 %v634
  %v752 = vpop.f32.mrf.mxu0
  %v753 = vadd.f32 0.0, %v752
  %v754 = vpop.f32.mrf.mxu0
  %755 = vmatprep.mubr.f32.mxu0 0.0
  %756 = vmatmul.mubr.f32.gmra.mxu0 %v635
  %v757 = vpop.f32.mrf.mxu0
  %v758 = vadd.f32 0.0, %v757
  %v759 = vpop.f32.mrf.mxu0
  %760 = vmatprep.mubr.f32.mxu0 0.0
  %761 = vmatmul.mubr.f32.gmra.mxu0 %v636
  %v762 = vpop.f32.mrf.mxu0
  %v763 = vadd.f32 0.0, %v762
  %v764 = vpop.f32.mrf.mxu0
  %765 = vmatprep.mubr.f32.mxu0 0.0
  %766 = vmatmul.mubr.f32.gmra.mxu0 %v637
  %v767 = vpop.f32.mrf.mxu0
  %v768 = vadd.f32 0.0, %v767
  %v769 = vpop.f32.mrf.mxu0
  %770 = vmatprep.mubr.f32.mxu0 0.0
  %771 = vmatmul.mubr.f32.gmra.mxu0 %v638
  %v772 = vpop.f32.mrf.mxu0
  %v773 = vadd.f32 0.0, %v772
  %v774 = vpop.f32.mrf.mxu0
  %775 = vmatprep.mubr.f32.mxu0 0.0
  %776 = vmatmul.mubr.f32.gmra.mxu0 %v639
  %v777 = vpop.f32.mrf.mxu0
  %v778 = vadd.f32 0.0, %v777
  %v779 = vpop.f32.mrf.mxu0
  %780 = vmatprep.mubr.f32.mxu0 0.0
  %781 = vmatmul.mubr.f32.gmra.mxu0 %v640
  %v782 = vpop.f32.mrf.mxu0
  %v783 = vadd.f32 0.0, %v782
  %v784 = vpop.f32.mrf.mxu0
  %785 = vmatprep.mubr.f32.mxu0 0.0
  %786 = vmatmul.mubr.f32.gmra.mxu0 %v641
  %v787 = vpop.f32.mrf.mxu0
  %v788 = vadd.f32 0.0, %v787
  %v789 = vpop.f32.mrf.mxu0
  %790 = vmatprep.mubr.f32.mxu0 0.0
  %791 = vmatmul.mubr.f32.gmra.mxu0 %v642
  %v792 = vpop.f32.mrf.mxu0
  %v793 = vadd.f32 0.0, %v792
  %v794 = vpop.f32.mrf.mxu0
  %795 = vmatprep.mubr.f32.mxu0 0.0
  %796 = vmatmul.mubr.f32.gmra.mxu0 %v643
  %v797 = vpop.f32.mrf.mxu0
  %v798 = vadd.f32 0.0, %v797
  %v799 = vpop.f32.mrf.mxu0
  %800 = vmatprep.mubr.f32.mxu0 0.0
  %801 = vmatmul.mubr.f32.gmra.mxu0 %v644
  %v802 = vpop.f32.mrf.mxu0
  %v803 = vadd.f32 0.0, %v802
  %v804 = vpop.f32.mrf.mxu0
  %805 = vmatprep.mubr.f32.mxu0 0.0
  %806 = vmatmul.mubr.f32.gmra.mxu0 %v645
  %v807 = vpop.f32.mrf.mxu0
  %v808 = vadd.f32 0.0, %v807
  %v809 = vpop.f32.mrf.mxu0
  %810 = vmatprep.mubr.f32.mxu0 0.0
  %811 = vmatmul.mubr.f32.gmra.mxu0 %v646
  %v812 = vpop.f32.mrf.mxu0
  %v813 = vadd.f32 0.0, %v812
  %v814 = vpop.f32.mrf.mxu0
  %815 = vmatprep.mubr.f32.mxu0 0.0
  %816 = vmatmul.mubr.f32.gmra.mxu0 %v647
  %v817 = vpop.f32.mrf.mxu0
  %v818 = vadd.f32 0.0, %v817
  %v819 = vpop.f32.mrf.mxu0
  %820 = vmatprep.mubr.f32.mxu0 0.0
  %821 = vmatmul.mubr.f32.gmra.mxu0 %v648
  %v822 = vpop.f32.mrf.mxu0
  %v823 = vadd.f32 0.0, %v822
  %v824 = vpop.f32.mrf.mxu0
  %825 = vmatprep.mubr.f32.mxu0 0.0
  %826 = vmatmul.mubr.f32.gmra.mxu0 %v649
  %v827 = vpop.f32.mrf.mxu0
  %v828 = vadd.f32 0.0, %v827
  %v829 = vpop.f32.mrf.mxu0
  %830 = vmatprep.mubr.f32.mxu0 0.0
  %831 = vmatmul.mubr.f32.gmra.mxu0 %v650
  %v832 = vpop.f32.mrf.mxu0
  %v833 = vadd.f32 0.0, %v832
  %v834 = vpop.f32.mrf.mxu0
  %835 = vmatprep.mubr.f32.mxu0 0.0
  %836 = vmatmul.mubr.f32.gmra.mxu0 %v651
  %v837 = vpop.f32.mrf.mxu0
  %v838 = vadd.f32 0.0, %v837
  %v839 = vpop.f32.mrf.mxu0
  %840 = vmatprep.mubr.f32.mxu0 0.0
  %841 = vmatmul.mubr.f32.gmra.mxu0 %v652
  %v842 = vpop.f32.mrf.mxu0
  %v843 = vadd.f32 0.0, %v842
  %v844 = vpop.f32.mrf.mxu0
  %845 = vmatprep.mubr.f32.mxu0 0.0
  %846 = vmatmul.mubr.f32.gmra.mxu0 %v653
  %v847 = vpop.f32.mrf.mxu0
  %v848 = vadd.f32 0.0, %v847
  %v849 = vpop.f32.mrf.mxu0
  %850 = vmatprep.mubr.f32.mxu0 0.0
  %851 = vmatmul.mubr.f32.gmra.mxu0 %v654
  %v852 = vpop.f32.mrf.mxu0
  %v853 = vadd.f32 0.0, %v852
  %v854 = vpop.f32.mrf.mxu0
  %855 = vmatprep.mubr.f32.mxu0 0.0
  %856 = vmatmul.mubr.f32.gmra.mxu0 %v655
  %v857 = vpop.f32.mrf.mxu0
  %v858 = vadd.f32 0.0, %v857
  %v859 = vpop.f32.mrf.mxu0
  %860 = vmatprep.mubr.f32.mxu0 0.0
  %861 = vmatmul.mubr.f32.gmra.mxu0 %v656
  %v862 = vpop.f32.mrf.mxu0
  %v863 = vadd.f32 0.0, %v862
  %v864 = vpop.f32.mrf.mxu0
  %865 = vmatprep.mubr.f32.mxu0 0.0
  %866 = vmatmul.mubr.f32.gmra.mxu0 %v657
  %v867 = vpop.f32.mrf.mxu0
  %v868 = vadd.f32 0.0, %v867
  %v869 = vpop.f32.mrf.mxu0
  %870 = vmatprep.mubr.f32.mxu0 0.0
  %871 = vmatmul.mubr.f32.gmra.mxu0 %v658
  %v872 = vpop.f32.mrf.mxu0
  %v873 = vadd.f32 0.0, %v872
  %v874 = vpop.f32.mrf.mxu0
  %875 = vmatprep.mubr.f32.mxu0 0.0
  %876 = vmatmul.mubr.f32.gmra.mxu0 %v659
  %v877 = vpop.f32.mrf.mxu0
  %v878 = vadd.f32 0.0, %v877
  %v879 = vpop.f32.mrf.mxu0
  %880 = vmatprep.mubr.f32.mxu0 0.0
  %881 = vmatmul.mubr.f32.gmra.mxu0 %v660
  %v882 = vpop.f32.mrf.mxu0
  %v883 = vadd.f32 0.0, %v882
  %v884 = vpop.f32.mrf.mxu0
  %885 = vmatprep.mubr.f32.mxu0 0.0
  %886 = vmatmul.mubr.f32.gmra.mxu0 %v661
  %v887 = vpop.f32.mrf.mxu0
  %v888 = vadd.f32 0.0, %v887
  %v889 = vpop.f32.mrf.mxu0
  %890 = vmatprep.mubr.f32.mxu0 0.0
  %891 = vmatmul.mubr.f32.gmra.mxu0 %v662
  %v892 = vpop.f32.mrf.mxu0
  %v893 = vadd.f32 0.0, %v892
  %v894 = vpop.f32.mrf.mxu0
  %895 = vmatprep.mubr.f32.mxu0 0.0
  %896 = vmatmul.mubr.f32.gmra.mxu0 %v663
  %v897 = vpop.f32.mrf.mxu0
  %v898 = vadd.f32 0.0, %v897
  %v899 = vpop.f32.mrf.mxu0
  %900 = vmatprep.mubr.f32.mxu0 0.0
  %901 = vmatmul.mubr.f32.gmra.mxu0 %v664
  %v902 = vpop.f32.mrf.mxu0
  %v903 = vadd.f32 0.0, %v902
  %v904 = vpop.f32.mrf.mxu0
  %905 = vmatprep.mubr.f32.mxu0 0.0
  %906 = vmatmul.mubr.f32.gmra.mxu0 %v665
  %v907 = vpop.f32.mrf.mxu0
  %v908 = vadd.f32 0.0, %v907
  %v909 = vpop.f32.mrf.mxu0
  %910 = vdwg.mxu0
  %v911 = vmax.f32 %v593, %v733
  %v912 = vmax.f32 %v594, %v738
  %v913 = vmax.f32 %v595, %v743
  %v914 = vmax.f32 %v596, %v748
  %v915 = vmax.f32 %v597, %v753
  %v916 = vmax.f32 %v598, %v758
  %v917 = vmax.f32 %v599, %v763
  %v918 = vmax.f32 %v600, %v768
  %v919 = vmax.f32 %v601, %v773
  %v920 = vmax.f32 %v602, %v778
  %v921 = vmax.f32 %v603, %v783
  %v922 = vmax.f32 %v604, %v788
  %v923 = vmax.f32 %v605, %v793
  %v924 = vmax.f32 %v606, %v798
  %v925 = vmax.f32 %v607, %v803
  %v926 = vmax.f32 %v608, %v808
  %v927 = vmax.f32 %v609, %v813
  %v928 = vmax.f32 %v610, %v818
  %v929 = vmax.f32 %v611, %v823
  %v930 = vmax.f32 %v612, %v828
  %v931 = vmax.f32 %v613, %v833
  %v932 = vmax.f32 %v614, %v838
  %v933 = vmax.f32 %v615, %v843
  %v934 = vmax.f32 %v616, %v848
  %v935 = vmax.f32 %v617, %v853
  %v936 = vmax.f32 %v618, %v858
  %v937 = vmax.f32 %v619, %v863
  %v938 = vmax.f32 %v620, %v868
  %v939 = vmax.f32 %v621, %v873
  %v940 = vmax.f32 %v622, %v878
  %v941 = vmax.f32 %v623, %v883
  %v942 = vmax.f32 %v624, %v888
  %v943 = vmax.f32 %v625, %v893
  %v944 = vmax.f32 %v626, %v898
  %v945 = vmax.f32 %v627, %v903
  %v946 = vmax.f32 %v628, %v908
  %s947 = scalar_lea.vmem %s0, 864
  %v948 = vld [vmem:[%s947] sm:$0xff]
  %v949 = vld [vmem:[%s947 + $0x8] sm:$0xff]
  %v950 = vld [vmem:[%s947 + $0x10] sm:$0xff]
  %v951 = vld [vmem:[%s947 + $0x18] sm:$0xff]
  %v952 = vld [vmem:[%s947 + $0x20] sm:$0xff]
  %v953 = vld [vmem:[%s947 + $0x28] sm:$0xff]
  %v954 = vld [vmem:[%s947 + $0x30] sm:$0xff]
  %v955 = vld [vmem:[%s947 + $0x38] sm:$0xff]
  %v956 = vld [vmem:[%s947 + $0x40] sm:$0xff]
  %v957 = vld [vmem:[%s947 + $0x48] sm:$0xff]
  %v958 = vld [vmem:[%s947 + $0x50] sm:$0xff]
  %v959 = vld [vmem:[%s947 + $0x58] sm:$0xff]
  %v960 = vld [vmem:[%s947 + $0x60] sm:$0xff]
  %v961 = vld [vmem:[%s947 + $0x68] sm:$0xff]
  %v962 = vld [vmem:[%s947 + $0x70] sm:$0xff]
  %v963 = vld [vmem:[%s947 + $0x78] sm:$0xff]
  %v964 = vld [vmem:[%s947 + $0x80] sm:$0xff]
  %v965 = vld [vmem:[%s947 + $0x88] sm:$0xff]
  %v966 = vld [vmem:[%s947 + $0x90] sm:$0xff]
  %v967 = vld [vmem:[%s947 + $0x98] sm:$0xff]
  %v968 = vld [vmem:[%s947 + $0xa0] sm:$0xff]
  %v969 = vld [vmem:[%s947 + $0xa8] sm:$0xff]
  %v970 = vld [vmem:[%s947 + $0xb0] sm:$0xff]
  %v971 = vld [vmem:[%s947 + $0xb8] sm:$0xff]
  %v972 = vld [vmem:[%s947 + $0xc0] sm:$0xff]
  %v973 = vld [vmem:[%s947 + $0xc8] sm:$0xff]
  %v974 = vld [vmem:[%s947 + $0xd0] sm:$0xff]
  %v975 = vld [vmem:[%s947 + $0xd8] sm:$0xff]
  %v976 = vld [vmem:[%s947 + $0xe0] sm:$0xff]
  %v977 = vld [vmem:[%s947 + $0xe8] sm:$0xff]
  %v978 = vld [vmem:[%s947 + $0xf0] sm:$0xff]
  %v979 = vld [vmem:[%s947 + $0xf8] sm:$0xff]
  %v980 = vld [vmem:[%s947 + $0x100] sm:$0xff]
  %v981 = vld [vmem:[%s947 + $0x108] sm:$0xff]
  %v982 = vld [vmem:[%s947 + $0x110] sm:$0xff]
  %v983 = vld [vmem:[%s947 + $0x118] sm:$0xff]
  %984 = vmatprep.subr.mxu0 0.0
  %985 = vmatpush1.msra.mxu0 %v29
  %986 = vmatprep.subr.mxu0 0.0
  %987 = vmatpush1.msra.mxu0 %v28
  %988 = vmatprep.subr.mxu0 0.0
  %989 = vmatpush1.msra.mxu0 %v27
  %990 = vmatprep.subr.mxu0 0.0
  %991 = vmatpush1.msra.mxu0 %v26
  %992 = vmatprep.subr.mxu0 0.0
  %993 = vmatpush1.msra.mxu0 %v25
  %994 = vmatprep.subr.mxu0 0.0
  %995 = vmatpush1.msra.mxu0 %v24
  %996 = vmatprep.subr.mxu0 0.0
  %997 = vmatpush1.msra.mxu0 %v23
  %998 = vmatprep.subr.mxu0 0.0
  %999 = vmatpush1.msra.mxu0 %v22
  %1000 = vmatprep.subr.mxu0 0.0
  %1001 = vmatpush1.msra.mxu0 %v21
  %1002 = vmatprep.subr.mxu0 0.0
  %1003 = vmatpush1.msra.mxu0 %v20
  %1004 = vmatprep.subr.mxu0 0.0
  %1005 = vmatpush1.msra.mxu0 %v19
  %1006 = vmatprep.subr.mxu0 0.0
  %1007 = vmatpush1.msra.mxu0 %v18
  %1008 = vmatprep.subr.mxu0 0.0
  %1009 = vmatpush1.msra.mxu0 %v17
  %1010 = vmatprep.subr.mxu0 0.0
  %1011 = vmatpush1.msra.mxu0 %v16
  %1012 = vmatprep.subr.mxu0 0.0
  %1013 = vmatpush1.msra.mxu0 %v15
  %1014 = vmatprep.subr.mxu0 0.0
  %1015 = vmatpush1.msra.mxu0 %v14
  %1016 = vmatprep.subr.mxu0 0.0
  %1017 = vmatpush2.msra.mxu0 0.0
  %1018 = vmatprep.subr.mxu0 0.0
  %1019 = vmatpush2.msra.mxu0 0.0
  %1020 = vmatprep.subr.mxu0 0.0
  %1021 = vmatpush2.msra.mxu0 0.0
  %1022 = vmatprep.subr.mxu0 0.0
  %1023 = vmatpush2.msra.mxu0 0.0
  %1024 = vmatprep.subr.mxu0 0.0
  %1025 = vmatpush2.msra.mxu0 0.0
  %1026 = vmatprep.subr.mxu0 0.0
  %1027 = vmatpush2.msra.mxu0 0.0
  %1028 = vmatprep.subr.mxu0 0.0
  %1029 = vmatpush2.msra.mxu0 0.0
  %1030 = vmatprep.subr.mxu0 0.0
  %1031 = vmatpush2.msra.mxu0 0.0
  %1032 = vmatprep.subr.mxu0 0.0
  %1033 = vmatpush2.msra.mxu0 0.0
  %1034 = vmatprep.subr.mxu0 0.0
  %1035 = vmatpush2.msra.mxu0 0.0
  %1036 = vmatprep.subr.mxu0 0.0
  %1037 = vmatpush2.msra.mxu0 0.0
  %1038 = vmatprep.subr.mxu0 0.0
  %1039 = vmatpush2.msra.mxu0 0.0
  %1040 = vmatprep.subr.mxu0 0.0
  %1041 = vmatpush2.msra.mxu0 0.0
  %1042 = vmatprep.subr.mxu0 0.0
  %1043 = vmatpush2.msra.mxu0 0.0
  %1044 = vmatprep.subr.mxu0 0.0
  %1045 = vmatpush2.msra.mxu0 0.0
  %1046 = vmatprep.subr.mxu0 0.0
  %1047 = vmatpush2.msra.mxu0 0.0
  %1048 = vmatprep.mubr.f32.mxu0 0.0
  %1049 = vmatmul.mubr.f32.gmra.mxu0 %v948
  %v1050 = vpop.f32.mrf.mxu0
  %v1051 = vadd.f32 0.0, %v1050
  %v1052 = vpop.f32.mrf.mxu0
  %1053 = vmatprep.mubr.f32.mxu0 0.0
  %1054 = vmatmul.mubr.f32.gmra.mxu0 %v949
  %v1055 = vpop.f32.mrf.mxu0
  %v1056 = vadd.f32 0.0, %v1055
  %v1057 = vpop.f32.mrf.mxu0
  %1058 = vmatprep.mubr.f32.mxu0 0.0
  %1059 = vmatmul.mubr.f32.gmra.mxu0 %v950
  %v1060 = vpop.f32.mrf.mxu0
  %v1061 = vadd.f32 0.0, %v1060
  %v1062 = vpop.f32.mrf.mxu0
  %1063 = vmatprep.mubr.f32.mxu0 0.0
  %1064 = vmatmul.mubr.f32.gmra.mxu0 %v951
  %v1065 = vpop.f32.mrf.mxu0
  %v1066 = vadd.f32 0.0, %v1065
  %v1067 = vpop.f32.mrf.mxu0
  %1068 = vmatprep.mubr.f32.mxu0 0.0
  %1069 = vmatmul.mubr.f32.gmra.mxu0 %v952
  %v1070 = vpop.f32.mrf.mxu0
  %v1071 = vadd.f32 0.0, %v1070
  %v1072 = vpop.f32.mrf.mxu0
  %1073 = vmatprep.mubr.f32.mxu0 0.0
  %1074 = vmatmul.mubr.f32.gmra.mxu0 %v953
  %v1075 = vpop.f32.mrf.mxu0
  %v1076 = vadd.f32 0.0, %v1075
  %v1077 = vpop.f32.mrf.mxu0
  %1078 = vmatprep.mubr.f32.mxu0 0.0
  %1079 = vmatmul.mubr.f32.gmra.mxu0 %v954
  %v1080 = vpop.f32.mrf.mxu0
  %v1081 = vadd.f32 0.0, %v1080
  %v1082 = vpop.f32.mrf.mxu0
  %1083 = vmatprep.mubr.f32.mxu0 0.0
  %1084 = vmatmul.mubr.f32.gmra.mxu0 %v955
  %v1085 = vpop.f32.mrf.mxu0
  %v1086 = vadd.f32 0.0, %v1085
  %v1087 = vpop.f32.mrf.mxu0
  %1088 = vmatprep.mubr.f32.mxu0 0.0
  %1089 = vmatmul.mubr.f32.gmra.mxu0 %v956
  %v1090 = vpop.f32.mrf.mxu0
  %v1091 = vadd.f32 0.0, %v1090
  %v1092 = vpop.f32.mrf.mxu0
  %1093 = vmatprep.mubr.f32.mxu0 0.0
  %1094 = vmatmul.mubr.f32.gmra.mxu0 %v957
  %v1095 = vpop.f32.mrf.mxu0
  %v1096 = vadd.f32 0.0, %v1095
  %v1097 = vpop.f32.mrf.mxu0
  %1098 = vmatprep.mubr.f32.mxu0 0.0
  %1099 = vmatmul.mubr.f32.gmra.mxu0 %v958
  %v1100 = vpop.f32.mrf.mxu0
  %v1101 = vadd.f32 0.0, %v1100
  %v1102 = vpop.f32.mrf.mxu0
  %1103 = vmatprep.mubr.f32.mxu0 0.0
  %1104 = vmatmul.mubr.f32.gmra.mxu0 %v959
  %v1105 = vpop.f32.mrf.mxu0
  %v1106 = vadd.f32 0.0, %v1105
  %v1107 = vpop.f32.mrf.mxu0
  %1108 = vmatprep.mubr.f32.mxu0 0.0
  %1109 = vmatmul.mubr.f32.gmra.mxu0 %v960
  %v1110 = vpop.f32.mrf.mxu0
  %v1111 = vadd.f32 0.0, %v1110
  %v1112 = vpop.f32.mrf.mxu0
  %1113 = vmatprep.mubr.f32.mxu0 0.0
  %1114 = vmatmul.mubr.f32.gmra.mxu0 %v961
  %v1115 = vpop.f32.mrf.mxu0
  %v1116 = vadd.f32 0.0, %v1115
  %v1117 = vpop.f32.mrf.mxu0
  %1118 = vmatprep.mubr.f32.mxu0 0.0
  %1119 = vmatmul.mubr.f32.gmra.mxu0 %v962
  %v1120 = vpop.f32.mrf.mxu0
  %v1121 = vadd.f32 0.0, %v1120
  %v1122 = vpop.f32.mrf.mxu0
  %1123 = vmatprep.mubr.f32.mxu0 0.0
  %1124 = vmatmul.mubr.f32.gmra.mxu0 %v963
  %v1125 = vpop.f32.mrf.mxu0
  %v1126 = vadd.f32 0.0, %v1125
  %v1127 = vpop.f32.mrf.mxu0
  %1128 = vmatprep.mubr.f32.mxu0 0.0
  %1129 = vmatmul.mubr.f32.gmra.mxu0 %v964
  %v1130 = vpop.f32.mrf.mxu0
  %v1131 = vadd.f32 0.0, %v1130
  %v1132 = vpop.f32.mrf.mxu0
  %1133 = vmatprep.mubr.f32.mxu0 0.0
  %1134 = vmatmul.mubr.f32.gmra.mxu0 %v965
  %v1135 = vpop.f32.mrf.mxu0
  %v1136 = vadd.f32 0.0, %v1135
  %v1137 = vpop.f32.mrf.mxu0
  %1138 = vmatprep.mubr.f32.mxu0 0.0
  %1139 = vmatmul.mubr.f32.gmra.mxu0 %v966
  %v1140 = vpop.f32.mrf.mxu0
  %v1141 = vadd.f32 0.0, %v1140
  %v1142 = vpop.f32.mrf.mxu0
  %1143 = vmatprep.mubr.f32.mxu0 0.0
  %1144 = vmatmul.mubr.f32.gmra.mxu0 %v967
  %v1145 = vpop.f32.mrf.mxu0
  %v1146 = vadd.f32 0.0, %v1145
  %v1147 = vpop.f32.mrf.mxu0
  %1148 = vmatprep.mubr.f32.mxu0 0.0
  %1149 = vmatmul.mubr.f32.gmra.mxu0 %v968
  %v1150 = vpop.f32.mrf.mxu0
  %v1151 = vadd.f32 0.0, %v1150
  %v1152 = vpop.f32.mrf.mxu0
  %1153 = vmatprep.mubr.f32.mxu0 0.0
  %1154 = vmatmul.mubr.f32.gmra.mxu0 %v969
  %v1155 = vpop.f32.mrf.mxu0
  %v1156 = vadd.f32 0.0, %v1155
  %v1157 = vpop.f32.mrf.mxu0
  %1158 = vmatprep.mubr.f32.mxu0 0.0
  %1159 = vmatmul.mubr.f32.gmra.mxu0 %v970
  %v1160 = vpop.f32.mrf.mxu0
  %v1161 = vadd.f32 0.0, %v1160
  %v1162 = vpop.f32.mrf.mxu0
  %1163 = vmatprep.mubr.f32.mxu0 0.0
  %1164 = vmatmul.mubr.f32.gmra.mxu0 %v971
  %v1165 = vpop.f32.mrf.mxu0
  %v1166 = vadd.f32 0.0, %v1165
  %v1167 = vpop.f32.mrf.mxu0
  %1168 = vmatprep.mubr.f32.mxu0 0.0
  %1169 = vmatmul.mubr.f32.gmra.mxu0 %v972
  %v1170 = vpop.f32.mrf.mxu0
  %v1171 = vadd.f32 0.0, %v1170
  %v1172 = vpop.f32.mrf.mxu0
  %1173 = vmatprep.mubr.f32.mxu0 0.0
  %1174 = vmatmul.mubr.f32.gmra.mxu0 %v973
  %v1175 = vpop.f32.mrf.mxu0
  %v1176 = vadd.f32 0.0, %v1175
  %v1177 = vpop.f32.mrf.mxu0
  %1178 = vmatprep.mubr.f32.mxu0 0.0
  %1179 = vmatmul.mubr.f32.gmra.mxu0 %v974
  %v1180 = vpop.f32.mrf.mxu0
  %v1181 = vadd.f32 0.0, %v1180
  %v1182 = vpop.f32.mrf.mxu0
  %1183 = vmatprep.mubr.f32.mxu0 0.0
  %1184 = vmatmul.mubr.f32.gmra.mxu0 %v975
  %v1185 = vpop.f32.mrf.mxu0
  %v1186 = vadd.f32 0.0, %v1185
  %v1187 = vpop.f32.mrf.mxu0
  %1188 = vmatprep.mubr.f32.mxu0 0.0
  %1189 = vmatmul.mubr.f32.gmra.mxu0 %v976
  %v1190 = vpop.f32.mrf.mxu0
  %v1191 = vadd.f32 0.0, %v1190
  %v1192 = vpop.f32.mrf.mxu0
  %1193 = vmatprep.mubr.f32.mxu0 0.0
  %1194 = vmatmul.mubr.f32.gmra.mxu0 %v977
  %v1195 = vpop.f32.mrf.mxu0
  %v1196 = vadd.f32 0.0, %v1195
  %v1197 = vpop.f32.mrf.mxu0
  %1198 = vmatprep.mubr.f32.mxu0 0.0
  %1199 = vmatmul.mubr.f32.gmra.mxu0 %v978
  %v1200 = vpop.f32.mrf.mxu0
  %v1201 = vadd.f32 0.0, %v1200
  %v1202 = vpop.f32.mrf.mxu0
  %1203 = vmatprep.mubr.f32.mxu0 0.0
  %1204 = vmatmul.mubr.f32.gmra.mxu0 %v979
  %v1205 = vpop.f32.mrf.mxu0
  %v1206 = vadd.f32 0.0, %v1205
  %v1207 = vpop.f32.mrf.mxu0
  %1208 = vmatprep.mubr.f32.mxu0 0.0
  %1209 = vmatmul.mubr.f32.gmra.mxu0 %v980
  %v1210 = vpop.f32.mrf.mxu0
  %v1211 = vadd.f32 0.0, %v1210
  %v1212 = vpop.f32.mrf.mxu0
  %1213 = vmatprep.mubr.f32.mxu0 0.0
  %1214 = vmatmul.mubr.f32.gmra.mxu0 %v981
  %v1215 = vpop.f32.mrf.mxu0
  %v1216 = vadd.f32 0.0, %v1215
  %v1217 = vpop.f32.mrf.mxu0
  %1218 = vmatprep.mubr.f32.mxu0 0.0
  %1219 = vmatmul.mubr.f32.gmra.mxu0 %v982
  %v1220 = vpop.f32.mrf.mxu0
  %v1221 = vadd.f32 0.0, %v1220
  %v1222 = vpop.f32.mrf.mxu0
  %1223 = vmatprep.mubr.f32.mxu0 0.0
  %1224 = vmatmul.mubr.f32.gmra.mxu0 %v983
  %v1225 = vpop.f32.mrf.mxu0
  %v1226 = vadd.f32 0.0, %v1225
  %v1227 = vpop.f32.mrf.mxu0
  %1228 = vdwg.mxu0
  %v1229 = vmax.f32 %v911, %v1051
  %v1230 = vmax.f32 %v912, %v1056
  %v1231 = vmax.f32 %v913, %v1061
  %v1232 = vmax.f32 %v914, %v1066
  %v1233 = vmax.f32 %v915, %v1071
  %v1234 = vmax.f32 %v916, %v1076
  %v1235 = vmax.f32 %v917, %v1081
  %v1236 = vmax.f32 %v918, %v1086
  %v1237 = vmax.f32 %v919, %v1091
  %v1238 = vmax.f32 %v920, %v1096
  %v1239 = vmax.f32 %v921, %v1101
  %v1240 = vmax.f32 %v922, %v1106
  %v1241 = vmax.f32 %v923, %v1111
  %v1242 = vmax.f32 %v924, %v1116
  %v1243 = vmax.f32 %v925, %v1121
  %v1244 = vmax.f32 %v926, %v1126
  %v1245 = vmax.f32 %v927, %v1131
  %v1246 = vmax.f32 %v928, %v1136
  %v1247 = vmax.f32 %v929, %v1141
  %v1248 = vmax.f32 %v930, %v1146
  %v1249 = vmax.f32 %v931, %v1151
  %v1250 = vmax.f32 %v932, %v1156
  %v1251 = vmax.f32 %v933, %v1161
  %v1252 = vmax.f32 %v934, %v1166
  %v1253 = vmax.f32 %v935, %v1171
  %v1254 = vmax.f32 %v936, %v1176
  %v1255 = vmax.f32 %v937, %v1181
  %v1256 = vmax.f32 %v938, %v1186
  %v1257 = vmax.f32 %v939, %v1191
  %v1258 = vmax.f32 %v940, %v1196
  %v1259 = vmax.f32 %v941, %v1201
  %v1260 = vmax.f32 %v942, %v1206
  %v1261 = vmax.f32 %v943, %v1211
  %v1262 = vmax.f32 %v944, %v1216
  %v1263 = vmax.f32 %v945, %v1221
  %v1264 = vmax.f32 %v946, %v1226
  %v1265 = vld [vmem:[%s2] sm:$0x1]
  %v1267 = vlaneseq
  %v1268 = vshrl.u32 %v1267, 7
  %v1269 = vsub.s32 0, %v1268
  %v1270 = vrot.slane %v1265, %v1269
  %v1272 = vadd.f32 %v1229, %v1270
  %v1273 = vadd.f32 %v1230, %v1270
  %v1274 = vadd.f32 %v1231, %v1270
  %v1275 = vadd.f32 %v1232, %v1270
  %v1276 = vadd.f32 %v1233, %v1270
  %v1277 = vadd.f32 %v1234, %v1270
  %v1278 = vadd.f32 %v1235, %v1270
  %v1279 = vadd.f32 %v1236, %v1270
  %v1280 = vadd.f32 %v1237, %v1270
  %v1281 = vadd.f32 %v1238, %v1270
  %v1282 = vadd.f32 %v1239, %v1270
  %v1283 = vadd.f32 %v1240, %v1270
  %v1284 = vadd.f32 %v1241, %v1270
  %v1285 = vadd.f32 %v1242, %v1270
  %v1286 = vadd.f32 %v1243, %v1270
  %v1287 = vadd.f32 %v1244, %v1270
  %v1288 = vadd.f32 %v1245, %v1270
  %v1289 = vadd.f32 %v1246, %v1270
  %v1290 = vadd.f32 %v1247, %v1270
  %v1291 = vadd.f32 %v1248, %v1270
  %v1292 = vadd.f32 %v1249, %v1270
  %v1293 = vadd.f32 %v1250, %v1270
  %v1294 = vadd.f32 %v1251, %v1270
  %v1295 = vadd.f32 %v1252, %v1270
  %v1296 = vadd.f32 %v1253, %v1270
  %v1297 = vadd.f32 %v1254, %v1270
  %v1298 = vadd.f32 %v1255, %v1270
  %v1299 = vadd.f32 %v1256, %v1270
  %v1300 = vadd.f32 %v1257, %v1270
  %v1301 = vadd.f32 %v1258, %v1270
  %v1302 = vadd.f32 %v1259, %v1270
  %v1303 = vadd.f32 %v1260, %v1270
  %v1304 = vadd.f32 %v1261, %v1270
  %v1305 = vadd.f32 %v1262, %v1270
  %v1306 = vadd.f32 %v1263, %v1270
  %v1307 = vadd.f32 %v1264, %v1270
  %v1308 = vmax.f32 %v1272, 0.0
  %v1309 = vmax.f32 %v1273, 0.0
  %v1310 = vmax.f32 %v1274, 0.0
  %v1311 = vmax.f32 %v1275, 0.0
  %v1312 = vmax.f32 %v1276, 0.0
  %v1313 = vmax.f32 %v1277, 0.0
  %v1314 = vmax.f32 %v1278, 0.0
  %v1315 = vmax.f32 %v1279, 0.0
  %v1316 = vmax.f32 %v1280, 0.0
  %v1317 = vmax.f32 %v1281, 0.0
  %v1318 = vmax.f32 %v1282, 0.0
  %v1319 = vmax.f32 %v1283, 0.0
  %v1320 = vmax.f32 %v1284, 0.0
  %v1321 = vmax.f32 %v1285, 0.0
  %v1322 = vmax.f32 %v1286, 0.0
  %v1323 = vmax.f32 %v1287, 0.0
  %v1324 = vmax.f32 %v1288, 0.0
  %v1325 = vmax.f32 %v1289, 0.0
  %v1326 = vmax.f32 %v1290, 0.0
  %v1327 = vmax.f32 %v1291, 0.0
  %v1328 = vmax.f32 %v1292, 0.0
  %v1329 = vmax.f32 %v1293, 0.0
  %v1330 = vmax.f32 %v1294, 0.0
  %v1331 = vmax.f32 %v1295, 0.0
  %v1332 = vmax.f32 %v1296, 0.0
  %v1333 = vmax.f32 %v1297, 0.0
  %v1334 = vmax.f32 %v1298, 0.0
  %v1335 = vmax.f32 %v1299, 0.0
  %v1336 = vmax.f32 %v1300, 0.0
  %v1337 = vmax.f32 %v1301, 0.0
  %v1338 = vmax.f32 %v1302, 0.0
  %v1339 = vmax.f32 %v1303, 0.0
  %v1340 = vmax.f32 %v1304, 0.0
  %v1341 = vmax.f32 %v1305, 0.0
  %v1342 = vmax.f32 %v1306, 0.0
  %v1343 = vmax.f32 %v1307, 0.0
  %1344 = vst [vmem:[%s3] sm:$0xff] %v1308
  %1345 = vst [vmem:[%s3 + $0x8] sm:$0xff] %v1309
  %1346 = vst [vmem:[%s3 + $0x10] sm:$0xff] %v1310
  %1347 = vst [vmem:[%s3 + $0x18] sm:$0xff] %v1311
  %1348 = vst [vmem:[%s3 + $0x20] sm:$0xff] %v1312
  %1349 = vst [vmem:[%s3 + $0x28] sm:$0xff] %v1313
  %1350 = vst [vmem:[%s3 + $0x30] sm:$0xff] %v1314
  %1351 = vst [vmem:[%s3 + $0x38] sm:$0xff] %v1315
  %1352 = vst [vmem:[%s3 + $0x40] sm:$0xff] %v1316
  %1353 = vst [vmem:[%s3 + $0x48] sm:$0xff] %v1317
  %1354 = vst [vmem:[%s3 + $0x50] sm:$0xff] %v1318
  %1355 = vst [vmem:[%s3 + $0x58] sm:$0xff] %v1319
  %1356 = vst [vmem:[%s3 + $0x60] sm:$0xff] %v1320
  %1357 = vst [vmem:[%s3 + $0x68] sm:$0xff] %v1321
  %1358 = vst [vmem:[%s3 + $0x70] sm:$0xff] %v1322
  %1359 = vst [vmem:[%s3 + $0x78] sm:$0xff] %v1323
  %1360 = vst [vmem:[%s3 + $0x80] sm:$0xff] %v1324
  %1361 = vst [vmem:[%s3 + $0x88] sm:$0xff] %v1325
  %1362 = vst [vmem:[%s3 + $0x90] sm:$0xff] %v1326
  %1363 = vst [vmem:[%s3 + $0x98] sm:$0xff] %v1327
  %1364 = vst [vmem:[%s3 + $0xa0] sm:$0xff] %v1328
  %1365 = vst [vmem:[%s3 + $0xa8] sm:$0xff] %v1329
  %1366 = vst [vmem:[%s3 + $0xb0] sm:$0xff] %v1330
  %1367 = vst [vmem:[%s3 + $0xb8] sm:$0xff] %v1331
  %1368 = vst [vmem:[%s3 + $0xc0] sm:$0xff] %v1332
  %1369 = vst [vmem:[%s3 + $0xc8] sm:$0xff] %v1333
  %1370 = vst [vmem:[%s3 + $0xd0] sm:$0xff] %v1334
  %1371 = vst [vmem:[%s3 + $0xd8] sm:$0xff] %v1335
  %1372 = vst [vmem:[%s3 + $0xe0] sm:$0xff] %v1336
  %1373 = vst [vmem:[%s3 + $0xe8] sm:$0xff] %v1337
  %1374 = vst [vmem:[%s3 + $0xf0] sm:$0xff] %v1338
  %1375 = vst [vmem:[%s3 + $0xf8] sm:$0xff] %v1339
  %1376 = vst [vmem:[%s3 + $0x100] sm:$0xff] %v1340
  %1377 = vst [vmem:[%s3 + $0x108] sm:$0xff] %v1341
  %1378 = vst [vmem:[%s3 + $0x110] sm:$0xff] %v1342
  %1379 = vst [vmem:[%s3 + $0x118] sm:$0xff] %v1343
  // Predicated region
  $region14: #{lenet_forward.3} parent=0 // pred_check
    _
  $region15: #{lenet_forward.3} parent=0 // pred_check_branch
    %1381 = sbr.rel (0) target = $region17
  $region16: #{lenet_forward.3} parent=0 // pred_region
    _
  $region17: #{lenet_forward.3} parent=0 // pred_fallthru
    _
  // Predicated region
  $region18: #{lenet_forward.3} parent=0 // pred_check
    _
  $region19: #{lenet_forward.3} parent=0 // pred_check_branch
    %1383 = sbr.rel (0) target = $region21
  $region20: #{lenet_forward.3} parent=0 // pred_region
    _
  $region21: #{lenet_forward.3} parent=0 // pred_fallthru
    _

// kernel: lenet_forward.4
$region0: #{lenet_forward.4}
  #allocation0 [shape = 'u32[]', space=smem, size = 0x4, offset = 0x4, fixed_abs, tag = 'smem constant byte address 0x4 - core index']
  #allocation1 [shape = 'u32[144,128]{1,0:T(1,128)}', space=vmem, size = 0x12000, scoped, tag = 'internal scratch']
  %s0 = inlined_call_operand.vmem [shape: f32[4,32,512], index: 0, kind: input, shape index: {}]
  %s1 = inlined_call_operand.vmem [shape: f32[512,128], index: 1, kind: input, shape index: {}]
  %s2 = inlined_call_operand.vmem [shape: f32[1,128], index: 2, kind: input, shape index: {}]
  %s3 = inlined_call_operand.vmem [shape: f32[32,128], index: 3, kind: output, shape index: {}]
  %s4 = sld [smem:[#allocation0]]
  $region22: #{lenet_forward.4} parent=0
    _
  %s6 = ssub.s32 1, %s4
  %s7 = scalar_select 0, %s6, %s4
  // Predicated region
  $region2: #{lenet_forward.4} parent=0 // pred_check
    _
  $region3: #{lenet_forward.4} parent=0 // pred_check_branch
    %9 = sbr.rel (0) target = $region5
  $region4: #{lenet_forward.4} parent=0 // pred_region
    _
  $region5: #{lenet_forward.4} parent=0 // pred_fallthru
    _
  // Predicated region
  $region6: #{lenet_forward.4} parent=0 // pred_check
    _
  $region7: #{lenet_forward.4} parent=0 // pred_check_branch
    %11 = sbr.rel (0) target = $region9
  $region8: #{lenet_forward.4} parent=0 // pred_region
    _
  $region9: #{lenet_forward.4} parent=0 // pred_fallthru
    _
  // Predicated region
  $region10: #{lenet_forward.4} parent=0 // pred_check
    _
  $region11: #{lenet_forward.4} parent=0 // pred_check_branch
    %13 = sbr.rel (0) target = $region13
  $region12: #{lenet_forward.4} parent=0 // pred_region
    _
  $region13: #{lenet_forward.4} parent=0 // pred_fallthru
    _
  %v14 = vld [vmem:[%s1] sm:$0xff]
  %v15 = vld [vmem:[%s1 + $0x8] sm:$0xff]
  %v16 = vld [vmem:[%s1 + $0x10] sm:$0xff]
  %v17 = vld [vmem:[%s1 + $0x18] sm:$0xff]
  %v18 = vld [vmem:[%s1 + $0x20] sm:$0xff]
  %v19 = vld [vmem:[%s1 + $0x28] sm:$0xff]
  %v20 = vld [vmem:[%s1 + $0x30] sm:$0xff]
  %v21 = vld [vmem:[%s1 + $0x38] sm:$0xff]
  %v22 = vld [vmem:[%s1 + $0x40] sm:$0xff]
  %v23 = vld [vmem:[%s1 + $0x48] sm:$0xff]
  %v24 = vld [vmem:[%s1 + $0x50] sm:$0xff]
  %v25 = vld [vmem:[%s1 + $0x58] sm:$0xff]
  %v26 = vld [vmem:[%s1 + $0x60] sm:$0xff]
  %v27 = vld [vmem:[%s1 + $0x68] sm:$0xff]
  %v28 = vld [vmem:[%s1 + $0x70] sm:$0xff]
  %v29 = vld [vmem:[%s1 + $0x78] sm:$0xff]
  %v30 = vld [vmem:[%s1 + $0x80] sm:$0xff]
  %v31 = vld [vmem:[%s1 + $0x88] sm:$0xff]
  %v32 = vld [vmem:[%s1 + $0x90] sm:$0xff]
  %v33 = vld [vmem:[%s1 + $0x98] sm:$0xff]
  %v34 = vld [vmem:[%s1 + $0xa0] sm:$0xff]
  %v35 = vld [vmem:[%s1 + $0xa8] sm:$0xff]
  %v36 = vld [vmem:[%s1 + $0xb0] sm:$0xff]
  %v37 = vld [vmem:[%s1 + $0xb8] sm:$0xff]
  %v38 = vld [vmem:[%s1 + $0xc0] sm:$0xff]
  %v39 = vld [vmem:[%s1 + $0xc8] sm:$0xff]
  %v40 = vld [vmem:[%s1 + $0xd0] sm:$0xff]
  %v41 = vld [vmem:[%s1 + $0xd8] sm:$0xff]
  %v42 = vld [vmem:[%s1 + $0xe0] sm:$0xff]
  %v43 = vld [vmem:[%s1 + $0xe8] sm:$0xff]
  %v44 = vld [vmem:[%s1 + $0xf0] sm:$0xff]
  %v45 = vld [vmem:[%s1 + $0xf8] sm:$0xff]
  %v46 = vld [vmem:[%s1 + $0x100] sm:$0xff]
  %v47 = vld [vmem:[%s1 + $0x108] sm:$0xff]
  %v48 = vld [vmem:[%s1 + $0x110] sm:$0xff]
  %v49 = vld [vmem:[%s1 + $0x118] sm:$0xff]
  %v50 = vld [vmem:[%s1 + $0x120] sm:$0xff]
  %v51 = vld [vmem:[%s1 + $0x128] sm:$0xff]
  %v52 = vld [vmem:[%s1 + $0x130] sm:$0xff]
  %v53 = vld [vmem:[%s1 + $0x138] sm:$0xff]
  %v54 = vld [vmem:[%s1 + $0x140] sm:$0xff]
  %v55 = vld [vmem:[%s1 + $0x148] sm:$0xff]
  %v56 = vld [vmem:[%s1 + $0x150] sm:$0xff]
  %v57 = vld [vmem:[%s1 + $0x158] sm:$0xff]
  %v58 = vld [vmem:[%s1 + $0x160] sm:$0xff]
  %v59 = vld [vmem:[%s1 + $0x168] sm:$0xff]
  %v60 = vld [vmem:[%s1 + $0x170] sm:$0xff]
  %v61 = vld [vmem:[%s1 + $0x178] sm:$0xff]
  %v62 = vld [vmem:[%s1 + $0x180] sm:$0xff]
  %v63 = vld [vmem:[%s1 + $0x188] sm:$0xff]
  %v64 = vld [vmem:[%s1 + $0x190] sm:$0xff]
  %v65 = vld [vmem:[%s1 + $0x198] sm:$0xff]
  %v66 = vld [vmem:[%s1 + $0x1a0] sm:$0xff]
  %v67 = vld [vmem:[%s1 + $0x1a8] sm:$0xff]
  %v68 = vld [vmem:[%s1 + $0x1b0] sm:$0xff]
  %v69 = vld [vmem:[%s1 + $0x1b8] sm:$0xff]
  %v70 = vld [vmem:[%s1 + $0x1c0] sm:$0xff]
  %v71 = vld [vmem:[%s1 + $0x1c8] sm:$0xff]
  %v72 = vld [vmem:[%s1 + $0x1d0] sm:$0xff]
  %v73 = vld [vmem:[%s1 + $0x1d8] sm:$0xff]
  %v74 = vld [vmem:[%s1 + $0x1e0] sm:$0xff]
  %v75 = vld [vmem:[%s1 + $0x1e8] sm:$0xff]
  %v76 = vld [vmem:[%s1 + $0x1f0] sm:$0xff]
  %v77 = vld [vmem:[%s1 + $0x1f8] sm:$0xff]
  %v78 = vld [vmem:[%s0] sm:$0xff]
  %v79 = vld [vmem:[%s0 + $0x8] sm:$0xff]
  %v80 = vld [vmem:[%s0 + $0x10] sm:$0xff]
  %v81 = vld [vmem:[%s0 + $0x18] sm:$0xff]
  %v82 = vld [vmem:[%s0 + $0x20] sm:$0xff]
  %v83 = vld [vmem:[%s0 + $0x28] sm:$0xff]
  %v84 = vld [vmem:[%s0 + $0x30] sm:$0xff]
  %v85 = vld [vmem:[%s0 + $0x38] sm:$0xff]
  %v86 = vld [vmem:[%s0 + $0x40] sm:$0xff]
  %v87 = vld [vmem:[%s0 + $0x48] sm:$0xff]
  %v88 = vld [vmem:[%s0 + $0x50] sm:$0xff]
  %v89 = vld [vmem:[%s0 + $0x58] sm:$0xff]
  %v90 = vld [vmem:[%s0 + $0x60] sm:$0xff]
  %v91 = vld [vmem:[%s0 + $0x68] sm:$0xff]
  %v92 = vld [vmem:[%s0 + $0x70] sm:$0xff]
  %v93 = vld [vmem:[%s0 + $0x78] sm:$0xff]
  %94 = vmatprep.subr.mxu0 0.0
  %95 = vmatpush1.msra.mxu0 %v29
  %96 = vmatprep.subr.mxu0 0.0
  %97 = vmatpush1.msra.mxu0 %v28
  %98 = vmatprep.subr.mxu0 0.0
  %99 = vmatpush1.msra.mxu0 %v27
  %100 = vmatprep.subr.mxu0 0.0
  %101 = vmatpush1.msra.mxu0 %v26
  %102 = vmatprep.subr.mxu0 0.0
  %103 = vmatpush1.msra.mxu0 %v25
  %104 = vmatprep.subr.mxu0 0.0
  %105 = vmatpush1.msra.mxu0 %v24
  %106 = vmatprep.subr.mxu0 0.0
  %107 = vmatpush1.msra.mxu0 %v23
  %108 = vmatprep.subr.mxu0 0.0
  %109 = vmatpush1.msra.mxu0 %v22
  %110 = vmatprep.subr.mxu0 0.0
  %111 = vmatpush1.msra.mxu0 %v21
  %112 = vmatprep.subr.mxu0 0.0
  %113 = vmatpush1.msra.mxu0 %v20
  %114 = vmatprep.subr.mxu0 0.0
  %115 = vmatpush1.msra.mxu0 %v19
  %116 = vmatprep.subr.mxu0 0.0
  %117 = vmatpush1.msra.mxu0 %v18
  %118 = vmatprep.subr.mxu0 0.0
  %119 = vmatpush1.msra.mxu0 %v17
  %120 = vmatprep.subr.mxu0 0.0
  %121 = vmatpush1.msra.mxu0 %v16
  %122 = vmatprep.subr.mxu0 0.0
  %123 = vmatpush1.msra.mxu0 %v15
  %124 = vmatprep.subr.mxu0 0.0
  %125 = vmatpush1.msra.mxu0 %v14
  %126 = vmatprep.subr.mxu0 0.0
  %127 = vmatpush2.msra.mxu0 %v45
  %128 = vmatprep.subr.mxu0 0.0
  %129 = vmatpush2.msra.mxu0 %v44
  %130 = vmatprep.subr.mxu0 0.0
  %131 = vmatpush2.msra.mxu0 %v43
  %132 = vmatprep.subr.mxu0 0.0
  %133 = vmatpush2.msra.mxu0 %v42
  %134 = vmatprep.subr.mxu0 0.0
  %135 = vmatpush2.msra.mxu0 %v41
  %136 = vmatprep.subr.mxu0 0.0
  %137 = vmatpush2.msra.mxu0 %v40
  %138 = vmatprep.subr.mxu0 0.0
  %139 = vmatpush2.msra.mxu0 %v39
  %140 = vmatprep.subr.mxu0 0.0
  %141 = vmatpush2.msra.mxu0 %v38
  %142 = vmatprep.subr.mxu0 0.0
  %143 = vmatpush2.msra.mxu0 %v37
  %144 = vmatprep.subr.mxu0 0.0
  %145 = vmatpush2.msra.mxu0 %v36
  %146 = vmatprep.subr.mxu0 0.0
  %147 = vmatpush2.msra.mxu0 %v35
  %148 = vmatprep.subr.mxu0 0.0
  %149 = vmatpush2.msra.mxu0 %v34
  %150 = vmatprep.subr.mxu0 0.0
  %151 = vmatpush2.msra.mxu0 %v33
  %152 = vmatprep.subr.mxu0 0.0
  %153 = vmatpush2.msra.mxu0 %v32
  %154 = vmatprep.subr.mxu0 0.0
  %155 = vmatpush2.msra.mxu0 %v31
  %156 = vmatprep.subr.mxu0 0.0
  %157 = vmatpush2.msra.mxu0 %v30
  %158 = vmatprep.mubr.f32.mxu0 %v79
  %159 = vmatmul.mubr.f32.gmra.mxu0 %v78
  %v160 = vpop.f32.mrf.mxu0
  %v161 = vadd.f32 0.0, %v160
  %v162 = vpop.f32.mrf.mxu0
  %163 = vmatprep.mubr.f32.mxu0 %v83
  %164 = vmatmul.mubr.f32.gmra.mxu0 %v82
  %v165 = vpop.f32.mrf.mxu0
  %v166 = vadd.f32 0.0, %v165
  %v167 = vpop.f32.mrf.mxu0
  %168 = vmatprep.mubr.f32.mxu0 %v87
  %169 = vmatmul.mubr.f32.gmra.mxu0 %v86
  %v170 = vpop.f32.mrf.mxu0
  %v171 = vadd.f32 0.0, %v170
  %v172 = vpop.f32.mrf.mxu0
  %173 = vmatprep.mubr.f32.mxu0 %v91
  %174 = vmatmul.mubr.f32.gmra.mxu0 %v90
  %v175 = vpop.f32.mrf.mxu0
  %v176 = vadd.f32 0.0, %v175
  %v177 = vpop.f32.mrf.mxu0
  %178 = vdwg.mxu0
  %179 = vmatprep.subr.mxu0 0.0
  %180 = vmatpush1.msra.mxu0 %v61
  %181 = vmatprep.subr.mxu0 0.0
  %182 = vmatpush1.msra.mxu0 %v60
  %183 = vmatprep.subr.mxu0 0.0
  %184 = vmatpush1.msra.mxu0 %v59
  %185 = vmatprep.subr.mxu0 0.0
  %186 = vmatpush1.msra.mxu0 %v58
  %187 = vmatprep.subr.mxu0 0.0
  %188 = vmatpush1.msra.mxu0 %v57
  %189 = vmatprep.subr.mxu0 0.0
  %190 = vmatpush1.msra.mxu0 %v56
  %191 = vmatprep.subr.mxu0 0.0
  %192 = vmatpush1.msra.mxu0 %v55
  %193 = vmatprep.subr.mxu0 0.0
  %194 = vmatpush1.msra.mxu0 %v54
  %195 = vmatprep.subr.mxu0 0.0
  %196 = vmatpush1.msra.mxu0 %v53
  %197 = vmatprep.subr.mxu0 0.0
  %198 = vmatpush1.msra.mxu0 %v52
  %199 = vmatprep.subr.mxu0 0.0
  %200 = vmatpush1.msra.mxu0 %v51
  %201 = vmatprep.subr.mxu0 0.0
  %202 = vmatpush1.msra.mxu0 %v50
  %203 = vmatprep.subr.mxu0 0.0
  %204 = vmatpush1.msra.mxu0 %v49
  %205 = vmatprep.subr.mxu0 0.0
  %206 = vmatpush1.msra.mxu0 %v48
  %207 = vmatprep.subr.mxu0 0.0
  %208 = vmatpush1.msra.mxu0 %v47
  %209 = vmatprep.subr.mxu0 0.0
  %210 = vmatpush1.msra.mxu0 %v46
  %211 = vmatprep.subr.mxu0 0.0
  %212 = vmatpush2.msra.mxu0 %v77
  %213 = vmatprep.subr.mxu0 0.0
  %214 = vmatpush2.msra.mxu0 %v76
  %215 = vmatprep.subr.mxu0 0.0
  %216 = vmatpush2.msra.mxu0 %v75
  %217 = vmatprep.subr.mxu0 0.0
  %218 = vmatpush2.msra.mxu0 %v74
  %219 = vmatprep.subr.mxu0 0.0
  %220 = vmatpush2.msra.mxu0 %v73
  %221 = vmatprep.subr.mxu0 0.0
  %222 = vmatpush2.msra.mxu0 %v72
  %223 = vmatprep.subr.mxu0 0.0
  %224 = vmatpush2.msra.mxu0 %v71
  %225 = vmatprep.subr.mxu0 0.0
  %226 = vmatpush2.msra.mxu0 %v70
  %227 = vmatprep.subr.mxu0 0.0
  %228 = vmatpush2.msra.mxu0 %v69
  %229 = vmatprep.subr.mxu0 0.0
  %230 = vmatpush2.msra.mxu0 %v68
  %231 = vmatprep.subr.mxu0 0.0
  %232 = vmatpush2.msra.mxu0 %v67
  %233 = vmatprep.subr.mxu0 0.0
  %234 = vmatpush2.msra.mxu0 %v66
  %235 = vmatprep.subr.mxu0 0.0
  %236 = vmatpush2.msra.mxu0 %v65
  %237 = vmatprep.subr.mxu0 0.0
  %238 = vmatpush2.msra.mxu0 %v64
  %239 = vmatprep.subr.mxu0 0.0
  %240 = vmatpush2.msra.mxu0 %v63
  %241 = vmatprep.subr.mxu0 0.0
  %242 = vmatpush2.msra.mxu0 %v62
  %243 = vmatprep.mubr.f32.mxu0 %v81
  %244 = vmatmul.mubr.f32.gmra.mxu0 %v80
  %v245 = vpop.f32.mrf.mxu0
  %v246 = vadd.f32 %v161, %v245
  %v247 = vpop.f32.mrf.mxu0
  %248 = vmatprep.mubr.f32.mxu0 %v85
  %249 = vmatmul.mubr.f32.gmra.mxu0 %v84
  %v250 = vpop.f32.mrf.mxu0
  %v251 = vadd.f32 %v166, %v250
  %v252 = vpop.f32.mrf.mxu0
  %253 = vmatprep.mubr.f32.mxu0 %v89
  %254 = vmatmul.mubr.f32.gmra.mxu0 %v88
  %v255 = vpop.f32.mrf.mxu0
  %v256 = vadd.f32 %v171, %v255
  %v257 = vpop.f32.mrf.mxu0
  %258 = vmatprep.mubr.f32.mxu0 %v93
  %259 = vmatmul.mubr.f32.gmra.mxu0 %v92
  %v260 = vpop.f32.mrf.mxu0
  %v261 = vadd.f32 %v176, %v260
  %v262 = vpop.f32.mrf.mxu0
  %263 = vdwg.mxu0
  %s264 = scalar_lea.vmem %s0, 128
  %v265 = vld [vmem:[%s264] sm:$0xff]
  %v266 = vld [vmem:[%s264 + $0x8] sm:$0xff]
  %v267 = vld [vmem:[%s264 + $0x10] sm:$0xff]
  %v268 = vld [vmem:[%s264 + $0x18] sm:$0xff]
  %v269 = vld [vmem:[%s264 + $0x20] sm:$0xff]
  %v270 = vld [vmem:[%s264 + $0x28] sm:$0xff]
  %v271 = vld [vmem:[%s264 + $0x30] sm:$0xff]
  %v272 = vld [vmem:[%s264 + $0x38] sm:$0xff]
  %v273 = vld [vmem:[%s264 + $0x40] sm:$0xff]
  %v274 = vld [vmem:[%s264 + $0x48] sm:$0xff]
  %v275 = vld [vmem:[%s264 + $0x50] sm:$0xff]
  %v276 = vld [vmem:[%s264 + $0x58] sm:$0xff]
  %v277 = vld [vmem:[%s264 + $0x60] sm:$0xff]
  %v278 = vld [vmem:[%s264 + $0x68] sm:$0xff]
  %v279 = vld [vmem:[%s264 + $0x70] sm:$0xff]
  %v280 = vld [vmem:[%s264 + $0x78] sm:$0xff]
  %281 = vmatprep.subr.mxu0 0.0
  %282 = vmatpush1.msra.mxu0 %v29
  %283 = vmatprep.subr.mxu0 0.0
  %284 = vmatpush1.msra.mxu0 %v28
  %285 = vmatprep.subr.mxu0 0.0
  %286 = vmatpush1.msra.mxu0 %v27
  %287 = vmatprep.subr.mxu0 0.0
  %288 = vmatpush1.msra.mxu0 %v26
  %289 = vmatprep.subr.mxu0 0.0
  %290 = vmatpush1.msra.mxu0 %v25
  %291 = vmatprep.subr.mxu0 0.0
  %292 = vmatpush1.msra.mxu0 %v24
  %293 = vmatprep.subr.mxu0 0.0
  %294 = vmatpush1.msra.mxu0 %v23
  %295 = vmatprep.subr.mxu0 0.0
  %296 = vmatpush1.msra.mxu0 %v22
  %297 = vmatprep.subr.mxu0 0.0
  %298 = vmatpush1.msra.mxu0 %v21
  %299 = vmatprep.subr.mxu0 0.0
  %300 = vmatpush1.msra.mxu0 %v20
  %301 = vmatprep.subr.mxu0 0.0
  %302 = vmatpush1.msra.mxu0 %v19
  %303 = vmatprep.subr.mxu0 0.0
  %304 = vmatpush1.msra.mxu0 %v18
  %305 = vmatprep.subr.mxu0 0.0
  %306 = vmatpush1.msra.mxu0 %v17
  %307 = vmatprep.subr.mxu0 0.0
  %308 = vmatpush1.msra.mxu0 %v16
  %309 = vmatprep.subr.mxu0 0.0
  %310 = vmatpush1.msra.mxu0 %v15
  %311 = vmatprep.subr.mxu0 0.0
  %312 = vmatpush1.msra.mxu0 %v14
  %313 = vmatprep.subr.mxu0 0.0
  %314 = vmatpush2.msra.mxu0 %v45
  %315 = vmatprep.subr.mxu0 0.0
  %316 = vmatpush2.msra.mxu0 %v44
  %317 = vmatprep.subr.mxu0 0.0
  %318 = vmatpush2.msra.mxu0 %v43
  %319 = vmatprep.subr.mxu0 0.0
  %320 = vmatpush2.msra.mxu0 %v42
  %321 = vmatprep.subr.mxu0 0.0
  %322 = vmatpush2.msra.mxu0 %v41
  %323 = vmatprep.subr.mxu0 0.0
  %324 = vmatpush2.msra.mxu0 %v40
  %325 = vmatprep.subr.mxu0 0.0
  %326 = vmatpush2.msra.mxu0 %v39
  %327 = vmatprep.subr.mxu0 0.0
  %328 = vmatpush2.msra.mxu0 %v38
  %329 = vmatprep.subr.mxu0 0.0
  %330 = vmatpush2.msra.mxu0 %v37
  %331 = vmatprep.subr.mxu0 0.0
  %332 = vmatpush2.msra.mxu0 %v36
  %333 = vmatprep.subr.mxu0 0.0
  %334 = vmatpush2.msra.mxu0 %v35
  %335 = vmatprep.subr.mxu0 0.0
  %336 = vmatpush2.msra.mxu0 %v34
  %337 = vmatprep.subr.mxu0 0.0
  %338 = vmatpush2.msra.mxu0 %v33
  %339 = vmatprep.subr.mxu0 0.0
  %340 = vmatpush2.msra.mxu0 %v32
  %341 = vmatprep.subr.mxu0 0.0
  %342 = vmatpush2.msra.mxu0 %v31
  %343 = vmatprep.subr.mxu0 0.0
  %344 = vmatpush2.msra.mxu0 %v30
  %345 = vmatprep.mubr.f32.mxu0 %v266
  %346 = vmatmul.mubr.f32.gmra.mxu0 %v265
  %v347 = vpop.f32.mrf.mxu0
  %v348 = vadd.f32 0.0, %v347
  %v349 = vpop.f32.mrf.mxu0
  %350 = vmatprep.mubr.f32.mxu0 %v270
  %351 = vmatmul.mubr.f32.gmra.mxu0 %v269
  %v352 = vpop.f32.mrf.mxu0
  %v353 = vadd.f32 0.0, %v352
  %v354 = vpop.f32.mrf.mxu0
  %355 = vmatprep.mubr.f32.mxu0 %v274
  %356 = vmatmul.mubr.f32.gmra.mxu0 %v273
  %v357 = vpop.f32.mrf.mxu0
  %v358 = vadd.f32 0.0, %v357
  %v359 = vpop.f32.mrf.mxu0
  %360 = vmatprep.mubr.f32.mxu0 %v278
  %361 = vmatmul.mubr.f32.gmra.mxu0 %v277
  %v362 = vpop.f32.mrf.mxu0
  %v363 = vadd.f32 0.0, %v362
  %v364 = vpop.f32.mrf.mxu0
  %365 = vdwg.mxu0
  %366 = vmatprep.subr.mxu0 0.0
  %367 = vmatpush1.msra.mxu0 %v61
  %368 = vmatprep.subr.mxu0 0.0
  %369 = vmatpush1.msra.mxu0 %v60
  %370 = vmatprep.subr.mxu0 0.0
  %371 = vmatpush1.msra.mxu0 %v59
  %372 = vmatprep.subr.mxu0 0.0
  %373 = vmatpush1.msra.mxu0 %v58
  %374 = vmatprep.subr.mxu0 0.0
  %375 = vmatpush1.msra.mxu0 %v57
  %376 = vmatprep.subr.mxu0 0.0
  %377 = vmatpush1.msra.mxu0 %v56
  %378 = vmatprep.subr.mxu0 0.0
  %379 = vmatpush1.msra.mxu0 %v55
  %380 = vmatprep.subr.mxu0 0.0
  %381 = vmatpush1.msra.mxu0 %v54
  %382 = vmatprep.subr.mxu0 0.0
  %383 = vmatpush1.msra.mxu0 %v53
  %384 = vmatprep.subr.mxu0 0.0
  %385 = vmatpush1.msra.mxu0 %v52
  %386 = vmatprep.subr.mxu0 0.0
  %387 = vmatpush1.msra.mxu0 %v51
  %388 = vmatprep.subr.mxu0 0.0
  %389 = vmatpush1.msra.mxu0 %v50
  %390 = vmatprep.subr.mxu0 0.0
  %391 = vmatpush1.msra.mxu0 %v49
  %392 = vmatprep.subr.mxu0 0.0
  %393 = vmatpush1.msra.mxu0 %v48
  %394 = vmatprep.subr.mxu0 0.0
  %395 = vmatpush1.msra.mxu0 %v47
  %396 = vmatprep.subr.mxu0 0.0
  %397 = vmatpush1.msra.mxu0 %v46
  %398 = vmatprep.subr.mxu0 0.0
  %399 = vmatpush2.msra.mxu0 %v77
  %400 = vmatprep.subr.mxu0 0.0
  %401 = vmatpush2.msra.mxu0 %v76
  %402 = vmatprep.subr.mxu0 0.0
  %403 = vmatpush2.msra.mxu0 %v75
  %404 = vmatprep.subr.mxu0 0.0
  %405 = vmatpush2.msra.mxu0 %v74
  %406 = vmatprep.subr.mxu0 0.0
  %407 = vmatpush2.msra.mxu0 %v73
  %408 = vmatprep.subr.mxu0 0.0
  %409 = vmatpush2.msra.mxu0 %v72
  %410 = vmatprep.subr.mxu0 0.0
  %411 = vmatpush2.msra.mxu0 %v71
  %412 = vmatprep.subr.mxu0 0.0
  %413 = vmatpush2.msra.mxu0 %v70
  %414 = vmatprep.subr.mxu0 0.0
  %415 = vmatpush2.msra.mxu0 %v69
  %416 = vmatprep.subr.mxu0 0.0
  %417 = vmatpush2.msra.mxu0 %v68
  %418 = vmatprep.subr.mxu0 0.0
  %419 = vmatpush2.msra.mxu0 %v67
  %420 = vmatprep.subr.mxu0 0.0
  %421 = vmatpush2.msra.mxu0 %v66
  %422 = vmatprep.subr.mxu0 0.0
  %423 = vmatpush2.msra.mxu0 %v65
  %424 = vmatprep.subr.mxu0 0.0
  %425 = vmatpush2.msra.mxu0 %v64
  %426 = vmatprep.subr.mxu0 0.0
  %427 = vmatpush2.msra.mxu0 %v63
  %428 = vmatprep.subr.mxu0 0.0
  %429 = vmatpush2.msra.mxu0 %v62
  %430 = vmatprep.mubr.f32.mxu0 %v268
  %431 = vmatmul.mubr.f32.gmra.mxu0 %v267
  %v432 = vpop.f32.mrf.mxu0
  %v433 = vadd.f32 %v348, %v432
  %v434 = vpop.f32.mrf.mxu0
  %435 = vmatprep.mubr.f32.mxu0 %v272
  %436 = vmatmul.mubr.f32.gmra.mxu0 %v271
  %v437 = vpop.f32.mrf.mxu0
  %v438 = vadd.f32 %v353, %v437
  %v439 = vpop.f32.mrf.mxu0
  %440 = vmatprep.mubr.f32.mxu0 %v276
  %441 = vmatmul.mubr.f32.gmra.mxu0 %v275
  %v442 = vpop.f32.mrf.mxu0
  %v443 = vadd.f32 %v358, %v442
  %v444 = vpop.f32.mrf.mxu0
  %445 = vmatprep.mubr.f32.mxu0 %v280
  %446 = vmatmul.mubr.f32.gmra.mxu0 %v279
  %v447 = vpop.f32.mrf.mxu0
  %v448 = vadd.f32 %v363, %v447
  %v449 = vpop.f32.mrf.mxu0
  %450 = vdwg.mxu0
  %v451 = vmax.f32 %v246, %v433
  %v452 = vmax.f32 %v251, %v438
  %v453 = vmax.f32 %v256, %v443
  %v454 = vmax.f32 %v261, %v448
  %s455 = scalar_lea.vmem %s0, 256
  %v456 = vld [vmem:[%s455] sm:$0xff]
  %v457 = vld [vmem:[%s455 + $0x8] sm:$0xff]
  %v458 = vld [vmem:[%s455 + $0x10] sm:$0xff]
  %v459 = vld [vmem:[%s455 + $0x18] sm:$0xff]
  %v460 = vld [vmem:[%s455 + $0x20] sm:$0xff]
  %v461 = vld [vmem:[%s455 + $0x28] sm:$0xff]
  %v462 = vld [vmem:[%s455 + $0x30] sm:$0xff]
  %v463 = vld [vmem:[%s455 + $0x38] sm:$0xff]
  %v464 = vld [vmem:[%s455 + $0x40] sm:$0xff]
  %v465 = vld [vmem:[%s455 + $0x48] sm:$0xff]
  %v466 = vld [vmem:[%s455 + $0x50] sm:$0xff]
  %v467 = vld [vmem:[%s455 + $0x58] sm:$0xff]
  %v468 = vld [vmem:[%s455 + $0x60] sm:$0xff]
  %v469 = vld [vmem:[%s455 + $0x68] sm:$0xff]
  %v470 = vld [vmem:[%s455 + $0x70] sm:$0xff]
  %v471 = vld [vmem:[%s455 + $0x78] sm:$0xff]
  %472 = vmatprep.subr.mxu0 0.0
  %473 = vmatpush1.msra.mxu0 %v29
  %474 = vmatprep.subr.mxu0 0.0
  %475 = vmatpush1.msra.mxu0 %v28
  %476 = vmatprep.subr.mxu0 0.0
  %477 = vmatpush1.msra.mxu0 %v27
  %478 = vmatprep.subr.mxu0 0.0
  %479 = vmatpush1.msra.mxu0 %v26
  %480 = vmatprep.subr.mxu0 0.0
  %481 = vmatpush1.msra.mxu0 %v25
  %482 = vmatprep.subr.mxu0 0.0
  %483 = vmatpush1.msra.mxu0 %v24
  %484 = vmatprep.subr.mxu0 0.0
  %485 = vmatpush1.msra.mxu0 %v23
  %486 = vmatprep.subr.mxu0 0.0
  %487 = vmatpush1.msra.mxu0 %v22
  %488 = vmatprep.subr.mxu0 0.0
  %489 = vmatpush1.msra.mxu0 %v21
  %490 = vmatprep.subr.mxu0 0.0
  %491 = vmatpush1.msra.mxu0 %v20
  %492 = vmatprep.subr.mxu0 0.0
  %493 = vmatpush1.msra.mxu0 %v19
  %494 = vmatprep.subr.mxu0 0.0
  %495 = vmatpush1.msra.mxu0 %v18
  %496 = vmatprep.subr.mxu0 0.0
  %497 = vmatpush1.msra.mxu0 %v17
  %498 = vmatprep.subr.mxu0 0.0
  %499 = vmatpush1.msra.mxu0 %v16
  %500 = vmatprep.subr.mxu0 0.0
  %501 = vmatpush1.msra.mxu0 %v15
  %502 = vmatprep.subr.mxu0 0.0
  %503 = vmatpush1.msra.mxu0 %v14
  %504 = vmatprep.subr.mxu0 0.0
  %505 = vmatpush2.msra.mxu0 %v45
  %506 = vmatprep.subr.mxu0 0.0
  %507 = vmatpush2.msra.mxu0 %v44
  %508 = vmatprep.subr.mxu0 0.0
  %509 = vmatpush2.msra.mxu0 %v43
  %510 = vmatprep.subr.mxu0 0.0
  %511 = vmatpush2.msra.mxu0 %v42
  %512 = vmatprep.subr.mxu0 0.0
  %513 = vmatpush2.msra.mxu0 %v41
  %514 = vmatprep.subr.mxu0 0.0
  %515 = vmatpush2.msra.mxu0 %v40
  %516 = vmatprep.subr.mxu0 0.0
  %517 = vmatpush2.msra.mxu0 %v39
  %518 = vmatprep.subr.mxu0 0.0
  %519 = vmatpush2.msra.mxu0 %v38
  %520 = vmatprep.subr.mxu0 0.0
  %521 = vmatpush2.msra.mxu0 %v37
  %522 = vmatprep.subr.mxu0 0.0
  %523 = vmatpush2.msra.mxu0 %v36
  %524 = vmatprep.subr.mxu0 0.0
  %525 = vmatpush2.msra.mxu0 %v35
  %526 = vmatprep.subr.mxu0 0.0
  %527 = vmatpush2.msra.mxu0 %v34
  %528 = vmatprep.subr.mxu0 0.0
  %529 = vmatpush2.msra.mxu0 %v33
  %530 = vmatprep.subr.mxu0 0.0
  %531 = vmatpush2.msra.mxu0 %v32
  %532 = vmatprep.subr.mxu0 0.0
  %533 = vmatpush2.msra.mxu0 %v31
  %534 = vmatprep.subr.mxu0 0.0
  %535 = vmatpush2.msra.mxu0 %v30
  %536 = vmatprep.mubr.f32.mxu0 %v457
  %537 = vmatmul.mubr.f32.gmra.mxu0 %v456
  %v538 = vpop.f32.mrf.mxu0
  %v539 = vadd.f32 0.0, %v538
  %v540 = vpop.f32.mrf.mxu0
  %541 = vmatprep.mubr.f32.mxu0 %v461
  %542 = vmatmul.mubr.f32.gmra.mxu0 %v460
  %v543 = vpop.f32.mrf.mxu0
  %v544 = vadd.f32 0.0, %v543
  %v545 = vpop.f32.mrf.mxu0
  %546 = vmatprep.mubr.f32.mxu0 %v465
  %547 = vmatmul.mubr.f32.gmra.mxu0 %v464
  %v548 = vpop.f32.mrf.mxu0
  %v549 = vadd.f32 0.0, %v548
  %v550 = vpop.f32.mrf.mxu0
  %551 = vmatprep.mubr.f32.mxu0 %v469
  %552 = vmatmul.mubr.f32.gmra.mxu0 %v468
  %v553 = vpop.f32.mrf.mxu0
  %v554 = vadd.f32 0.0, %v553
  %v555 = vpop.f32.mrf.mxu0
  %556 = vdwg.mxu0
  %557 = vmatprep.subr.mxu0 0.0
  %558 = vmatpush1.msra.mxu0 %v61
  %559 = vmatprep.subr.mxu0 0.0
  %560 = vmatpush1.msra.mxu0 %v60
  %561 = vmatprep.subr.mxu0 0.0
  %562 = vmatpush1.msra.mxu0 %v59
  %563 = vmatprep.subr.mxu0 0.0
  %564 = vmatpush1.msra.mxu0 %v58
  %565 = vmatprep.subr.mxu0 0.0
  %566 = vmatpush1.msra.mxu0 %v57
  %567 = vmatprep.subr.mxu0 0.0
  %568 = vmatpush1.msra.mxu0 %v56
  %569 = vmatprep.subr.mxu0 0.0
  %570 = vmatpush1.msra.mxu0 %v55
  %571 = vmatprep.subr.mxu0 0.0
  %572 = vmatpush1.msra.mxu0 %v54
  %573 = vmatprep.subr.mxu0 0.0
  %574 = vmatpush1.msra.mxu0 %v53
  %575 = vmatprep.subr.mxu0 0.0
  %576 = vmatpush1.msra.mxu0 %v52
  %577 = vmatprep.subr.mxu0 0.0
  %578 = vmatpush1.msra.mxu0 %v51
  %579 = vmatprep.subr.mxu0 0.0
  %580 = vmatpush1.msra.mxu0 %v50
  %581 = vmatprep.subr.mxu0 0.0
  %582 = vmatpush1.msra.mxu0 %v49
  %583 = vmatprep.subr.mxu0 0.0
  %584 = vmatpush1.msra.mxu0 %v48
  %585 = vmatprep.subr.mxu0 0.0
  %586 = vmatpush1.msra.mxu0 %v47
  %587 = vmatprep.subr.mxu0 0.0
  %588 = vmatpush1.msra.mxu0 %v46
  %589 = vmatprep.subr.mxu0 0.0
  %590 = vmatpush2.msra.mxu0 %v77
  %591 = vmatprep.subr.mxu0 0.0
  %592 = vmatpush2.msra.mxu0 %v76
  %593 = vmatprep.subr.mxu0 0.0
  %594 = vmatpush2.msra.mxu0 %v75
  %595 = vmatprep.subr.mxu0 0.0
  %596 = vmatpush2.msra.mxu0 %v74
  %597 = vmatprep.subr.mxu0 0.0
  %598 = vmatpush2.msra.mxu0 %v73
  %599 = vmatprep.subr.mxu0 0.0
  %600 = vmatpush2.msra.mxu0 %v72
  %601 = vmatprep.subr.mxu0 0.0
  %602 = vmatpush2.msra.mxu0 %v71
  %603 = vmatprep.subr.mxu0 0.0
  %604 = vmatpush2.msra.mxu0 %v70
  %605 = vmatprep.subr.mxu0 0.0
  %606 = vmatpush2.msra.mxu0 %v69
  %607 = vmatprep.subr.mxu0 0.0
  %608 = vmatpush2.msra.mxu0 %v68
  %609 = vmatprep.subr.mxu0 0.0
  %610 = vmatpush2.msra.mxu0 %v67
  %611 = vmatprep.subr.mxu0 0.0
  %612 = vmatpush2.msra.mxu0 %v66
  %613 = vmatprep.subr.mxu0 0.0
  %614 = vmatpush2.msra.mxu0 %v65
  %615 = vmatprep.subr.mxu0 0.0
  %616 = vmatpush2.msra.mxu0 %v64
  %617 = vmatprep.subr.mxu0 0.0
  %618 = vmatpush2.msra.mxu0 %v63
  %619 = vmatprep.subr.mxu0 0.0
  %620 = vmatpush2.msra.mxu0 %v62
  %621 = vmatprep.mubr.f32.mxu0 %v459
  %622 = vmatmul.mubr.f32.gmra.mxu0 %v458
  %v623 = vpop.f32.mrf.mxu0
  %v624 = vadd.f32 %v539, %v623
  %v625 = vpop.f32.mrf.mxu0
  %626 = vmatprep.mubr.f32.mxu0 %v463
  %627 = vmatmul.mubr.f32.gmra.mxu0 %v462
  %v628 = vpop.f32.mrf.mxu0
  %v629 = vadd.f32 %v544, %v628
  %v630 = vpop.f32.mrf.mxu0
  %631 = vmatprep.mubr.f32.mxu0 %v467
  %632 = vmatmul.mubr.f32.gmra.mxu0 %v466
  %v633 = vpop.f32.mrf.mxu0
  %v634 = vadd.f32 %v549, %v633
  %v635 = vpop.f32.mrf.mxu0
  %636 = vmatprep.mubr.f32.mxu0 %v471
  %637 = vmatmul.mubr.f32.gmra.mxu0 %v470
  %v638 = vpop.f32.mrf.mxu0
  %v639 = vadd.f32 %v554, %v638
  %v640 = vpop.f32.mrf.mxu0
  %641 = vdwg.mxu0
  %v642 = vmax.f32 %v451, %v624
  %v643 = vmax.f32 %v452, %v629
  %v644 = vmax.f32 %v453, %v634
  %v645 = vmax.f32 %v454, %v639
  %s646 = scalar_lea.vmem %s0, 384
  %v647 = vld [vmem:[%s646] sm:$0xff]
  %v648 = vld [vmem:[%s646 + $0x8] sm:$0xff]
  %v649 = vld [vmem:[%s646 + $0x10] sm:$0xff]
  %v650 = vld [vmem:[%s646 + $0x18] sm:$0xff]
  %v651 = vld [vmem:[%s646 + $0x20] sm:$0xff]
  %v652 = vld [vmem:[%s646 + $0x28] sm:$0xff]
  %v653 = vld [vmem:[%s646 + $0x30] sm:$0xff]
  %v654 = vld [vmem:[%s646 + $0x38] sm:$0xff]
  %v655 = vld [vmem:[%s646 + $0x40] sm:$0xff]
  %v656 = vld [vmem:[%s646 + $0x48] sm:$0xff]
  %v657 = vld [vmem:[%s646 + $0x50] sm:$0xff]
  %v658 = vld [vmem:[%s646 + $0x58] sm:$0xff]
  %v659 = vld [vmem:[%s646 + $0x60] sm:$0xff]
  %v660 = vld [vmem:[%s646 + $0x68] sm:$0xff]
  %v661 = vld [vmem:[%s646 + $0x70] sm:$0xff]
  %v662 = vld [vmem:[%s646 + $0x78] sm:$0xff]
  %663 = vmatprep.subr.mxu0 0.0
  %664 = vmatpush1.msra.mxu0 %v29
  %665 = vmatprep.subr.mxu0 0.0
  %666 = vmatpush1.msra.mxu0 %v28
  %667 = vmatprep.subr.mxu0 0.0
  %668 = vmatpush1.msra.mxu0 %v27
  %669 = vmatprep.subr.mxu0 0.0
  %670 = vmatpush1.msra.mxu0 %v26
  %671 = vmatprep.subr.mxu0 0.0
  %672 = vmatpush1.msra.mxu0 %v25
  %673 = vmatprep.subr.mxu0 0.0
  %674 = vmatpush1.msra.mxu0 %v24
  %675 = vmatprep.subr.mxu0 0.0
  %676 = vmatpush1.msra.mxu0 %v23
  %677 = vmatprep.subr.mxu0 0.0
  %678 = vmatpush1.msra.mxu0 %v22
  %679 = vmatprep.subr.mxu0 0.0
  %680 = vmatpush1.msra.mxu0 %v21
  %681 = vmatprep.subr.mxu0 0.0
  %682 = vmatpush1.msra.mxu0 %v20
  %683 = vmatprep.subr.mxu0 0.0
  %684 = vmatpush1.msra.mxu0 %v19
  %685 = vmatprep.subr.mxu0 0.0
  %686 = vmatpush1.msra.mxu0 %v18
  %687 = vmatprep.subr.mxu0 0.0
  %688 = vmatpush1.msra.mxu0 %v17
  %689 = vmatprep.subr.mxu0 0.0
  %690 = vmatpush1.msra.mxu0 %v16
  %691 = vmatprep.subr.mxu0 0.0
  %692 = vmatpush1.msra.mxu0 %v15
  %693 = vmatprep.subr.mxu0 0.0
  %694 = vmatpush1.msra.mxu0 %v14
  %695 = vmatprep.subr.mxu0 0.0
  %696 = vmatpush2.msra.mxu0 %v45
  %697 = vmatprep.subr.mxu0 0.0
  %698 = vmatpush2.msra.mxu0 %v44
  %699 = vmatprep.subr.mxu0 0.0
  %700 = vmatpush2.msra.mxu0 %v43
  %701 = vmatprep.subr.mxu0 0.0
  %702 = vmatpush2.msra.mxu0 %v42
  %703 = vmatprep.subr.mxu0 0.0
  %704 = vmatpush2.msra.mxu0 %v41
  %705 = vmatprep.subr.mxu0 0.0
  %706 = vmatpush2.msra.mxu0 %v40
  %707 = vmatprep.subr.mxu0 0.0
  %708 = vmatpush2.msra.mxu0 %v39
  %709 = vmatprep.subr.mxu0 0.0
  %710 = vmatpush2.msra.mxu0 %v38
  %711 = vmatprep.subr.mxu0 0.0
  %712 = vmatpush2.msra.mxu0 %v37
  %713 = vmatprep.subr.mxu0 0.0
  %714 = vmatpush2.msra.mxu0 %v36
  %715 = vmatprep.subr.mxu0 0.0
  %716 = vmatpush2.msra.mxu0 %v35
  %717 = vmatprep.subr.mxu0 0.0
  %718 = vmatpush2.msra.mxu0 %v34
  %719 = vmatprep.subr.mxu0 0.0
  %720 = vmatpush2.msra.mxu0 %v33
  %721 = vmatprep.subr.mxu0 0.0
  %722 = vmatpush2.msra.mxu0 %v32
  %723 = vmatprep.subr.mxu0 0.0
  %724 = vmatpush2.msra.mxu0 %v31
  %725 = vmatprep.subr.mxu0 0.0
  %726 = vmatpush2.msra.mxu0 %v30
  %727 = vmatprep.mubr.f32.mxu0 %v648
  %728 = vmatmul.mubr.f32.gmra.mxu0 %v647
  %v729 = vpop.f32.mrf.mxu0
  %v730 = vadd.f32 0.0, %v729
  %v731 = vpop.f32.mrf.mxu0
  %732 = vmatprep.mubr.f32.mxu0 %v652
  %733 = vmatmul.mubr.f32.gmra.mxu0 %v651
  %v734 = vpop.f32.mrf.mxu0
  %v735 = vadd.f32 0.0, %v734
  %v736 = vpop.f32.mrf.mxu0
  %737 = vmatprep.mubr.f32.mxu0 %v656
  %738 = vmatmul.mubr.f32.gmra.mxu0 %v655
  %v739 = vpop.f32.mrf.mxu0
  %v740 = vadd.f32 0.0, %v739
  %v741 = vpop.f32.mrf.mxu0
  %742 = vmatprep.mubr.f32.mxu0 %v660
  %743 = vmatmul.mubr.f32.gmra.mxu0 %v659
  %v744 = vpop.f32.mrf.mxu0
  %v745 = vadd.f32 0.0, %v744
  %v746 = vpop.f32.mrf.mxu0
  %747 = vdwg.mxu0
  %748 = vmatprep.subr.mxu0 0.0
  %749 = vmatpush1.msra.mxu0 %v61
  %750 = vmatprep.subr.mxu0 0.0
  %751 = vmatpush1.msra.mxu0 %v60
  %752 = vmatprep.subr.mxu0 0.0
  %753 = vmatpush1.msra.mxu0 %v59
  %754 = vmatprep.subr.mxu0 0.0
  %755 = vmatpush1.msra.mxu0 %v58
  %756 = vmatprep.subr.mxu0 0.0
  %757 = vmatpush1.msra.mxu0 %v57
  %758 = vmatprep.subr.mxu0 0.0
  %759 = vmatpush1.msra.mxu0 %v56
  %760 = vmatprep.subr.mxu0 0.0
  %761 = vmatpush1.msra.mxu0 %v55
  %762 = vmatprep.subr.mxu0 0.0
  %763 = vmatpush1.msra.mxu0 %v54
  %764 = vmatprep.subr.mxu0 0.0
  %765 = vmatpush1.msra.mxu0 %v53
  %766 = vmatprep.subr.mxu0 0.0
  %767 = vmatpush1.msra.mxu0 %v52
  %768 = vmatprep.subr.mxu0 0.0
  %769 = vmatpush1.msra.mxu0 %v51
  %770 = vmatprep.subr.mxu0 0.0
  %771 = vmatpush1.msra.mxu0 %v50
  %772 = vmatprep.subr.mxu0 0.0
  %773 = vmatpush1.msra.mxu0 %v49
  %774 = vmatprep.subr.mxu0 0.0
  %775 = vmatpush1.msra.mxu0 %v48
  %776 = vmatprep.subr.mxu0 0.0
  %777 = vmatpush1.msra.mxu0 %v47
  %778 = vmatprep.subr.mxu0 0.0
  %779 = vmatpush1.msra.mxu0 %v46
  %780 = vmatprep.subr.mxu0 0.0
  %781 = vmatpush2.msra.mxu0 %v77
  %782 = vmatprep.subr.mxu0 0.0
  %783 = vmatpush2.msra.mxu0 %v76
  %784 = vmatprep.subr.mxu0 0.0
  %785 = vmatpush2.msra.mxu0 %v75
  %786 = vmatprep.subr.mxu0 0.0
  %787 = vmatpush2.msra.mxu0 %v74
  %788 = vmatprep.subr.mxu0 0.0
  %789 = vmatpush2.msra.mxu0 %v73
  %790 = vmatprep.subr.mxu0 0.0
  %791 = vmatpush2.msra.mxu0 %v72
  %792 = vmatprep.subr.mxu0 0.0
  %793 = vmatpush2.msra.mxu0 %v71
  %794 = vmatprep.subr.mxu0 0.0
  %795 = vmatpush2.msra.mxu0 %v70
  %796 = vmatprep.subr.mxu0 0.0
  %797 = vmatpush2.msra.mxu0 %v69
  %798 = vmatprep.subr.mxu0 0.0
  %799 = vmatpush2.msra.mxu0 %v68
  %800 = vmatprep.subr.mxu0 0.0
  %801 = vmatpush2.msra.mxu0 %v67
  %802 = vmatprep.subr.mxu0 0.0
  %803 = vmatpush2.msra.mxu0 %v66
  %804 = vmatprep.subr.mxu0 0.0
  %805 = vmatpush2.msra.mxu0 %v65
  %806 = vmatprep.subr.mxu0 0.0
  %807 = vmatpush2.msra.mxu0 %v64
  %808 = vmatprep.subr.mxu0 0.0
  %809 = vmatpush2.msra.mxu0 %v63
  %810 = vmatprep.subr.mxu0 0.0
  %811 = vmatpush2.msra.mxu0 %v62
  %812 = vmatprep.mubr.f32.mxu0 %v650
  %813 = vmatmul.mubr.f32.gmra.mxu0 %v649
  %v814 = vpop.f32.mrf.mxu0
  %v815 = vadd.f32 %v730, %v814
  %v816 = vpop.f32.mrf.mxu0
  %817 = vmatprep.mubr.f32.mxu0 %v654
  %818 = vmatmul.mubr.f32.gmra.mxu0 %v653
  %v819 = vpop.f32.mrf.mxu0
  %v820 = vadd.f32 %v735, %v819
  %v821 = vpop.f32.mrf.mxu0
  %822 = vmatprep.mubr.f32.mxu0 %v658
  %823 = vmatmul.mubr.f32.gmra.mxu0 %v657
  %v824 = vpop.f32.mrf.mxu0
  %v825 = vadd.f32 %v740, %v824
  %v826 = vpop.f32.mrf.mxu0
  %827 = vmatprep.mubr.f32.mxu0 %v662
  %828 = vmatmul.mubr.f32.gmra.mxu0 %v661
  %v829 = vpop.f32.mrf.mxu0
  %v830 = vadd.f32 %v745, %v829
  %v831 = vpop.f32.mrf.mxu0
  %832 = vdwg.mxu0
  %v833 = vmax.f32 %v642, %v815
  %v834 = vmax.f32 %v643, %v820
  %v835 = vmax.f32 %v644, %v825
  %v836 = vmax.f32 %v645, %v830
  %v837 = vld [vmem:[%s2] sm:$0x1]
  %v839 = vlaneseq
  %v840 = vshrl.u32 %v839, 7
  %v841 = vsub.s32 0, %v840
  %v842 = vrot.slane %v837, %v841
  %v844 = vadd.f32 %v833, %v842
  %v845 = vadd.f32 %v834, %v842
  %v846 = vadd.f32 %v835, %v842
  %v847 = vadd.f32 %v836, %v842
  %v848 = vmax.f32 %v844, 0.0
  %v849 = vmax.f32 %v845, 0.0
  %v850 = vmax.f32 %v846, 0.0
  %v851 = vmax.f32 %v847, 0.0
  %852 = vst [vmem:[%s3] sm:$0xff] %v848
  %853 = vst [vmem:[%s3 + $0x8] sm:$0xff] %v849
  %854 = vst [vmem:[%s3 + $0x10] sm:$0xff] %v850
  %855 = vst [vmem:[%s3 + $0x18] sm:$0xff] %v851
  // Predicated region
  $region14: #{lenet_forward.4} parent=0 // pred_check
    _
  $region15: #{lenet_forward.4} parent=0 // pred_check_branch
    %857 = sbr.rel (0) target = $region17
  $region16: #{lenet_forward.4} parent=0 // pred_region
    _
  $region17: #{lenet_forward.4} parent=0 // pred_fallthru
    _
  // Predicated region
  $region18: #{lenet_forward.4} parent=0 // pred_check
    _
  $region19: #{lenet_forward.4} parent=0 // pred_check_branch
    %859 = sbr.rel (0) target = $region21
  $region20: #{lenet_forward.4} parent=0 // pred_region
    _
  $region21: #{lenet_forward.4} parent=0 // pred_fallthru
    _

// kernel: lenet_forward.5
$region0: #{lenet_forward.5}
  #allocation0 [shape = 'u32[]', space=smem, size = 0x4, offset = 0x4, fixed_abs, tag = 'smem constant byte address 0x4 - core index']
  #allocation1 [shape = 'u32[144,128]{1,0:T(1,128)}', space=vmem, size = 0x12000, scoped, tag = 'internal scratch']
  %s0 = inlined_call_operand.vmem [shape: f32[2,896], index: 0, kind: input, shape index: {}]
  %s1 = inlined_call_operand.vmem [shape: f32[896,512], index: 1, kind: input, shape index: {}]
  %s2 = inlined_call_operand.vmem [shape: f32[1,512], index: 2, kind: input, shape index: {}]
  %s3 = inlined_call_operand.vmem [shape: f32[512,128], index: 3, kind: input, shape index: {}]
  %s4 = inlined_call_operand.vmem [shape: f32[1,128], index: 4, kind: input, shape index: {}]
  %s5 = inlined_call_operand.hbm [shape: f32[2,128], index: 5, kind: output, shape index: {}]
  %s6 = sld [smem:[#allocation0]]
  $region30: #{lenet_forward.5} parent=0
    _
  %s8 = ssub.s32 1, %s6
  %s9 = scalar_select 0, %s8, %s6
  $region1: #{lenet_forward.5} parent=0
    #allocation2 [shape = 'u8[1024]{0}', space=vmem, size = 0x400, scoped, tag = 'output window, operand 0, single buffered']
    #allocation3 [shape = 's32[1]{0}', space=sflag, size = 0x4, scoped, tag = 'scoped memory for lenet_forward.5']
    %10 = vsyncpa [#allocation3], 0
    // Predicated region
    $region2: #{lenet_forward.5} parent=1 // pred_check
      _
    $region3: #{lenet_forward.5} parent=1 // pred_check_branch
      %12 = sbr.rel (0) target = $region5
    $region4: #{lenet_forward.5} parent=1 // pred_region
      _
    $region5: #{lenet_forward.5} parent=1 // pred_fallthru
      _
    // Predicated region
    $region6: #{lenet_forward.5} parent=1 // pred_check
      _
    $region7: #{lenet_forward.5} parent=1 // pred_check_branch
      %14 = sbr.rel (0) target = $region9
    $region8: #{lenet_forward.5} parent=1 // pred_region
      _
    $region9: #{lenet_forward.5} parent=1 // pred_fallthru
      _
    // Predicated region
    $region10: #{lenet_forward.5} parent=1 // pred_check
      _
    $region11: #{lenet_forward.5} parent=1 // pred_check_branch
      %16 = sbr.rel (0) target = $region13
    $region12: #{lenet_forward.5} parent=1 // pred_region
      _
    $region13: #{lenet_forward.5} parent=1 // pred_fallthru
      _
    // Predicated region
    $region14: #{lenet_forward.5} parent=1 // pred_check
      _
    $region15: #{lenet_forward.5} parent=1 // pred_check_branch
      %18 = sbr.rel (0) target = $region17
    $region16: #{lenet_forward.5} parent=1 // pred_region
      _
    $region17: #{lenet_forward.5} parent=1 // pred_fallthru
      _
    // Predicated region
    $region18: #{lenet_forward.5} parent=1 // pred_check
      _
    $region19: #{lenet_forward.5} parent=1 // pred_check_branch
      %20 = sbr.rel (0) target = $region21
    $region20: #{lenet_forward.5} parent=1 // pred_region
      _
    $region21: #{lenet_forward.5} parent=1 // pred_fallthru
      _
    %v21 = vld [vmem:[%s0] sm:$0xff]
    %v22 = vld [vmem:[%s0 + $0x8] sm:$0x3f]
    %v23 = vld [vmem:[%s1] sm:$0xff]
    %v24 = vld [vmem:[%s1 + $0x8] sm:$0xff]
    %v25 = vld [vmem:[%s1 + $0x10] sm:$0xff]
    %v26 = vld [vmem:[%s1 + $0x18] sm:$0xff]
    %v27 = vld [vmem:[%s1 + $0x20] sm:$0xff]
    %v28 = vld [vmem:[%s1 + $0x28] sm:$0xff]
    %v29 = vld [vmem:[%s1 + $0x30] sm:$0xff]
    %v30 = vld [vmem:[%s1 + $0x38] sm:$0xff]
    %v31 = vld [vmem:[%s1 + $0x40] sm:$0xff]
    %v32 = vld [vmem:[%s1 + $0x48] sm:$0xff]
    %v33 = vld [vmem:[%s1 + $0x50] sm:$0xff]
    %v34 = vld [vmem:[%s1 + $0x58] sm:$0xff]
    %v35 = vld [vmem:[%s1 + $0x60] sm:$0xff]
    %v36 = vld [vmem:[%s1 + $0x68] sm:$0xff]
    %v37 = vld [vmem:[%s1 + $0x70] sm:$0xff]
    %v38 = vld [vmem:[%s1 + $0x78] sm:$0xff]
    %v39 = vld [vmem:[%s1 + $0x80] sm:$0xff]
    %v40 = vld [vmem:[%s1 + $0x88] sm:$0xff]
    %v41 = vld [vmem:[%s1 + $0x90] sm:$0xff]
    %v42 = vld [vmem:[%s1 + $0x98] sm:$0xff]
    %v43 = vld [vmem:[%s1 + $0xa0] sm:$0xff]
    %v44 = vld [vmem:[%s1 + $0xa8] sm:$0xff]
    %v45 = vld [vmem:[%s1 + $0xb0] sm:$0xff]
    %v46 = vld [vmem:[%s1 + $0xb8] sm:$0xff]
    %v47 = vld [vmem:[%s1 + $0xc0] sm:$0xff]
    %v48 = vld [vmem:[%s1 + $0xc8] sm:$0xff]
    %v49 = vld [vmem:[%s1 + $0xd0] sm:$0xff]
    %v50 = vld [vmem:[%s1 + $0xd8] sm:$0xff]
    %v51 = vld [vmem:[%s1 + $0xe0] sm:$0xff]
    %v52 = vld [vmem:[%s1 + $0xe8] sm:$0xff]
    %v53 = vld [vmem:[%s1 + $0xf0] sm:$0xff]
    %v54 = vld [vmem:[%s1 + $0xf8] sm:$0xff]
    %v55 = vld [vmem:[%s1 + $0x100] sm:$0xff]
    %v56 = vld [vmem:[%s1 + $0x108] sm:$0xff]
    %v57 = vld [vmem:[%s1 + $0x110] sm:$0xff]
    %v58 = vld [vmem:[%s1 + $0x118] sm:$0xff]
    %v59 = vld [vmem:[%s1 + $0x120] sm:$0xff]
    %v60 = vld [vmem:[%s1 + $0x128] sm:$0xff]
    %v61 = vld [vmem:[%s1 + $0x130] sm:$0xff]
    %v62 = vld [vmem:[%s1 + $0x138] sm:$0xff]
    %v63 = vld [vmem:[%s1 + $0x140] sm:$0xff]
    %v64 = vld [vmem:[%s1 + $0x148] sm:$0xff]
    %v65 = vld [vmem:[%s1 + $0x150] sm:$0xff]
    %v66 = vld [vmem:[%s1 + $0x158] sm:$0xff]
    %v67 = vld [vmem:[%s1 + $0x160] sm:$0xff]
    %v68 = vld [vmem:[%s1 + $0x168] sm:$0xff]
    %v69 = vld [vmem:[%s1 + $0x170] sm:$0xff]
    %v70 = vld [vmem:[%s1 + $0x178] sm:$0xff]
    %v71 = vld [vmem:[%s1 + $0x180] sm:$0xff]
    %v72 = vld [vmem:[%s1 + $0x188] sm:$0xff]
    %v73 = vld [vmem:[%s1 + $0x190] sm:$0xff]
    %v74 = vld [vmem:[%s1 + $0x198] sm:$0xff]
    %v75 = vld [vmem:[%s1 + $0x1a0] sm:$0xff]
    %v76 = vld [vmem:[%s1 + $0x1a8] sm:$0xff]
    %v77 = vld [vmem:[%s1 + $0x1b0] sm:$0xff]
    %v78 = vld [vmem:[%s1 + $0x1b8] sm:$0xff]
    %v79 = vld [vmem:[%s1 + $0x1c0] sm:$0xff]
    %v80 = vld [vmem:[%s1 + $0x1c8] sm:$0xff]
    %v81 = vld [vmem:[%s1 + $0x1d0] sm:$0xff]
    %v82 = vld [vmem:[%s1 + $0x1d8] sm:$0xff]
    %v83 = vld [vmem:[%s1 + $0x1e0] sm:$0xff]
    %v84 = vld [vmem:[%s1 + $0x1e8] sm:$0xff]
    %v85 = vld [vmem:[%s1 + $0x1f0] sm:$0xff]
    %v86 = vld [vmem:[%s1 + $0x1f8] sm:$0xff]
    %v87 = vld [vmem:[%s1 + $0x200] sm:$0xff]
    %v88 = vld [vmem:[%s1 + $0x208] sm:$0xff]
    %v89 = vld [vmem:[%s1 + $0x210] sm:$0xff]
    %v90 = vld [vmem:[%s1 + $0x218] sm:$0xff]
    %v91 = vld [vmem:[%s1 + $0x220] sm:$0xff]
    %v92 = vld [vmem:[%s1 + $0x228] sm:$0xff]
    %v93 = vld [vmem:[%s1 + $0x230] sm:$0xff]
    %v94 = vld [vmem:[%s1 + $0x238] sm:$0xff]
    %v95 = vld [vmem:[%s1 + $0x240] sm:$0xff]
    %v96 = vld [vmem:[%s1 + $0x248] sm:$0xff]
    %v97 = vld [vmem:[%s1 + $0x250] sm:$0xff]
    %v98 = vld [vmem:[%s1 + $0x258] sm:$0xff]
    %v99 = vld [vmem:[%s1 + $0x260] sm:$0xff]
    %v100 = vld [vmem:[%s1 + $0x268] sm:$0xff]
    %v101 = vld [vmem:[%s1 + $0x270] sm:$0xff]
    %v102 = vld [vmem:[%s1 + $0x278] sm:$0xff]
    %v103 = vld [vmem:[%s1 + $0x280] sm:$0xff]
    %v104 = vld [vmem:[%s1 + $0x288] sm:$0xff]
    %v105 = vld [vmem:[%s1 + $0x290] sm:$0xff]
    %v106 = vld [vmem:[%s1 + $0x298] sm:$0xff]
    %v107 = vld [vmem:[%s1 + $0x2a0] sm:$0xff]
    %v108 = vld [vmem:[%s1 + $0x2a8] sm:$0xff]
    %v109 = vld [vmem:[%s1 + $0x2b0] sm:$0xff]
    %v110 = vld [vmem:[%s1 + $0x2b8] sm:$0xff]
    %v111 = vld [vmem:[%s1 + $0x2c0] sm:$0xff]
    %v112 = vld [vmem:[%s1 + $0x2c8] sm:$0xff]
    %v113 = vld [vmem:[%s1 + $0x2d0] sm:$0xff]
    %v114 = vld [vmem:[%s1 + $0x2d8] sm:$0xff]
    %v115 = vld [vmem:[%s1 + $0x2e0] sm:$0xff]
    %v116 = vld [vmem:[%s1 + $0x2e8] sm:$0xff]
    %v117 = vld [vmem:[%s1 + $0x2f0] sm:$0xff]
    %v118 = vld [vmem:[%s1 + $0x2f8] sm:$0xff]
    %v119 = vld [vmem:[%s1 + $0x300] sm:$0xff]
    %v120 = vld [vmem:[%s1 + $0x308] sm:$0xff]
    %v121 = vld [vmem:[%s1 + $0x310] sm:$0xff]
    %v122 = vld [vmem:[%s1 + $0x318] sm:$0xff]
    %v123 = vld [vmem:[%s1 + $0x320] sm:$0xff]
    %v124 = vld [vmem:[%s1 + $0x328] sm:$0xff]
    %v125 = vld [vmem:[%s1 + $0x330] sm:$0xff]
    %v126 = vld [vmem:[%s1 + $0x338] sm:$0xff]
    %v127 = vld [vmem:[%s1 + $0x340] sm:$0xff]
    %v128 = vld [vmem:[%s1 + $0x348] sm:$0xff]
    %v129 = vld [vmem:[%s1 + $0x350] sm:$0xff]
    %v130 = vld [vmem:[%s1 + $0x358] sm:$0xff]
    %v131 = vld [vmem:[%s1 + $0x360] sm:$0xff]
    %v132 = vld [vmem:[%s1 + $0x368] sm:$0xff]
    %v133 = vld [vmem:[%s1 + $0x370] sm:$0xff]
    %v134 = vld [vmem:[%s1 + $0x378] sm:$0xff]
    %v135 = vld [vmem:[%s1 + $0x380] sm:$0xff]
    %v136 = vld [vmem:[%s1 + $0x388] sm:$0xff]
    %v137 = vld [vmem:[%s1 + $0x390] sm:$0xff]
    %v138 = vld [vmem:[%s1 + $0x398] sm:$0xff]
    %v139 = vld [vmem:[%s1 + $0x3a0] sm:$0xff]
    %v140 = vld [vmem:[%s1 + $0x3a8] sm:$0xff]
    %v141 = vld [vmem:[%s1 + $0x3b0] sm:$0xff]
    %v142 = vld [vmem:[%s1 + $0x3b8] sm:$0xff]
    %v143 = vld [vmem:[%s1 + $0x3c0] sm:$0xff]
    %v144 = vld [vmem:[%s1 + $0x3c8] sm:$0xff]
    %v145 = vld [vmem:[%s1 + $0x3d0] sm:$0xff]
    %v146 = vld [vmem:[%s1 + $0x3d8] sm:$0xff]
    %v147 = vld [vmem:[%s1 + $0x3e0] sm:$0xff]
    %v148 = vld [vmem:[%s1 + $0x3e8] sm:$0xff]
    %v149 = vld [vmem:[%s1 + $0x3f0] sm:$0xff]
    %v150 = vld [vmem:[%s1 + $0x3f8] sm:$0xff]
    %v151 = vld [vmem:[%s1 + $0x400] sm:$0xff]
    %v152 = vld [vmem:[%s1 + $0x408] sm:$0xff]
    %v153 = vld [vmem:[%s1 + $0x410] sm:$0xff]
    %v154 = vld [vmem:[%s1 + $0x418] sm:$0xff]
    %v155 = vld [vmem:[%s1 + $0x420] sm:$0xff]
    %v156 = vld [vmem:[%s1 + $0x428] sm:$0xff]
    %v157 = vld [vmem:[%s1 + $0x430] sm:$0xff]
    %v158 = vld [vmem:[%s1 + $0x438] sm:$0xff]
    %v159 = vld [vmem:[%s1 + $0x440] sm:$0xff]
    %v160 = vld [vmem:[%s1 + $0x448] sm:$0xff]
    %v161 = vld [vmem:[%s1 + $0x450] sm:$0xff]
    %v162 = vld [vmem:[%s1 + $0x458] sm:$0xff]
    %v163 = vld [vmem:[%s1 + $0x460] sm:$0xff]
    %v164 = vld [vmem:[%s1 + $0x468] sm:$0xff]
    %v165 = vld [vmem:[%s1 + $0x470] sm:$0xff]
    %v166 = vld [vmem:[%s1 + $0x478] sm:$0xff]
    %v167 = vld [vmem:[%s1 + $0x480] sm:$0xff]
    %v168 = vld [vmem:[%s1 + $0x488] sm:$0xff]
    %v169 = vld [vmem:[%s1 + $0x490] sm:$0xff]
    %v170 = vld [vmem:[%s1 + $0x498] sm:$0xff]
    %v171 = vld [vmem:[%s1 + $0x4a0] sm:$0xff]
    %v172 = vld [vmem:[%s1 + $0x4a8] sm:$0xff]
    %v173 = vld [vmem:[%s1 + $0x4b0] sm:$0xff]
    %v174 = vld [vmem:[%s1 + $0x4b8] sm:$0xff]
    %v175 = vld [vmem:[%s1 + $0x4c0] sm:$0xff]
    %v176 = vld [vmem:[%s1 + $0x4c8] sm:$0xff]
    %v177 = vld [vmem:[%s1 + $0x4d0] sm:$0xff]
    %v178 = vld [vmem:[%s1 + $0x4d8] sm:$0xff]
    %v179 = vld [vmem:[%s1 + $0x4e0] sm:$0xff]
    %v180 = vld [vmem:[%s1 + $0x4e8] sm:$0xff]
    %v181 = vld [vmem:[%s1 + $0x4f0] sm:$0xff]
    %v182 = vld [vmem:[%s1 + $0x4f8] sm:$0xff]
    %v183 = vld [vmem:[%s1 + $0x500] sm:$0xff]
    %v184 = vld [vmem:[%s1 + $0x508] sm:$0xff]
    %v185 = vld [vmem:[%s1 + $0x510] sm:$0xff]
    %v186 = vld [vmem:[%s1 + $0x518] sm:$0xff]
    %v187 = vld [vmem:[%s1 + $0x520] sm:$0xff]
    %v188 = vld [vmem:[%s1 + $0x528] sm:$0xff]
    %v189 = vld [vmem:[%s1 + $0x530] sm:$0xff]
    %v190 = vld [vmem:[%s1 + $0x538] sm:$0xff]
    %v191 = vld [vmem:[%s1 + $0x540] sm:$0xff]
    %v192 = vld [vmem:[%s1 + $0x548] sm:$0xff]
    %v193 = vld [vmem:[%s1 + $0x550] sm:$0xff]
    %v194 = vld [vmem:[%s1 + $0x558] sm:$0xff]
    %v195 = vld [vmem:[%s1 + $0x560] sm:$0xff]
    %v196 = vld [vmem:[%s1 + $0x568] sm:$0xff]
    %v197 = vld [vmem:[%s1 + $0x570] sm:$0xff]
    %v198 = vld [vmem:[%s1 + $0x578] sm:$0xff]
    %v199 = vld [vmem:[%s1 + $0x580] sm:$0xff]
    %v200 = vld [vmem:[%s1 + $0x588] sm:$0xff]
    %v201 = vld [vmem:[%s1 + $0x590] sm:$0xff]
    %v202 = vld [vmem:[%s1 + $0x598] sm:$0xff]
    %v203 = vld [vmem:[%s1 + $0x5a0] sm:$0xff]
    %v204 = vld [vmem:[%s1 + $0x5a8] sm:$0xff]
    %v205 = vld [vmem:[%s1 + $0x5b0] sm:$0xff]
    %v206 = vld [vmem:[%s1 + $0x5b8] sm:$0xff]
    %v207 = vld [vmem:[%s1 + $0x5c0] sm:$0xff]
    %v208 = vld [vmem:[%s1 + $0x5c8] sm:$0xff]
    %v209 = vld [vmem:[%s1 + $0x5d0] sm:$0xff]
    %v210 = vld [vmem:[%s1 + $0x5d8] sm:$0xff]
    %v211 = vld [vmem:[%s1 + $0x5e0] sm:$0xff]
    %v212 = vld [vmem:[%s1 + $0x5e8] sm:$0xff]
    %v213 = vld [vmem:[%s1 + $0x5f0] sm:$0xff]
    %v214 = vld [vmem:[%s1 + $0x5f8] sm:$0xff]
    %v215 = vld [vmem:[%s1 + $0x600] sm:$0xff]
    %v216 = vld [vmem:[%s1 + $0x608] sm:$0xff]
    %v217 = vld [vmem:[%s1 + $0x610] sm:$0xff]
    %v218 = vld [vmem:[%s1 + $0x618] sm:$0xff]
    %v219 = vld [vmem:[%s1 + $0x620] sm:$0xff]
    %v220 = vld [vmem:[%s1 + $0x628] sm:$0xff]
    %v221 = vld [vmem:[%s1 + $0x630] sm:$0xff]
    %v222 = vld [vmem:[%s1 + $0x638] sm:$0xff]
    %v223 = vld [vmem:[%s1 + $0x640] sm:$0xff]
    %v224 = vld [vmem:[%s1 + $0x648] sm:$0xff]
    %v225 = vld [vmem:[%s1 + $0x650] sm:$0xff]
    %v226 = vld [vmem:[%s1 + $0x658] sm:$0xff]
    %v227 = vld [vmem:[%s1 + $0x660] sm:$0xff]
    %v228 = vld [vmem:[%s1 + $0x668] sm:$0xff]
    %v229 = vld [vmem:[%s1 + $0x670] sm:$0xff]
    %v230 = vld [vmem:[%s1 + $0x678] sm:$0xff]
    %v231 = vld [vmem:[%s1 + $0x680] sm:$0xff]
    %v232 = vld [vmem:[%s1 + $0x688] sm:$0xff]
    %v233 = vld [vmem:[%s1 + $0x690] sm:$0xff]
    %v234 = vld [vmem:[%s1 + $0x698] sm:$0xff]
    %v235 = vld [vmem:[%s1 + $0x6a0] sm:$0xff]
    %v236 = vld [vmem:[%s1 + $0x6a8] sm:$0xff]
    %v237 = vld [vmem:[%s1 + $0x6b0] sm:$0xff]
    %v238 = vld [vmem:[%s1 + $0x6b8] sm:$0xff]
    %v239 = vld [vmem:[%s1 + $0x6c0] sm:$0xff]
    %v240 = vld [vmem:[%s1 + $0x6c8] sm:$0xff]
    %v241 = vld [vmem:[%s1 + $0x6d0] sm:$0xff]
    %v242 = vld [vmem:[%s1 + $0x6d8] sm:$0xff]
    %v243 = vld [vmem:[%s1 + $0x6e0] sm:$0xff]
    %v244 = vld [vmem:[%s1 + $0x6e8] sm:$0xff]
    %v245 = vld [vmem:[%s1 + $0x6f0] sm:$0xff]
    %v246 = vld [vmem:[%s1 + $0x6f8] sm:$0xff]
    %v247 = vld [vmem:[%s1 + $0x700] sm:$0xff]
    %v248 = vld [vmem:[%s1 + $0x708] sm:$0xff]
    %v249 = vld [vmem:[%s1 + $0x710] sm:$0xff]
    %v250 = vld [vmem:[%s1 + $0x718] sm:$0xff]
    %v251 = vld [vmem:[%s1 + $0x720] sm:$0xff]
    %v252 = vld [vmem:[%s1 + $0x728] sm:$0xff]
    %v253 = vld [vmem:[%s1 + $0x730] sm:$0xff]
    %v254 = vld [vmem:[%s1 + $0x738] sm:$0xff]
    %v255 = vld [vmem:[%s1 + $0x740] sm:$0xff]
    %v256 = vld [vmem:[%s1 + $0x748] sm:$0xff]
    %v257 = vld [vmem:[%s1 + $0x750] sm:$0xff]
    %v258 = vld [vmem:[%s1 + $0x758] sm:$0xff]
    %v259 = vld [vmem:[%s1 + $0x760] sm:$0xff]
    %v260 = vld [vmem:[%s1 + $0x768] sm:$0xff]
    %v261 = vld [vmem:[%s1 + $0x770] sm:$0xff]
    %v262 = vld [vmem:[%s1 + $0x778] sm:$0xff]
    %v263 = vld [vmem:[%s1 + $0x780] sm:$0xff]
    %v264 = vld [vmem:[%s1 + $0x788] sm:$0xff]
    %v265 = vld [vmem:[%s1 + $0x790] sm:$0xff]
    %v266 = vld [vmem:[%s1 + $0x798] sm:$0xff]
    %v267 = vld [vmem:[%s1 + $0x7a0] sm:$0xff]
    %v268 = vld [vmem:[%s1 + $0x7a8] sm:$0xff]
    %v269 = vld [vmem:[%s1 + $0x7b0] sm:$0xff]
    %v270 = vld [vmem:[%s1 + $0x7b8] sm:$0xff]
    %v271 = vld [vmem:[%s1 + $0x7c0] sm:$0xff]
    %v272 = vld [vmem:[%s1 + $0x7c8] sm:$0xff]
    %v273 = vld [vmem:[%s1 + $0x7d0] sm:$0xff]
    %v274 = vld [vmem:[%s1 + $0x7d8] sm:$0xff]
    %v275 = vld [vmem:[%s1 + $0x7e0] sm:$0xff]
    %v276 = vld [vmem:[%s1 + $0x7e8] sm:$0xff]
    %v277 = vld [vmem:[%s1 + $0x7f0] sm:$0xff]
    %v278 = vld [vmem:[%s1 + $0x7f8] sm:$0xff]
    %v279 = vld [vmem:[%s1 + $0x800] sm:$0xff]
    %v280 = vld [vmem:[%s1 + $0x808] sm:$0xff]
    %v281 = vld [vmem:[%s1 + $0x810] sm:$0xff]
    %v282 = vld [vmem:[%s1 + $0x818] sm:$0xff]
    %v283 = vld [vmem:[%s1 + $0x820] sm:$0xff]
    %v284 = vld [vmem:[%s1 + $0x828] sm:$0xff]
    %v285 = vld [vmem:[%s1 + $0x830] sm:$0xff]
    %v286 = vld [vmem:[%s1 + $0x838] sm:$0xff]
    %v287 = vld [vmem:[%s1 + $0x840] sm:$0xff]
    %v288 = vld [vmem:[%s1 + $0x848] sm:$0xff]
    %v289 = vld [vmem:[%s1 + $0x850] sm:$0xff]
    %v290 = vld [vmem:[%s1 + $0x858] sm:$0xff]
    %v291 = vld [vmem:[%s1 + $0x860] sm:$0xff]
    %v292 = vld [vmem:[%s1 + $0x868] sm:$0xff]
    %v293 = vld [vmem:[%s1 + $0x870] sm:$0xff]
    %v294 = vld [vmem:[%s1 + $0x878] sm:$0xff]
    %v295 = vld [vmem:[%s1 + $0x880] sm:$0xff]
    %v296 = vld [vmem:[%s1 + $0x888] sm:$0xff]
    %v297 = vld [vmem:[%s1 + $0x890] sm:$0xff]
    %v298 = vld [vmem:[%s1 + $0x898] sm:$0xff]
    %v299 = vld [vmem:[%s1 + $0x8a0] sm:$0xff]
    %v300 = vld [vmem:[%s1 + $0x8a8] sm:$0xff]
    %v301 = vld [vmem:[%s1 + $0x8b0] sm:$0xff]
    %v302 = vld [vmem:[%s1 + $0x8b8] sm:$0xff]
    %v303 = vld [vmem:[%s1 + $0x8c0] sm:$0xff]
    %v304 = vld [vmem:[%s1 + $0x8c8] sm:$0xff]
    %v305 = vld [vmem:[%s1 + $0x8d0] sm:$0xff]
    %v306 = vld [vmem:[%s1 + $0x8d8] sm:$0xff]
    %v307 = vld [vmem:[%s1 + $0x8e0] sm:$0xff]
    %v308 = vld [vmem:[%s1 + $0x8e8] sm:$0xff]
    %v309 = vld [vmem:[%s1 + $0x8f0] sm:$0xff]
    %v310 = vld [vmem:[%s1 + $0x8f8] sm:$0xff]
    %v311 = vld [vmem:[%s1 + $0x900] sm:$0xff]
    %v312 = vld [vmem:[%s1 + $0x908] sm:$0xff]
    %v313 = vld [vmem:[%s1 + $0x910] sm:$0xff]
    %v314 = vld [vmem:[%s1 + $0x918] sm:$0xff]
    %v315 = vld [vmem:[%s1 + $0x920] sm:$0xff]
    %v316 = vld [vmem:[%s1 + $0x928] sm:$0xff]
    %v317 = vld [vmem:[%s1 + $0x930] sm:$0xff]
    %v318 = vld [vmem:[%s1 + $0x938] sm:$0xff]
    %v319 = vld [vmem:[%s1 + $0x940] sm:$0xff]
    %v320 = vld [vmem:[%s1 + $0x948] sm:$0xff]
    %v321 = vld [vmem:[%s1 + $0x950] sm:$0xff]
    %v322 = vld [vmem:[%s1 + $0x958] sm:$0xff]
    %v323 = vld [vmem:[%s1 + $0x960] sm:$0xff]
    %v324 = vld [vmem:[%s1 + $0x968] sm:$0xff]
    %v325 = vld [vmem:[%s1 + $0x970] sm:$0xff]
    %v326 = vld [vmem:[%s1 + $0x978] sm:$0xff]
    %v327 = vld [vmem:[%s1 + $0x980] sm:$0xff]
    %v328 = vld [vmem:[%s1 + $0x988] sm:$0xff]
    %v329 = vld [vmem:[%s1 + $0x990] sm:$0xff]
    %v330 = vld [vmem:[%s1 + $0x998] sm:$0xff]
    %v331 = vld [vmem:[%s1 + $0x9a0] sm:$0xff]
    %v332 = vld [vmem:[%s1 + $0x9a8] sm:$0xff]
    %v333 = vld [vmem:[%s1 + $0x9b0] sm:$0xff]
    %v334 = vld [vmem:[%s1 + $0x9b8] sm:$0xff]
    %v335 = vld [vmem:[%s1 + $0x9c0] sm:$0xff]
    %v336 = vld [vmem:[%s1 + $0x9c8] sm:$0xff]
    %v337 = vld [vmem:[%s1 + $0x9d0] sm:$0xff]
    %v338 = vld [vmem:[%s1 + $0x9d8] sm:$0xff]
    %v339 = vld [vmem:[%s1 + $0x9e0] sm:$0xff]
    %v340 = vld [vmem:[%s1 + $0x9e8] sm:$0xff]
    %v341 = vld [vmem:[%s1 + $0x9f0] sm:$0xff]
    %v342 = vld [vmem:[%s1 + $0x9f8] sm:$0xff]
    %v343 = vld [vmem:[%s1 + $0xa00] sm:$0xff]
    %v344 = vld [vmem:[%s1 + $0xa08] sm:$0xff]
    %v345 = vld [vmem:[%s1 + $0xa10] sm:$0xff]
    %v346 = vld [vmem:[%s1 + $0xa18] sm:$0xff]
    %v347 = vld [vmem:[%s1 + $0xa20] sm:$0xff]
    %v348 = vld [vmem:[%s1 + $0xa28] sm:$0xff]
    %v349 = vld [vmem:[%s1 + $0xa30] sm:$0xff]
    %v350 = vld [vmem:[%s1 + $0xa38] sm:$0xff]
    %v351 = vld [vmem:[%s1 + $0xa40] sm:$0xff]
    %v352 = vld [vmem:[%s1 + $0xa48] sm:$0xff]
    %v353 = vld [vmem:[%s1 + $0xa50] sm:$0xff]
    %v354 = vld [vmem:[%s1 + $0xa58] sm:$0xff]
    %v355 = vld [vmem:[%s1 + $0xa60] sm:$0xff]
    %v356 = vld [vmem:[%s1 + $0xa68] sm:$0xff]
    %v357 = vld [vmem:[%s1 + $0xa70] sm:$0xff]
    %v358 = vld [vmem:[%s1 + $0xa78] sm:$0xff]
    %v359 = vld [vmem:[%s1 + $0xa80] sm:$0xff]
    %v360 = vld [vmem:[%s1 + $0xa88] sm:$0xff]
    %v361 = vld [vmem:[%s1 + $0xa90] sm:$0xff]
    %v362 = vld [vmem:[%s1 + $0xa98] sm:$0xff]
    %v363 = vld [vmem:[%s1 + $0xaa0] sm:$0xff]
    %v364 = vld [vmem:[%s1 + $0xaa8] sm:$0xff]
    %v365 = vld [vmem:[%s1 + $0xab0] sm:$0xff]
    %v366 = vld [vmem:[%s1 + $0xab8] sm:$0xff]
    %v367 = vld [vmem:[%s1 + $0xac0] sm:$0xff]
    %v368 = vld [vmem:[%s1 + $0xac8] sm:$0xff]
    %v369 = vld [vmem:[%s1 + $0xad0] sm:$0xff]
    %v370 = vld [vmem:[%s1 + $0xad8] sm:$0xff]
    %v371 = vld [vmem:[%s1 + $0xae0] sm:$0xff]
    %v372 = vld [vmem:[%s1 + $0xae8] sm:$0xff]
    %v373 = vld [vmem:[%s1 + $0xaf0] sm:$0xff]
    %v374 = vld [vmem:[%s1 + $0xaf8] sm:$0xff]
    %v375 = vld [vmem:[%s1 + $0xb00] sm:$0xff]
    %v376 = vld [vmem:[%s1 + $0xb08] sm:$0xff]
    %v377 = vld [vmem:[%s1 + $0xb10] sm:$0xff]
    %v378 = vld [vmem:[%s1 + $0xb18] sm:$0xff]
    %v379 = vld [vmem:[%s1 + $0xb20] sm:$0xff]
    %v380 = vld [vmem:[%s1 + $0xb28] sm:$0xff]
    %v381 = vld [vmem:[%s1 + $0xb30] sm:$0xff]
    %v382 = vld [vmem:[%s1 + $0xb38] sm:$0xff]
    %v383 = vld [vmem:[%s1 + $0xb40] sm:$0xff]
    %v384 = vld [vmem:[%s1 + $0xb48] sm:$0xff]
    %v385 = vld [vmem:[%s1 + $0xb50] sm:$0xff]
    %v386 = vld [vmem:[%s1 + $0xb58] sm:$0xff]
    %v387 = vld [vmem:[%s1 + $0xb60] sm:$0xff]
    %v388 = vld [vmem:[%s1 + $0xb68] sm:$0xff]
    %v389 = vld [vmem:[%s1 + $0xb70] sm:$0xff]
    %v390 = vld [vmem:[%s1 + $0xb78] sm:$0xff]
    %v391 = vld [vmem:[%s1 + $0xb80] sm:$0xff]
    %v392 = vld [vmem:[%s1 + $0xb88] sm:$0xff]
    %v393 = vld [vmem:[%s1 + $0xb90] sm:$0xff]
    %v394 = vld [vmem:[%s1 + $0xb98] sm:$0xff]
    %v395 = vld [vmem:[%s1 + $0xba0] sm:$0xff]
    %v396 = vld [vmem:[%s1 + $0xba8] sm:$0xff]
    %v397 = vld [vmem:[%s1 + $0xbb0] sm:$0xff]
    %v398 = vld [vmem:[%s1 + $0xbb8] sm:$0xff]
    %v399 = vld [vmem:[%s1 + $0xbc0] sm:$0xff]
    %v400 = vld [vmem:[%s1 + $0xbc8] sm:$0xff]
    %v401 = vld [vmem:[%s1 + $0xbd0] sm:$0xff]
    %v402 = vld [vmem:[%s1 + $0xbd8] sm:$0xff]
    %v403 = vld [vmem:[%s1 + $0xbe0] sm:$0xff]
    %v404 = vld [vmem:[%s1 + $0xbe8] sm:$0xff]
    %v405 = vld [vmem:[%s1 + $0xbf0] sm:$0xff]
    %v406 = vld [vmem:[%s1 + $0xbf8] sm:$0xff]
    %v407 = vld [vmem:[%s1 + $0xc00] sm:$0xff]
    %v408 = vld [vmem:[%s1 + $0xc08] sm:$0xff]
    %v409 = vld [vmem:[%s1 + $0xc10] sm:$0xff]
    %v410 = vld [vmem:[%s1 + $0xc18] sm:$0xff]
    %v411 = vld [vmem:[%s1 + $0xc20] sm:$0xff]
    %v412 = vld [vmem:[%s1 + $0xc28] sm:$0xff]
    %v413 = vld [vmem:[%s1 + $0xc30] sm:$0xff]
    %v414 = vld [vmem:[%s1 + $0xc38] sm:$0xff]
    %v415 = vld [vmem:[%s1 + $0xc40] sm:$0xff]
    %v416 = vld [vmem:[%s1 + $0xc48] sm:$0xff]
    %v417 = vld [vmem:[%s1 + $0xc50] sm:$0xff]
    %v418 = vld [vmem:[%s1 + $0xc58] sm:$0xff]
    %v419 = vld [vmem:[%s1 + $0xc60] sm:$0xff]
    %v420 = vld [vmem:[%s1 + $0xc68] sm:$0xff]
    %v421 = vld [vmem:[%s1 + $0xc70] sm:$0xff]
    %v422 = vld [vmem:[%s1 + $0xc78] sm:$0xff]
    %v423 = vld [vmem:[%s1 + $0xc80] sm:$0xff]
    %v424 = vld [vmem:[%s1 + $0xc88] sm:$0xff]
    %v425 = vld [vmem:[%s1 + $0xc90] sm:$0xff]
    %v426 = vld [vmem:[%s1 + $0xc98] sm:$0xff]
    %v427 = vld [vmem:[%s1 + $0xca0] sm:$0xff]
    %v428 = vld [vmem:[%s1 + $0xca8] sm:$0xff]
    %v429 = vld [vmem:[%s1 + $0xcb0] sm:$0xff]
    %v430 = vld [vmem:[%s1 + $0xcb8] sm:$0xff]
    %v431 = vld [vmem:[%s1 + $0xcc0] sm:$0xff]
    %v432 = vld [vmem:[%s1 + $0xcc8] sm:$0xff]
    %v433 = vld [vmem:[%s1 + $0xcd0] sm:$0xff]
    %v434 = vld [vmem:[%s1 + $0xcd8] sm:$0xff]
    %v435 = vld [vmem:[%s1 + $0xce0] sm:$0xff]
    %v436 = vld [vmem:[%s1 + $0xce8] sm:$0xff]
    %v437 = vld [vmem:[%s1 + $0xcf0] sm:$0xff]
    %v438 = vld [vmem:[%s1 + $0xcf8] sm:$0xff]
    %v439 = vld [vmem:[%s1 + $0xd00] sm:$0xff]
    %v440 = vld [vmem:[%s1 + $0xd08] sm:$0xff]
    %v441 = vld [vmem:[%s1 + $0xd10] sm:$0xff]
    %v442 = vld [vmem:[%s1 + $0xd18] sm:$0xff]
    %v443 = vld [vmem:[%s1 + $0xd20] sm:$0xff]
    %v444 = vld [vmem:[%s1 + $0xd28] sm:$0xff]
    %v445 = vld [vmem:[%s1 + $0xd30] sm:$0xff]
    %v446 = vld [vmem:[%s1 + $0xd38] sm:$0xff]
    %v447 = vld [vmem:[%s1 + $0xd40] sm:$0xff]
    %v448 = vld [vmem:[%s1 + $0xd48] sm:$0xff]
    %v449 = vld [vmem:[%s1 + $0xd50] sm:$0xff]
    %v450 = vld [vmem:[%s1 + $0xd58] sm:$0xff]
    %v451 = vld [vmem:[%s1 + $0xd60] sm:$0xff]
    %v452 = vld [vmem:[%s1 + $0xd68] sm:$0xff]
    %v453 = vld [vmem:[%s1 + $0xd70] sm:$0xff]
    %v454 = vld [vmem:[%s1 + $0xd78] sm:$0xff]
    %v455 = vld [vmem:[%s1 + $0xd80] sm:$0xff]
    %v456 = vld [vmem:[%s1 + $0xd88] sm:$0xff]
    %v457 = vld [vmem:[%s1 + $0xd90] sm:$0xff]
    %v458 = vld [vmem:[%s1 + $0xd98] sm:$0xff]
    %v459 = vld [vmem:[%s1 + $0xda0] sm:$0xff]
    %v460 = vld [vmem:[%s1 + $0xda8] sm:$0xff]
    %v461 = vld [vmem:[%s1 + $0xdb0] sm:$0xff]
    %v462 = vld [vmem:[%s1 + $0xdb8] sm:$0xff]
    %v463 = vld [vmem:[%s1 + $0xdc0] sm:$0xff]
    %v464 = vld [vmem:[%s1 + $0xdc8] sm:$0xff]
    %v465 = vld [vmem:[%s1 + $0xdd0] sm:$0xff]
    %v466 = vld [vmem:[%s1 + $0xdd8] sm:$0xff]
    %v467 = vld [vmem:[%s1 + $0xde0] sm:$0xff]
    %v468 = vld [vmem:[%s1 + $0xde8] sm:$0xff]
    %v469 = vld [vmem:[%s1 + $0xdf0] sm:$0xff]
    %v470 = vld [vmem:[%s1 + $0xdf8] sm:$0xff]
    %v471 = vld [vmem:[%s2] sm:$0xf]
    %v473 = vlaneseq
    %v474 = vshrl.u32 %v473, 7
    %v475 = vsub.s32 0, %v474
    %v476 = vrot.slane %v471, %v475
    %v477 = vlaneseq
    %v478 = vshrl.u32 %v477, 7
    %v479 = vsub.s32 1, %v478
    %v480 = vrot.slane %v471, %v479
    %v481 = vlaneseq
    %v482 = vshrl.u32 %v481, 7
    %v483 = vsub.s32 2, %v482
    %v484 = vrot.slane %v471, %v483
    %v485 = vlaneseq
    %v486 = vshrl.u32 %v485, 7
    %v487 = vsub.s32 3, %v486
    %v488 = vrot.slane %v471, %v487
    %v495 = vcombine.high %v21, %v21
    %v497 = vunpack.c.l.s4 1983009808
    %v498 = vunpack.c.0.s8 %v497
    %v499 = vlaneseq
    %v500 = vshrl.u32 %v499, 7
    %v501 = vsub.s32 %v498, %v500
    %v502 = vrot.slane %v21, %v501
    %v504 = vunpack.c.l.s4 1983009808
    %v505 = vunpack.c.0.s8 %v504
    %v506 = vlaneseq
    %v507 = vshrl.u32 %v506, 7
    %v508 = vsub.s32 %v505, %v507
    %v509 = vrot.slane %v495, %v508
    %v510 = vcombine.high %v502, %v502
    %v511 = vcombine.high %v509, %v509
    %v512 = vcombine.high %v22, %v22
    %v514 = vunpack.c.l.s4 1983009808
    %v515 = vunpack.c.0.s8 %v514
    %v516 = vlaneseq
    %v517 = vshrl.u32 %v516, 7
    %v518 = vsub.s32 %v515, %v517
    %v519 = vrot.slane %v22, %v518
    %v521 = vunpack.c.l.s4 1983009808
    %v522 = vunpack.c.0.s8 %v521
    %v523 = vlaneseq
    %v524 = vshrl.u32 %v523, 7
    %v525 = vsub.s32 %v522, %v524
    %v526 = vrot.slane %v512, %v525
    %v527 = vcombine.high %v519, %v519
    %535 = vmatprep.subr.mxu0 %v84
    %536 = vmatpush1.msra.mxu0 %v83
    %537 = vmatprep.subr.mxu0 %v80
    %538 = vmatpush1.msra.mxu0 %v79
    %539 = vmatprep.subr.mxu0 %v76
    %540 = vmatpush1.msra.mxu0 %v75
    %541 = vmatprep.subr.mxu0 %v72
    %542 = vmatpush1.msra.mxu0 %v71
    %543 = vmatprep.subr.mxu0 %v68
    %544 = vmatpush1.msra.mxu0 %v67
    %545 = vmatprep.subr.mxu0 %v64
    %546 = vmatpush1.msra.mxu0 %v63
    %547 = vmatprep.subr.mxu0 %v60
    %548 = vmatpush1.msra.mxu0 %v59
    %549 = vmatprep.subr.mxu0 %v56
    %550 = vmatpush1.msra.mxu0 %v55
    %551 = vmatprep.subr.mxu0 %v52
    %552 = vmatpush1.msra.mxu0 %v51
    %553 = vmatprep.subr.mxu0 %v48
    %554 = vmatpush1.msra.mxu0 %v47
    %555 = vmatprep.subr.mxu0 %v44
    %556 = vmatpush1.msra.mxu0 %v43
    %557 = vmatprep.subr.mxu0 %v40
    %558 = vmatpush1.msra.mxu0 %v39
    %559 = vmatprep.subr.mxu0 %v36
    %560 = vmatpush1.msra.mxu0 %v35
    %561 = vmatprep.subr.mxu0 %v32
    %562 = vmatpush1.msra.mxu0 %v31
    %563 = vmatprep.subr.mxu0 %v28
    %564 = vmatpush1.msra.mxu0 %v27
    %565 = vmatprep.subr.mxu0 %v24
    %566 = vmatpush1.msra.mxu0 %v23
    %567 = vmatprep.subr.mxu0 %v148
    %568 = vmatpush2.msra.mxu0 %v147
    %569 = vmatprep.subr.mxu0 %v144
    %570 = vmatpush2.msra.mxu0 %v143
    %571 = vmatprep.subr.mxu0 %v140
    %572 = vmatpush2.msra.mxu0 %v139
    %573 = vmatprep.subr.mxu0 %v136
    %574 = vmatpush2.msra.mxu0 %v135
    %575 = vmatprep.subr.mxu0 %v132
    %576 = vmatpush2.msra.mxu0 %v131
    %577 = vmatprep.subr.mxu0 %v128
    %578 = vmatpush2.msra.mxu0 %v127
    %579 = vmatprep.subr.mxu0 %v124
    %580 = vmatpush2.msra.mxu0 %v123
    %581 = vmatprep.subr.mxu0 %v120
    %582 = vmatpush2.msra.mxu0 %v119
    %583 = vmatprep.subr.mxu0 %v116
    %584 = vmatpush2.msra.mxu0 %v115
    %585 = vmatprep.subr.mxu0 %v112
    %586 = vmatpush2.msra.mxu0 %v111
    %587 = vmatprep.subr.mxu0 %v108
    %588 = vmatpush2.msra.mxu0 %v107
    %589 = vmatprep.subr.mxu0 %v104
    %590 = vmatpush2.msra.mxu0 %v103
    %591 = vmatprep.subr.mxu0 %v100
    %592 = vmatpush2.msra.mxu0 %v99
    %593 = vmatprep.subr.mxu0 %v96
    %594 = vmatpush2.msra.mxu0 %v95
    %595 = vmatprep.subr.mxu0 %v92
    %596 = vmatpush2.msra.mxu0 %v91
    %597 = vmatprep.subr.mxu0 %v88
    %598 = vmatpush2.msra.mxu0 %v87
    %599 = vmatprep.mubr.f32.mxu0 %v510
    %600 = vmatmul.mubr.f32.gmra.mxu0 %v502
    %v601 = vpop.f32.mrf.mxu0
    %v602 = vadd.f32 %v476, %v601
    %v603 = vpop.f32.mrf.mxu0
    %v604 = vadd.f32 %v480, %v603
    %605 = vdwg.mxu0
    %606 = vmatprep.subr.mxu0 %v212
    %607 = vmatpush1.msra.mxu0 %v211
    %608 = vmatprep.subr.mxu0 %v208
    %609 = vmatpush1.msra.mxu0 %v207
    %610 = vmatprep.subr.mxu0 %v204
    %611 = vmatpush1.msra.mxu0 %v203
    %612 = vmatprep.subr.mxu0 %v200
    %613 = vmatpush1.msra.mxu0 %v199
    %614 = vmatprep.subr.mxu0 %v196
    %615 = vmatpush1.msra.mxu0 %v195
    %616 = vmatprep.subr.mxu0 %v192
    %617 = vmatpush1.msra.mxu0 %v191
    %618 = vmatprep.subr.mxu0 %v188
    %619 = vmatpush1.msra.mxu0 %v187
    %620 = vmatprep.subr.mxu0 %v184
    %621 = vmatpush1.msra.mxu0 %v183
    %622 = vmatprep.subr.mxu0 %v180
    %623 = vmatpush1.msra.mxu0 %v179
    %624 = vmatprep.subr.mxu0 %v176
    %625 = vmatpush1.msra.mxu0 %v175
    %626 = vmatprep.subr.mxu0 %v172
    %627 = vmatpush1.msra.mxu0 %v171
    %628 = vmatprep.subr.mxu0 %v168
    %629 = vmatpush1.msra.mxu0 %v167
    %630 = vmatprep.subr.mxu0 %v164
    %631 = vmatpush1.msra.mxu0 %v163
    %632 = vmatprep.subr.mxu0 %v160
    %633 = vmatpush1.msra.mxu0 %v159
    %634 = vmatprep.subr.mxu0 %v156
    %635 = vmatpush1.msra.mxu0 %v155
    %636 = vmatprep.subr.mxu0 %v152
    %637 = vmatpush1.msra.mxu0 %v151
    %638 = vmatprep.subr.mxu0 %v276
    %639 = vmatpush2.msra.mxu0 %v275
    %640 = vmatprep.subr.mxu0 %v272
    %641 = vmatpush2.msra.mxu0 %v271
    %642 = vmatprep.subr.mxu0 %v268
    %643 = vmatpush2.msra.mxu0 %v267
    %644 = vmatprep.subr.mxu0 %v264
    %645 = vmatpush2.msra.mxu0 %v263
    %646 = vmatprep.subr.mxu0 %v260
    %647 = vmatpush2.msra.mxu0 %v259
    %648 = vmatprep.subr.mxu0 %v256
    %649 = vmatpush2.msra.mxu0 %v255
    %650 = vmatprep.subr.mxu0 %v252
    %651 = vmatpush2.msra.mxu0 %v251
    %652 = vmatprep.subr.mxu0 %v248
    %653 = vmatpush2.msra.mxu0 %v247
    %654 = vmatprep.subr.mxu0 %v244
    %655 = vmatpush2.msra.mxu0 %v243
    %656 = vmatprep.subr.mxu0 %v240
    %657 = vmatpush2.msra.mxu0 %v239
    %658 = vmatprep.subr.mxu0 %v236
    %659 = vmatpush2.msra.mxu0 %v235
    %660 = vmatprep.subr.mxu0 %v232
    %661 = vmatpush2.msra.mxu0 %v231
    %662 = vmatprep.subr.mxu0 %v228
    %663 = vmatpush2.msra.mxu0 %v227
    %664 = vmatprep.subr.mxu0 %v224
    %665 = vmatpush2.msra.mxu0 %v223
    %666 = vmatprep.subr.mxu0 %v220
    %667 = vmatpush2.msra.mxu0 %v219
    %668 = vmatprep.subr.mxu0 %v216
    %669 = vmatpush2.msra.mxu0 %v215
    %670 = vmatprep.mubr.f32.mxu0 %v511
    %671 = vmatmul.mubr.f32.gmra.mxu0 %v509
    %v672 = vpop.f32.mrf.mxu0
    %v673 = vadd.f32 %v602, %v672
    %v674 = vpop.f32.mrf.mxu0
    %v675 = vadd.f32 %v604, %v674
    %676 = vdwg.mxu0
    %677 = vmatprep.subr.mxu0 %v340
    %678 = vmatpush1.msra.mxu0 %v339
    %679 = vmatprep.subr.mxu0 %v336
    %680 = vmatpush1.msra.mxu0 %v335
    %681 = vmatprep.subr.mxu0 %v332
    %682 = vmatpush1.msra.mxu0 %v331
    %683 = vmatprep.subr.mxu0 %v328
    %684 = vmatpush1.msra.mxu0 %v327
    %685 = vmatprep.subr.mxu0 %v324
    %686 = vmatpush1.msra.mxu0 %v323
    %687 = vmatprep.subr.mxu0 %v320
    %688 = vmatpush1.msra.mxu0 %v319
    %689 = vmatprep.subr.mxu0 %v316
    %690 = vmatpush1.msra.mxu0 %v315
    %691 = vmatprep.subr.mxu0 %v312
    %692 = vmatpush1.msra.mxu0 %v311
    %693 = vmatprep.subr.mxu0 %v308
    %694 = vmatpush1.msra.mxu0 %v307
    %695 = vmatprep.subr.mxu0 %v304
    %696 = vmatpush1.msra.mxu0 %v303
    %697 = vmatprep.subr.mxu0 %v300
    %698 = vmatpush1.msra.mxu0 %v299
    %699 = vmatprep.subr.mxu0 %v296
    %700 = vmatpush1.msra.mxu0 %v295
    %701 = vmatprep.subr.mxu0 %v292
    %702 = vmatpush1.msra.mxu0 %v291
    %703 = vmatprep.subr.mxu0 %v288
    %704 = vmatpush1.msra.mxu0 %v287
    %705 = vmatprep.subr.mxu0 %v284
    %706 = vmatpush1.msra.mxu0 %v283
    %707 = vmatprep.subr.mxu0 %v280
    %708 = vmatpush1.msra.mxu0 %v279
    %709 = vmatprep.subr.mxu0 %v404
    %710 = vmatpush2.msra.mxu0 %v403
    %711 = vmatprep.subr.mxu0 %v400
    %712 = vmatpush2.msra.mxu0 %v399
    %713 = vmatprep.subr.mxu0 %v396
    %714 = vmatpush2.msra.mxu0 %v395
    %715 = vmatprep.subr.mxu0 %v392
    %716 = vmatpush2.msra.mxu0 %v391
    %717 = vmatprep.subr.mxu0 %v388
    %718 = vmatpush2.msra.mxu0 %v387
    %719 = vmatprep.subr.mxu0 %v384
    %720 = vmatpush2.msra.mxu0 %v383
    %721 = vmatprep.subr.mxu0 %v380
    %722 = vmatpush2.msra.mxu0 %v379
    %723 = vmatprep.subr.mxu0 %v376
    %724 = vmatpush2.msra.mxu0 %v375
    %725 = vmatprep.subr.mxu0 %v372
    %726 = vmatpush2.msra.mxu0 %v371
    %727 = vmatprep.subr.mxu0 %v368
    %728 = vmatpush2.msra.mxu0 %v367
    %729 = vmatprep.subr.mxu0 %v364
    %730 = vmatpush2.msra.mxu0 %v363
    %731 = vmatprep.subr.mxu0 %v360
    %732 = vmatpush2.msra.mxu0 %v359
    %733 = vmatprep.subr.mxu0 %v356
    %734 = vmatpush2.msra.mxu0 %v355
    %735 = vmatprep.subr.mxu0 %v352
    %736 = vmatpush2.msra.mxu0 %v351
    %737 = vmatprep.subr.mxu0 %v348
    %738 = vmatpush2.msra.mxu0 %v347
    %739 = vmatprep.subr.mxu0 %v344
    %740 = vmatpush2.msra.mxu0 %v343
    %741 = vmatprep.mubr.f32.mxu0 %v527
    %742 = vmatmul.mubr.f32.gmra.mxu0 %v519
    %v743 = vpop.f32.mrf.mxu0
    %v744 = vadd.f32 %v673, %v743
    %v745 = vpop.f32.mrf.mxu0
    %v746 = vadd.f32 %v675, %v745
    %747 = vdwg.mxu0
    %748 = vmatprep.subr.mxu0 %v468
    %749 = vmatpush1.msra.mxu0 %v467
    %750 = vmatprep.subr.mxu0 %v464
    %751 = vmatpush1.msra.mxu0 %v463
    %752 = vmatprep.subr.mxu0 %v460
    %753 = vmatpush1.msra.mxu0 %v459
    %754 = vmatprep.subr.mxu0 %v456
    %755 = vmatpush1.msra.mxu0 %v455
    %756 = vmatprep.subr.mxu0 %v452
    %757 = vmatpush1.msra.mxu0 %v451
    %758 = vmatprep.subr.mxu0 %v448
    %759 = vmatpush1.msra.mxu0 %v447
    %760 = vmatprep.subr.mxu0 %v444
    %761 = vmatpush1.msra.mxu0 %v443
    %762 = vmatprep.subr.mxu0 %v440
    %763 = vmatpush1.msra.mxu0 %v439
    %764 = vmatprep.subr.mxu0 %v436
    %765 = vmatpush1.msra.mxu0 %v435
    %766 = vmatprep.subr.mxu0 %v432
    %767 = vmatpush1.msra.mxu0 %v431
    %768 = vmatprep.subr.mxu0 %v428
    %769 = vmatpush1.msra.mxu0 %v427
    %770 = vmatprep.subr.mxu0 %v424
    %771 = vmatpush1.msra.mxu0 %v423
    %772 = vmatprep.subr.mxu0 %v420
    %773 = vmatpush1.msra.mxu0 %v419
    %774 = vmatprep.subr.mxu0 %v416
    %775 = vmatpush1.msra.mxu0 %v415
    %776 = vmatprep.subr.mxu0 %v412
    %777 = vmatpush1.msra.mxu0 %v411
    %778 = vmatprep.subr.mxu0 %v408
    %779 = vmatpush1.msra.mxu0 %v407
    %780 = vmatprep.subr.mxu0 0.0
    %781 = vmatpush2.msra.mxu0 0.0
    %782 = vmatprep.subr.mxu0 0.0
    %783 = vmatpush2.msra.mxu0 0.0
    %784 = vmatprep.subr.mxu0 0.0
    %785 = vmatpush2.msra.mxu0 0.0
    %786 = vmatprep.subr.mxu0 0.0
    %787 = vmatpush2.msra.mxu0 0.0
    %788 = vmatprep.subr.mxu0 0.0
    %789 = vmatpush2.msra.mxu0 0.0
    %790 = vmatprep.subr.mxu0 0.0
    %791 = vmatpush2.msra.mxu0 0.0
    %792 = vmatprep.subr.mxu0 0.0
    %793 = vmatpush2.msra.mxu0 0.0
    %794 = vmatprep.subr.mxu0 0.0
    %795 = vmatpush2.msra.mxu0 0.0
    %796 = vmatprep.subr.mxu0 0.0
    %797 = vmatpush2.msra.mxu0 0.0
    %798 = vmatprep.subr.mxu0 0.0
    %799 = vmatpush2.msra.mxu0 0.0
    %800 = vmatprep.subr.mxu0 0.0
    %801 = vmatpush2.msra.mxu0 0.0
    %802 = vmatprep.subr.mxu0 0.0
    %803 = vmatpush2.msra.mxu0 0.0
    %804 = vmatprep.subr.mxu0 0.0
    %805 = vmatpush2.msra.mxu0 0.0
    %806 = vmatprep.subr.mxu0 0.0
    %807 = vmatpush2.msra.mxu0 0.0
    %808 = vmatprep.subr.mxu0 0.0
    %809 = vmatpush2.msra.mxu0 0.0
    %810 = vmatprep.subr.mxu0 0.0
    %811 = vmatpush2.msra.mxu0 0.0
    %812 = vmatprep.mubr.f32.mxu0 0.0
    %813 = vmatmul.mubr.f32.gmra.mxu0 %v526
    %v814 = vpop.f32.mrf.mxu0
    %v815 = vadd.f32 %v744, %v814
    %v816 = vpop.f32.mrf.mxu0
    %v817 = vadd.f32 %v746, %v816
    %818 = vdwg.mxu0
    %819 = vmatprep.subr.mxu0 %v86
    %820 = vmatpush1.msra.mxu0 %v85
    %821 = vmatprep.subr.mxu0 %v82
    %822 = vmatpush1.msra.mxu0 %v81
    %823 = vmatprep.subr.mxu0 %v78
    %824 = vmatpush1.msra.mxu0 %v77
    %825 = vmatprep.subr.mxu0 %v74
    %826 = vmatpush1.msra.mxu0 %v73
    %827 = vmatprep.subr.mxu0 %v70
    %828 = vmatpush1.msra.mxu0 %v69
    %829 = vmatprep.subr.mxu0 %v66
    %830 = vmatpush1.msra.mxu0 %v65
    %831 = vmatprep.subr.mxu0 %v62
    %832 = vmatpush1.msra.mxu0 %v61
    %833 = vmatprep.subr.mxu0 %v58
    %834 = vmatpush1.msra.mxu0 %v57
    %835 = vmatprep.subr.mxu0 %v54
    %836 = vmatpush1.msra.mxu0 %v53
    %837 = vmatprep.subr.mxu0 %v50
    %838 = vmatpush1.msra.mxu0 %v49
    %839 = vmatprep.subr.mxu0 %v46
    %840 = vmatpush1.msra.mxu0 %v45
    %841 = vmatprep.subr.mxu0 %v42
    %842 = vmatpush1.msra.mxu0 %v41
    %843 = vmatprep.subr.mxu0 %v38
    %844 = vmatpush1.msra.mxu0 %v37
    %845 = vmatprep.subr.mxu0 %v34
    %846 = vmatpush1.msra.mxu0 %v33
    %847 = vmatprep.subr.mxu0 %v30
    %848 = vmatpush1.msra.mxu0 %v29
    %849 = vmatprep.subr.mxu0 %v26
    %850 = vmatpush1.msra.mxu0 %v25
    %851 = vmatprep.subr.mxu0 %v150
    %852 = vmatpush2.msra.mxu0 %v149
    %853 = vmatprep.subr.mxu0 %v146
    %854 = vmatpush2.msra.mxu0 %v145
    %855 = vmatprep.subr.mxu0 %v142
    %856 = vmatpush2.msra.mxu0 %v141
    %857 = vmatprep.subr.mxu0 %v138
    %858 = vmatpush2.msra.mxu0 %v137
    %859 = vmatprep.subr.mxu0 %v134
    %860 = vmatpush2.msra.mxu0 %v133
    %861 = vmatprep.subr.mxu0 %v130
    %862 = vmatpush2.msra.mxu0 %v129
    %863 = vmatprep.subr.mxu0 %v126
    %864 = vmatpush2.msra.mxu0 %v125
    %865 = vmatprep.subr.mxu0 %v122
    %866 = vmatpush2.msra.mxu0 %v121
    %867 = vmatprep.subr.mxu0 %v118
    %868 = vmatpush2.msra.mxu0 %v117
    %869 = vmatprep.subr.mxu0 %v114
    %870 = vmatpush2.msra.mxu0 %v113
    %871 = vmatprep.subr.mxu0 %v110
    %872 = vmatpush2.msra.mxu0 %v109
    %873 = vmatprep.subr.mxu0 %v106
    %874 = vmatpush2.msra.mxu0 %v105
    %875 = vmatprep.subr.mxu0 %v102
    %876 = vmatpush2.msra.mxu0 %v101
    %877 = vmatprep.subr.mxu0 %v98
    %878 = vmatpush2.msra.mxu0 %v97
    %879 = vmatprep.subr.mxu0 %v94
    %880 = vmatpush2.msra.mxu0 %v93
    %881 = vmatprep.subr.mxu0 %v90
    %882 = vmatpush2.msra.mxu0 %v89
    %883 = vmatprep.mubr.f32.mxu0 %v510
    %884 = vmatmul.mubr.f32.gmra.mxu0 %v502
    %v885 = vpop.f32.mrf.mxu0
    %v886 = vadd.f32 %v484, %v885
    %v887 = vpop.f32.mrf.mxu0
    %v888 = vadd.f32 %v488, %v887
    %889 = vdwg.mxu0
    %890 = vmatprep.subr.mxu0 %v214
    %891 = vmatpush1.msra.mxu0 %v213
    %892 = vmatprep.subr.mxu0 %v210
    %893 = vmatpush1.msra.mxu0 %v209
    %894 = vmatprep.subr.mxu0 %v206
    %895 = vmatpush1.msra.mxu0 %v205
    %896 = vmatprep.subr.mxu0 %v202
    %897 = vmatpush1.msra.mxu0 %v201
    %898 = vmatprep.subr.mxu0 %v198
    %899 = vmatpush1.msra.mxu0 %v197
    %900 = vmatprep.subr.mxu0 %v194
    %901 = vmatpush1.msra.mxu0 %v193
    %902 = vmatprep.subr.mxu0 %v190
    %903 = vmatpush1.msra.mxu0 %v189
    %904 = vmatprep.subr.mxu0 %v186
    %905 = vmatpush1.msra.mxu0 %v185
    %906 = vmatprep.subr.mxu0 %v182
    %907 = vmatpush1.msra.mxu0 %v181
    %908 = vmatprep.subr.mxu0 %v178
    %909 = vmatpush1.msra.mxu0 %v177
    %910 = vmatprep.subr.mxu0 %v174
    %911 = vmatpush1.msra.mxu0 %v173
    %912 = vmatprep.subr.mxu0 %v170
    %913 = vmatpush1.msra.mxu0 %v169
    %914 = vmatprep.subr.mxu0 %v166
    %915 = vmatpush1.msra.mxu0 %v165
    %916 = vmatprep.subr.mxu0 %v162
    %917 = vmatpush1.msra.mxu0 %v161
    %918 = vmatprep.subr.mxu0 %v158
    %919 = vmatpush1.msra.mxu0 %v157
    %920 = vmatprep.subr.mxu0 %v154
    %921 = vmatpush1.msra.mxu0 %v153
    %922 = vmatprep.subr.mxu0 %v278
    %923 = vmatpush2.msra.mxu0 %v277
    %924 = vmatprep.subr.mxu0 %v274
    %925 = vmatpush2.msra.mxu0 %v273
    %926 = vmatprep.subr.mxu0 %v270
    %927 = vmatpush2.msra.mxu0 %v269
    %928 = vmatprep.subr.mxu0 %v266
    %929 = vmatpush2.msra.mxu0 %v265
    %930 = vmatprep.subr.mxu0 %v262
    %931 = vmatpush2.msra.mxu0 %v261
    %932 = vmatprep.subr.mxu0 %v258
    %933 = vmatpush2.msra.mxu0 %v257
    %934 = vmatprep.subr.mxu0 %v254
    %935 = vmatpush2.msra.mxu0 %v253
    %936 = vmatprep.subr.mxu0 %v250
    %937 = vmatpush2.msra.mxu0 %v249
    %938 = vmatprep.subr.mxu0 %v246
    %939 = vmatpush2.msra.mxu0 %v245
    %940 = vmatprep.subr.mxu0 %v242
    %941 = vmatpush2.msra.mxu0 %v241
    %942 = vmatprep.subr.mxu0 %v238
    %943 = vmatpush2.msra.mxu0 %v237
    %944 = vmatprep.subr.mxu0 %v234
    %945 = vmatpush2.msra.mxu0 %v233
    %946 = vmatprep.subr.mxu0 %v230
    %947 = vmatpush2.msra.mxu0 %v229
    %948 = vmatprep.subr.mxu0 %v226
    %949 = vmatpush2.msra.mxu0 %v225
    %950 = vmatprep.subr.mxu0 %v222
    %951 = vmatpush2.msra.mxu0 %v221
    %952 = vmatprep.subr.mxu0 %v218
    %953 = vmatpush2.msra.mxu0 %v217
    %954 = vmatprep.mubr.f32.mxu0 %v511
    %955 = vmatmul.mubr.f32.gmra.mxu0 %v509
    %v956 = vpop.f32.mrf.mxu0
    %v957 = vadd.f32 %v886, %v956
    %v958 = vpop.f32.mrf.mxu0
    %v959 = vadd.f32 %v888, %v958
    %960 = vdwg.mxu0
    %961 = vmatprep.subr.mxu0 %v342
    %962 = vmatpush1.msra.mxu0 %v341
    %963 = vmatprep.subr.mxu0 %v338
    %964 = vmatpush1.msra.mxu0 %v337
    %965 = vmatprep.subr.mxu0 %v334
    %966 = vmatpush1.msra.mxu0 %v333
    %967 = vmatprep.subr.mxu0 %v330
    %968 = vmatpush1.msra.mxu0 %v329
    %969 = vmatprep.subr.mxu0 %v326
    %970 = vmatpush1.msra.mxu0 %v325
    %971 = vmatprep.subr.mxu0 %v322
    %972 = vmatpush1.msra.mxu0 %v321
    %973 = vmatprep.subr.mxu0 %v318
    %974 = vmatpush1.msra.mxu0 %v317
    %975 = vmatprep.subr.mxu0 %v314
    %976 = vmatpush1.msra.mxu0 %v313
    %977 = vmatprep.subr.mxu0 %v310
    %978 = vmatpush1.msra.mxu0 %v309
    %979 = vmatprep.subr.mxu0 %v306
    %980 = vmatpush1.msra.mxu0 %v305
    %981 = vmatprep.subr.mxu0 %v302
    %982 = vmatpush1.msra.mxu0 %v301
    %983 = vmatprep.subr.mxu0 %v298
    %984 = vmatpush1.msra.mxu0 %v297
    %985 = vmatprep.subr.mxu0 %v294
    %986 = vmatpush1.msra.mxu0 %v293
    %987 = vmatprep.subr.mxu0 %v290
    %988 = vmatpush1.msra.mxu0 %v289
    %989 = vmatprep.subr.mxu0 %v286
    %990 = vmatpush1.msra.mxu0 %v285
    %991 = vmatprep.subr.mxu0 %v282
    %992 = vmatpush1.msra.mxu0 %v281
    %993 = vmatprep.subr.mxu0 %v406
    %994 = vmatpush2.msra.mxu0 %v405
    %995 = vmatprep.subr.mxu0 %v402
    %996 = vmatpush2.msra.mxu0 %v401
    %997 = vmatprep.subr.mxu0 %v398
    %998 = vmatpush2.msra.mxu0 %v397
    %999 = vmatprep.subr.mxu0 %v394
    %1000 = vmatpush2.msra.mxu0 %v393
    %1001 = vmatprep.subr.mxu0 %v390
    %1002 = vmatpush2.msra.mxu0 %v389
    %1003 = vmatprep.subr.mxu0 %v386
    %1004 = vmatpush2.msra.mxu0 %v385
    %1005 = vmatprep.subr.mxu0 %v382
    %1006 = vmatpush2.msra.mxu0 %v381
    %1007 = vmatprep.subr.mxu0 %v378
    %1008 = vmatpush2.msra.mxu0 %v377
    %1009 = vmatprep.subr.mxu0 %v374
    %1010 = vmatpush2.msra.mxu0 %v373
    %1011 = vmatprep.subr.mxu0 %v370
    %1012 = vmatpush2.msra.mxu0 %v369
    %1013 = vmatprep.subr.mxu0 %v366
    %1014 = vmatpush2.msra.mxu0 %v365
    %1015 = vmatprep.subr.mxu0 %v362
    %1016 = vmatpush2.msra.mxu0 %v361
    %1017 = vmatprep.subr.mxu0 %v358
    %1018 = vmatpush2.msra.mxu0 %v357
    %1019 = vmatprep.subr.mxu0 %v354
    %1020 = vmatpush2.msra.mxu0 %v353
    %1021 = vmatprep.subr.mxu0 %v350
    %1022 = vmatpush2.msra.mxu0 %v349
    %1023 = vmatprep.subr.mxu0 %v346
    %1024 = vmatpush2.msra.mxu0 %v345
    %1025 = vmatprep.mubr.f32.mxu0 %v527
    %1026 = vmatmul.mubr.f32.gmra.mxu0 %v519
    %v1027 = vpop.f32.mrf.mxu0
    %v1028 = vadd.f32 %v957, %v1027
    %v1029 = vpop.f32.mrf.mxu0
    %v1030 = vadd.f32 %v959, %v1029
    %1031 = vdwg.mxu0
    %1032 = vmatprep.subr.mxu0 %v470
    %1033 = vmatpush1.msra.mxu0 %v469
    %1034 = vmatprep.subr.mxu0 %v466
    %1035 = vmatpush1.msra.mxu0 %v465
    %1036 = vmatprep.subr.mxu0 %v462
    %1037 = vmatpush1.msra.mxu0 %v461
    %1038 = vmatprep.subr.mxu0 %v458
    %1039 = vmatpush1.msra.mxu0 %v457
    %1040 = vmatprep.subr.mxu0 %v454
    %1041 = vmatpush1.msra.mxu0 %v453
    %1042 = vmatprep.subr.mxu0 %v450
    %1043 = vmatpush1.msra.mxu0 %v449
    %1044 = vmatprep.subr.mxu0 %v446
    %1045 = vmatpush1.msra.mxu0 %v445
    %1046 = vmatprep.subr.mxu0 %v442
    %1047 = vmatpush1.msra.mxu0 %v441
    %1048 = vmatprep.subr.mxu0 %v438
    %1049 = vmatpush1.msra.mxu0 %v437
    %1050 = vmatprep.subr.mxu0 %v434
    %1051 = vmatpush1.msra.mxu0 %v433
    %1052 = vmatprep.subr.mxu0 %v430
    %1053 = vmatpush1.msra.mxu0 %v429
    %1054 = vmatprep.subr.mxu0 %v426
    %1055 = vmatpush1.msra.mxu0 %v425
    %1056 = vmatprep.subr.mxu0 %v422
    %1057 = vmatpush1.msra.mxu0 %v421
    %1058 = vmatprep.subr.mxu0 %v418
    %1059 = vmatpush1.msra.mxu0 %v417
    %1060 = vmatprep.subr.mxu0 %v414
    %1061 = vmatpush1.msra.mxu0 %v413
    %1062 = vmatprep.subr.mxu0 %v410
    %1063 = vmatpush1.msra.mxu0 %v409
    %1064 = vmatprep.subr.mxu0 0.0
    %1065 = vmatpush2.msra.mxu0 0.0
    %1066 = vmatprep.subr.mxu0 0.0
    %1067 = vmatpush2.msra.mxu0 0.0
    %1068 = vmatprep.subr.mxu0 0.0
    %1069 = vmatpush2.msra.mxu0 0.0
    %1070 = vmatprep.subr.mxu0 0.0
    %1071 = vmatpush2.msra.mxu0 0.0
    %1072 = vmatprep.subr.mxu0 0.0
    %1073 = vmatpush2.msra.mxu0 0.0
    %1074 = vmatprep.subr.mxu0 0.0
    %1075 = vmatpush2.msra.mxu0 0.0
    %1076 = vmatprep.subr.mxu0 0.0
    %1077 = vmatpush2.msra.mxu0 0.0
    %1078 = vmatprep.subr.mxu0 0.0
    %1079 = vmatpush2.msra.mxu0 0.0
    %1080 = vmatprep.subr.mxu0 0.0
    %1081 = vmatpush2.msra.mxu0 0.0
    %1082 = vmatprep.subr.mxu0 0.0
    %1083 = vmatpush2.msra.mxu0 0.0
    %1084 = vmatprep.subr.mxu0 0.0
    %1085 = vmatpush2.msra.mxu0 0.0
    %1086 = vmatprep.subr.mxu0 0.0
    %1087 = vmatpush2.msra.mxu0 0.0
    %1088 = vmatprep.subr.mxu0 0.0
    %1089 = vmatpush2.msra.mxu0 0.0
    %1090 = vmatprep.subr.mxu0 0.0
    %1091 = vmatpush2.msra.mxu0 0.0
    %1092 = vmatprep.subr.mxu0 0.0
    %1093 = vmatpush2.msra.mxu0 0.0
    %1094 = vmatprep.subr.mxu0 0.0
    %1095 = vmatpush2.msra.mxu0 0.0
    %1096 = vmatprep.mubr.f32.mxu0 0.0
    %1097 = vmatmul.mubr.f32.gmra.mxu0 %v526
    %v1098 = vpop.f32.mrf.mxu0
    %v1099 = vadd.f32 %v1028, %v1098
    %v1100 = vpop.f32.mrf.mxu0
    %v1101 = vadd.f32 %v1030, %v1100
    %1102 = vdwg.mxu0
    %v1103 = vld [vmem:[%s3] sm:$0xff]
    %v1104 = vld [vmem:[%s3 + $0x8] sm:$0xff]
    %v1105 = vld [vmem:[%s3 + $0x10] sm:$0xff]
    %v1106 = vld [vmem:[%s3 + $0x18] sm:$0xff]
    %v1107 = vld [vmem:[%s3 + $0x20] sm:$0xff]
    %v1108 = vld [vmem:[%s3 + $0x28] sm:$0xff]
    %v1109 = vld [vmem:[%s3 + $0x30] sm:$0xff]
    %v1110 = vld [vmem:[%s3 + $0x38] sm:$0xff]
    %v1111 = vld [vmem:[%s3 + $0x40] sm:$0xff]
    %v1112 = vld [vmem:[%s3 + $0x48] sm:$0xff]
    %v1113 = vld [vmem:[%s3 + $0x50] sm:$0xff]
    %v1114 = vld [vmem:[%s3 + $0x58] sm:$0xff]
    %v1115 = vld [vmem:[%s3 + $0x60] sm:$0xff]
    %v1116 = vld [vmem:[%s3 + $0x68] sm:$0xff]
    %v1117 = vld [vmem:[%s3 + $0x70] sm:$0xff]
    %v1118 = vld [vmem:[%s3 + $0x78] sm:$0xff]
    %v1119 = vld [vmem:[%s3 + $0x80] sm:$0xff]
    %v1120 = vld [vmem:[%s3 + $0x88] sm:$0xff]
    %v1121 = vld [vmem:[%s3 + $0x90] sm:$0xff]
    %v1122 = vld [vmem:[%s3 + $0x98] sm:$0xff]
    %v1123 = vld [vmem:[%s3 + $0xa0] sm:$0xff]
    %v1124 = vld [vmem:[%s3 + $0xa8] sm:$0xff]
    %v1125 = vld [vmem:[%s3 + $0xb0] sm:$0xff]
    %v1126 = vld [vmem:[%s3 + $0xb8] sm:$0xff]
    %v1127 = vld [vmem:[%s3 + $0xc0] sm:$0xff]
    %v1128 = vld [vmem:[%s3 + $0xc8] sm:$0xff]
    %v1129 = vld [vmem:[%s3 + $0xd0] sm:$0xff]
    %v1130 = vld [vmem:[%s3 + $0xd8] sm:$0xff]
    %v1131 = vld [vmem:[%s3 + $0xe0] sm:$0xff]
    %v1132 = vld [vmem:[%s3 + $0xe8] sm:$0xff]
    %v1133 = vld [vmem:[%s3 + $0xf0] sm:$0xff]
    %v1134 = vld [vmem:[%s3 + $0xf8] sm:$0xff]
    %v1135 = vld [vmem:[%s3 + $0x100] sm:$0xff]
    %v1136 = vld [vmem:[%s3 + $0x108] sm:$0xff]
    %v1137 = vld [vmem:[%s3 + $0x110] sm:$0xff]
    %v1138 = vld [vmem:[%s3 + $0x118] sm:$0xff]
    %v1139 = vld [vmem:[%s3 + $0x120] sm:$0xff]
    %v1140 = vld [vmem:[%s3 + $0x128] sm:$0xff]
    %v1141 = vld [vmem:[%s3 + $0x130] sm:$0xff]
    %v1142 = vld [vmem:[%s3 + $0x138] sm:$0xff]
    %v1143 = vld [vmem:[%s3 + $0x140] sm:$0xff]
    %v1144 = vld [vmem:[%s3 + $0x148] sm:$0xff]
    %v1145 = vld [vmem:[%s3 + $0x150] sm:$0xff]
    %v1146 = vld [vmem:[%s3 + $0x158] sm:$0xff]
    %v1147 = vld [vmem:[%s3 + $0x160] sm:$0xff]
    %v1148 = vld [vmem:[%s3 + $0x168] sm:$0xff]
    %v1149 = vld [vmem:[%s3 + $0x170] sm:$0xff]
    %v1150 = vld [vmem:[%s3 + $0x178] sm:$0xff]
    %v1151 = vld [vmem:[%s3 + $0x180] sm:$0xff]
    %v1152 = vld [vmem:[%s3 + $0x188] sm:$0xff]
    %v1153 = vld [vmem:[%s3 + $0x190] sm:$0xff]
    %v1154 = vld [vmem:[%s3 + $0x198] sm:$0xff]
    %v1155 = vld [vmem:[%s3 + $0x1a0] sm:$0xff]
    %v1156 = vld [vmem:[%s3 + $0x1a8] sm:$0xff]
    %v1157 = vld [vmem:[%s3 + $0x1b0] sm:$0xff]
    %v1158 = vld [vmem:[%s3 + $0x1b8] sm:$0xff]
    %v1159 = vld [vmem:[%s3 + $0x1c0] sm:$0xff]
    %v1160 = vld [vmem:[%s3 + $0x1c8] sm:$0xff]
    %v1161 = vld [vmem:[%s3 + $0x1d0] sm:$0xff]
    %v1162 = vld [vmem:[%s3 + $0x1d8] sm:$0xff]
    %v1163 = vld [vmem:[%s3 + $0x1e0] sm:$0xff]
    %v1164 = vld [vmem:[%s3 + $0x1e8] sm:$0xff]
    %v1165 = vld [vmem:[%s3 + $0x1f0] sm:$0xff]
    %v1166 = vld [vmem:[%s3 + $0x1f8] sm:$0xff]
    %v1167 = vld [vmem:[%s4] sm:$0x1]
    %v1169 = vlaneseq
    %v1170 = vshrl.u32 %v1169, 7
    %v1171 = vsub.s32 0, %v1170
    %v1172 = vrot.slane %v1167, %v1171
    %1174 = vmatprep.subr.mxu0 0.0
    %1175 = vmatpush1.msra.mxu0 %v1118
    %1176 = vmatprep.subr.mxu0 0.0
    %1177 = vmatpush1.msra.mxu0 %v1117
    %1178 = vmatprep.subr.mxu0 0.0
    %1179 = vmatpush1.msra.mxu0 %v1116
    %1180 = vmatprep.subr.mxu0 0.0
    %1181 = vmatpush1.msra.mxu0 %v1115
    %1182 = vmatprep.subr.mxu0 0.0
    %1183 = vmatpush1.msra.mxu0 %v1114
    %1184 = vmatprep.subr.mxu0 0.0
    %1185 = vmatpush1.msra.mxu0 %v1113
    %1186 = vmatprep.subr.mxu0 0.0
    %1187 = vmatpush1.msra.mxu0 %v1112
    %1188 = vmatprep.subr.mxu0 0.0
    %1189 = vmatpush1.msra.mxu0 %v1111
    %1190 = vmatprep.subr.mxu0 0.0
    %1191 = vmatpush1.msra.mxu0 %v1110
    %1192 = vmatprep.subr.mxu0 0.0
    %1193 = vmatpush1.msra.mxu0 %v1109
    %1194 = vmatprep.subr.mxu0 0.0
    %1195 = vmatpush1.msra.mxu0 %v1108
    %1196 = vmatprep.subr.mxu0 0.0
    %1197 = vmatpush1.msra.mxu0 %v1107
    %1198 = vmatprep.subr.mxu0 0.0
    %1199 = vmatpush1.msra.mxu0 %v1106
    %1200 = vmatprep.subr.mxu0 0.0
    %1201 = vmatpush1.msra.mxu0 %v1105
    %1202 = vmatprep.subr.mxu0 0.0
    %1203 = vmatpush1.msra.mxu0 %v1104
    %1204 = vmatprep.subr.mxu0 0.0
    %1205 = vmatpush1.msra.mxu0 %v1103
    %1206 = vmatprep.subr.mxu0 0.0
    %1207 = vmatpush2.msra.mxu0 %v1134
    %1208 = vmatprep.subr.mxu0 0.0
    %1209 = vmatpush2.msra.mxu0 %v1133
    %1210 = vmatprep.subr.mxu0 0.0
    %1211 = vmatpush2.msra.mxu0 %v1132
    %1212 = vmatprep.subr.mxu0 0.0
    %1213 = vmatpush2.msra.mxu0 %v1131
    %1214 = vmatprep.subr.mxu0 0.0
    %1215 = vmatpush2.msra.mxu0 %v1130
    %1216 = vmatprep.subr.mxu0 0.0
    %1217 = vmatpush2.msra.mxu0 %v1129
    %1218 = vmatprep.subr.mxu0 0.0
    %1219 = vmatpush2.msra.mxu0 %v1128
    %1220 = vmatprep.subr.mxu0 0.0
    %1221 = vmatpush2.msra.mxu0 %v1127
    %1222 = vmatprep.subr.mxu0 0.0
    %1223 = vmatpush2.msra.mxu0 %v1126
    %1224 = vmatprep.subr.mxu0 0.0
    %1225 = vmatpush2.msra.mxu0 %v1125
    %1226 = vmatprep.subr.mxu0 0.0
    %1227 = vmatpush2.msra.mxu0 %v1124
    %1228 = vmatprep.subr.mxu0 0.0
    %1229 = vmatpush2.msra.mxu0 %v1123
    %1230 = vmatprep.subr.mxu0 0.0
    %1231 = vmatpush2.msra.mxu0 %v1122
    %1232 = vmatprep.subr.mxu0 0.0
    %1233 = vmatpush2.msra.mxu0 %v1121
    %1234 = vmatprep.subr.mxu0 0.0
    %1235 = vmatpush2.msra.mxu0 %v1120
    %1236 = vmatprep.subr.mxu0 0.0
    %1237 = vmatpush2.msra.mxu0 %v1119
    %1238 = vmatprep.mubr.f32.mxu0 %v817
    %1239 = vmatmul.mubr.f32.gmra.mxu0 %v815
    %v1240 = vpop.f32.mrf.mxu0
    %v1241 = vadd.f32 %v1172, %v1240
    %v1242 = vpop.f32.mrf.mxu0
    %1243 = vdwg.mxu0
    %1244 = vmatprep.subr.mxu0 0.0
    %1245 = vmatpush1.msra.mxu0 %v1150
    %1246 = vmatprep.subr.mxu0 0.0
    %1247 = vmatpush1.msra.mxu0 %v1149
    %1248 = vmatprep.subr.mxu0 0.0
    %1249 = vmatpush1.msra.mxu0 %v1148
    %1250 = vmatprep.subr.mxu0 0.0
    %1251 = vmatpush1.msra.mxu0 %v1147
    %1252 = vmatprep.subr.mxu0 0.0
    %1253 = vmatpush1.msra.mxu0 %v1146
    %1254 = vmatprep.subr.mxu0 0.0
    %1255 = vmatpush1.msra.mxu0 %v1145
    %1256 = vmatprep.subr.mxu0 0.0
    %1257 = vmatpush1.msra.mxu0 %v1144
    %1258 = vmatprep.subr.mxu0 0.0
    %1259 = vmatpush1.msra.mxu0 %v1143
    %1260 = vmatprep.subr.mxu0 0.0
    %1261 = vmatpush1.msra.mxu0 %v1142
    %1262 = vmatprep.subr.mxu0 0.0
    %1263 = vmatpush1.msra.mxu0 %v1141
    %1264 = vmatprep.subr.mxu0 0.0
    %1265 = vmatpush1.msra.mxu0 %v1140
    %1266 = vmatprep.subr.mxu0 0.0
    %1267 = vmatpush1.msra.mxu0 %v1139
    %1268 = vmatprep.subr.mxu0 0.0
    %1269 = vmatpush1.msra.mxu0 %v1138
    %1270 = vmatprep.subr.mxu0 0.0
    %1271 = vmatpush1.msra.mxu0 %v1137
    %1272 = vmatprep.subr.mxu0 0.0
    %1273 = vmatpush1.msra.mxu0 %v1136
    %1274 = vmatprep.subr.mxu0 0.0
    %1275 = vmatpush1.msra.mxu0 %v1135
    %1276 = vmatprep.subr.mxu0 0.0
    %1277 = vmatpush2.msra.mxu0 %v1166
    %1278 = vmatprep.subr.mxu0 0.0
    %1279 = vmatpush2.msra.mxu0 %v1165
    %1280 = vmatprep.subr.mxu0 0.0
    %1281 = vmatpush2.msra.mxu0 %v1164
    %1282 = vmatprep.subr.mxu0 0.0
    %1283 = vmatpush2.msra.mxu0 %v1163
    %1284 = vmatprep.subr.mxu0 0.0
    %1285 = vmatpush2.msra.mxu0 %v1162
    %1286 = vmatprep.subr.mxu0 0.0
    %1287 = vmatpush2.msra.mxu0 %v1161
    %1288 = vmatprep.subr.mxu0 0.0
    %1289 = vmatpush2.msra.mxu0 %v1160
    %1290 = vmatprep.subr.mxu0 0.0
    %1291 = vmatpush2.msra.mxu0 %v1159
    %1292 = vmatprep.subr.mxu0 0.0
    %1293 = vmatpush2.msra.mxu0 %v1158
    %1294 = vmatprep.subr.mxu0 0.0
    %1295 = vmatpush2.msra.mxu0 %v1157
    %1296 = vmatprep.subr.mxu0 0.0
    %1297 = vmatpush2.msra.mxu0 %v1156
    %1298 = vmatprep.subr.mxu0 0.0
    %1299 = vmatpush2.msra.mxu0 %v1155
    %1300 = vmatprep.subr.mxu0 0.0
    %1301 = vmatpush2.msra.mxu0 %v1154
    %1302 = vmatprep.subr.mxu0 0.0
    %1303 = vmatpush2.msra.mxu0 %v1153
    %1304 = vmatprep.subr.mxu0 0.0
    %1305 = vmatpush2.msra.mxu0 %v1152
    %1306 = vmatprep.subr.mxu0 0.0
    %1307 = vmatpush2.msra.mxu0 %v1151
    %1308 = vmatprep.mubr.f32.mxu0 %v1101
    %1309 = vmatmul.mubr.f32.gmra.mxu0 %v1099
    %v1310 = vpop.f32.mrf.mxu0
    %v1311 = vadd.f32 %v1241, %v1310
    %v1312 = vpop.f32.mrf.mxu0
    %1313 = vdwg.mxu0
    %1314 = vst [vmem:[#allocation2] sm:$0x3] %v1311
    // Predicated region
    $region22: #{lenet_forward.5} parent=1 // pred_check
      _
    $region23: #{lenet_forward.5} parent=1 // pred_check_branch
      %1316 = sbr.rel (0) target = $region25
    $region24: #{lenet_forward.5} parent=1 // pred_region
      %s1318 = ssub.s32 32, 32
      %1319 = vsyncadd [#allocation3], %s1318
      %s1321 = sshll.u32 [#allocation2], 4
      %s1322 = int_to_ptr.vmem [resolvable:$true] %s1321
      %1324 = dma.vmem_to_hbm [thread:$0]  %s1322, 32, %s5, [#allocation3]
    $region25: #{lenet_forward.5} parent=1 // pred_fallthru
      _
    // Predicated region
    $region26: #{lenet_forward.5} parent=1 // pred_check
      _
    $region27: #{lenet_forward.5} parent=1 // pred_check_branch
      %1326 = sbr.rel (0) target = $region29
    $region28: #{lenet_forward.5} parent=1 // pred_region
      %1327 = dma.done [#allocation3], 32
    $region29: #{lenet_forward.5} parent=1 // pred_fallthru
      _
    %1328 = vsyncpa [#allocation3], 1

</llo_original>
